<compile_context>
chip_gen: v5e
topology: v5e:2x2
jax: 0.10.0
libtpu: 0.0.40
codegen_flags: <defaults>
</compile_context>

<pallas_src>
import math

import jax
import jax.numpy as jnp
from jax import lax
from jax.experimental import pallas as pl
from jax.experimental.pallas import tpu as pltpu


_MASK_VALUE = 1e-8
_NEG_INF = -1e30


def _roundup(x, m):
    return -(-x // m) * m


# ----------------------------------------------------------------------------
# Deterministic prior filter coefficients (replica of the torch prior buffer).
# ----------------------------------------------------------------------------
def prior_coefs_list(prior_filter_len, alpha, beta):
    lg = math.lgamma
    n = prior_filter_len - 1
    a, b = float(alpha), float(beta)
    vals = []
    for k in range(prior_filter_len):
        log_prior = (lg(n + 1) - lg(k + 1) - lg(n - k + 1)
                     + lg(k + a) + lg(n - k + b) - lg(n + a + b)
                     - lg(a) - lg(b) + lg(a + b))
        vals.append(math.exp(log_prior))
    return vals[::-1]  # .flip(0) in the torch code


# ----------------------------------------------------------------------------
# Per-step VMEM footprint: double-buffered blocks (lane-padded) + resident
# f32 intermediates and scratch.  Used both for Bb capping and vmem_limit.
# ----------------------------------------------------------------------------
def _vmem_bytes(Bb, Tblk, De, F, K, A):
    lane = 128
    De_p = _roundup(De, lane)
    n = Bb * Tblk
    b = 0
    b += 2 * Bb * Tblk * De_p * 2                    # values block (bf16, De lane-padded)
    b += 2 * Bb * _roundup(Tblk + K - 1, lane) * 4   # padded prev-attn row (f32)
    b += 2 * Bb * Tblk * 4 * 2                       # prior (f32) + mask (i32)
    b += 2 * Bb * F * _roundup(K, lane) * 4          # dynamic filters g
    b += 2 * Bb * Tblk * 4                           # attention-weight output
    b += 2 * Bb * De_p * 4                           # context output
    b += 2 * 3 * _roundup(A, 8) * lane * 4           # W3^T, b3, W4 blocks
    b += F * n * 4 + Bb * Tblk * 4                   # dyn-flat + e scratch buffers
    b += Bb * F * Tblk * 4                           # dyn intermediate
    b += A * n * 4                                   # h2 intermediate
    b += 4 * Bb * Tblk * 4                           # softmax temporaries
    return b


# ----------------------------------------------------------------------------
# Pallas kernel: one grid step == Bb batch elements, T on the lane axis.
# ----------------------------------------------------------------------------
def _mdca_kernel(g_ref, ap_ref, prior_ref, mask_ref, val_ref,
                 w3t_ref, b3_ref, w4_ref, ctx_ref, aw_ref,
                 dynflat_ref, e_ref):
    Bb, F, K = g_ref.shape
    Tblk = aw_ref.shape[1]

    g = g_ref[...]                                     # [Bb, F, K]

    # ---- per-batch dynamic 1-D convolution (VPU FMAs, K shifted ref loads) --
    dyn = g[:, :, 0:1] * ap_ref[:, pl.ds(0, Tblk)][:, None, :]
    for k in range(1, K):                              # static unroll (K = 21)
        dyn = dyn + g[:, :, k:k + 1] * ap_ref[:, pl.ds(k, Tblk)][:, None, :]
    # dyn: [Bb, F, Tblk] f32

    # ---- relayout to [F, Bb*Tblk] via VMEM scratch (batch onto lanes) -------
    for b in range(Bb):                                # static unroll, aligned stores
        dynflat_ref[:, b * Tblk:(b + 1) * Tblk] = dyn[b]
    dyn_flat = dynflat_ref[...]                        # [F, Bb*Tblk]

    # ---- post MLP: two plain 2-D MXU matmuls over the wide lane dim ---------
    h2 = jnp.tanh(jnp.dot(w3t_ref[...], dyn_flat,
                          preferred_element_type=jnp.float32)
                  + b3_ref[...])                       # [A, Bb*Tblk]
    e_flat = jnp.dot(w4_ref[...], h2,
                     preferred_element_type=jnp.float32)   # [1, Bb*Tblk]

    # ---- back to sublane-dense [Bb, Tblk] for softmax / mask / stores -------
    for b in range(Bb):
        e_ref[b:b + 1, :] = e_flat[:, b * Tblk:(b + 1) * Tblk]

    # ---- addsoftmax (prior is pre-logged; padded time steps hold -1e30) -----
    scores = e_ref[...] + prior_ref[...]               # [Bb, Tblk]
    m = jnp.max(scores, axis=-1, keepdims=True)
    ex = jnp.exp(scores - m)
    denom = jnp.sum(ex, axis=-1, keepdims=True)
    aw = ex / denom                                    # exact: rows sum to 1

    # ---- masked_fill(~mask, 1e-8) (post-softmax, matches the module) --------
    aw = jnp.where(mask_ref[...] != 0, aw, jnp.float32(_MASK_VALUE))
    aw_ref[...] = aw

    # ---- context = bmm(aw, values): bf16 operands, f32 accumulate -----------
    ctx = lax.dot_general(aw[:, None, :].astype(val_ref.dtype), val_ref[...],
                          (((2,), (1,)), ((0,), (0,))),
                          preferred_element_type=jnp.float32)  # [Bb, 1, De]
    ctx_ref[...] = ctx[:, 0, :]                        # dense (Bb, De) store


# ----------------------------------------------------------------------------
# Wrapper: hoisted filter-MLP / prior conv, padding, BlockSpecs.
# ----------------------------------------------------------------------------
def mdca_forward(params, query, inputs, mask, prev_attn,
                 *, dynamic_filter_dim=8, dynamic_kernel_size=21,
                 prior_filter_len=11, alpha=0.1, beta=0.9,
                 block_b=8, vmem_budget_bytes=40 * 1024 * 1024):
    B, T, De = inputs.shape
    F = dynamic_filter_dim
    K = dynamic_kernel_size
    L = prior_filter_len
    pad = (K - 1) // 2

    w1, b1, w2, b2, w3, b3, w4 = (params[k] for k in
                                  ("w1", "b1", "w2", "b2", "w3", "b3", "w4"))
    A = w1.shape[1]

    # ---- lane-dense time padding; sublane-dense batch blocking --------------
    Tblk = max(128, _roundup(T, 128))
    # Bb is a multiple of 8 so every (Bb, Tblk) block fills the sublanes and
    # satisfies the (8, 128) block constraint.
    Bb = max(8, (block_b // 8) * 8)
    while Bb > 8 and _vmem_bytes(Bb, Tblk, De, F, K, A) > vmem_budget_bytes:
        Bb -= 8
    # TODO(synk): add a T-tiled online-softmax path for long sequences where
    # even Bb=8 exceeds the budget (first wall is v7x's 64 MiB VMEM).
    B_pad = _roundup(B, Bb)

    def pad_batch(x):
        return jnp.pad(x, ((0, B_pad - B),) + ((0, 0),) * (x.ndim - 1))

    q_p = pad_batch(query)                                            # [Bp, Dq]
    prev_p = jnp.pad(pad_batch(prev_attn), ((0, 0), (0, Tblk - T)))   # [Bp, Tblk]
    mask2 = jnp.pad(pad_batch(mask.astype(jnp.int32)),
                    ((0, 0), (0, Tblk - T)))                          # [Bp, Tblk]
    vals_p = jnp.pad(pad_batch(inputs),
                     ((0, 0), (0, Tblk - T), (0, 0))).astype(jnp.bfloat16)

    # ---- hoisted filter MLP: dense batched matmuls + reshape in XLA ---------
    h1 = jnp.tanh(q_p @ w1 + b1)
    g = (h1 @ w2 + b2).reshape(B_pad, F, K)                           # [Bp, F, K]

    # ---- query-independent prior filter (causal conv, clamp, log) in XLA ----
    coefs = prior_coefs_list(L, alpha, beta)
    apl = jnp.pad(prev_p, ((0, 0), (L - 1, 0)))
    prior = coefs[0] * apl[:, 0:Tblk]
    for l in range(1, L):
        prior = prior + coefs[l] * apl[:, l:l + Tblk]
    prior = jnp.log(jnp.maximum(prior, 1e-6))
    col = jnp.arange(Tblk)[None, :]
    prior2 = jnp.where(col < T, prior, _NEG_INF)      # padded steps never win

    # ---- zero-padded previous attention for the in-kernel dynamic conv ------
    ap2 = jnp.pad(prev_p, ((0, 0), (pad, pad)))       # [Bp, Tblk + K - 1]

    w3t = w3.T                                        # [A, F]
    b3c = b3.reshape(A, 1)                            # [A, 1]
    w4r = w4.reshape(1, A)                            # [1, A]

    grid = (B_pad // Bb,)
    vmem_est = _vmem_bytes(Bb, Tblk, De, F, K, A)
    vmem_limit = int(min(max(2 * vmem_est, 32 * 1024 * 1024),
                         56 * 1024 * 1024))

    ctx2, aw2 = pl.pallas_call(
        _mdca_kernel,
        out_shape=(jax.ShapeDtypeStruct((B_pad, De), jnp.float32),
                   jax.ShapeDtypeStruct((B_pad, Tblk), jnp.float32)),
        grid_spec=pltpu.PrefetchScalarGridSpec(
            num_scalar_prefetch=0,
            grid=grid,
            in_specs=[
                pl.BlockSpec((Bb, F, K), lambda b: (b, 0, 0)),         # g
                pl.BlockSpec((Bb, Tblk + K - 1), lambda b: (b, 0)),    # prev-attn (padded)
                pl.BlockSpec((Bb, Tblk), lambda b: (b, 0)),            # prior (pre-logged)
                pl.BlockSpec((Bb, Tblk), lambda b: (b, 0)),            # mask
                pl.BlockSpec((Bb, Tblk, De), lambda b: (b, 0, 0)),     # values (bf16)
                pl.BlockSpec((A, F), lambda b: (0, 0)),                # W3^T
                pl.BlockSpec((A, 1), lambda b: (0, 0)),                # b3
                pl.BlockSpec((1, A), lambda b: (0, 0)),                # W4^T
            ],
            out_specs=[
                pl.BlockSpec((Bb, De), lambda b: (b, 0)),              # context
                pl.BlockSpec((Bb, Tblk), lambda b: (b, 0)),            # attention w
            ],
            scratch_shapes=[
                pltpu.VMEM((F, Bb * Tblk), jnp.float32),               # dyn relayout
                pltpu.VMEM((Bb, Tblk), jnp.float32),                   # e relayout
            ]),
        compiler_params=pltpu.CompilerParams(
            dimension_semantics=("parallel",),
            vmem_limit_bytes=vmem_limit),
    )(g, ap2, prior2, mask2, vals_p, w3t, b3c, w4r)

    return ctx2[:B, :], aw2[:B, :T]


# ----------------------------------------------------------------------------
# Pure-JAX reference (mirrors the PyTorch forward) for correctness checking.
# ----------------------------------------------------------------------------
def mdca_reference(params, query, inputs, mask, prev_attn,
                   *, dynamic_filter_dim=8, dynamic_kernel_size=21,
                   prior_filter_len=11, alpha=0.1, beta=0.9):
    w1, b1, w2, b2, w3, b3, w4 = (params[k] for k in
                                  ("w1", "b1", "w2", "b2", "w3", "b3", "w4"))
    B, T, De = inputs.shape
    F, K, L = dynamic_filter_dim, dynamic_kernel_size, prior_filter_len

    filt = jnp.asarray(prior_coefs_list(L, alpha, beta), jnp.float32)  # [L]
    apl = jnp.pad(prev_attn, ((0, 0), (L - 1, 0)))
    idxp = jnp.arange(T)[:, None] + jnp.arange(L)[None, :]             # [T, L]
    prior = jnp.einsum('btl,l->bt', apl[:, idxp], filt)
    prior = jnp.log(jnp.maximum(prior, 1e-6))

    h1 = jnp.tanh(query @ w1 + b1)
    g = (h1 @ w2 + b2).reshape(B, F, K)
    pad = (K - 1) // 2
    apd = jnp.pad(prev_attn, ((0, 0), (pad, pad)))
    idxd = jnp.arange(T)[:, None] + jnp.arange(K)[None, :]             # [T, K]
    dyn = jnp.einsum('btk,bfk->btf', apd[:, idxd], g)                  # [B, T, F]

    h2 = jnp.tanh(dyn @ w3 + b3)
    e = (h2 @ w4)[..., 0]                                              # [B, T]

    aw = jax.nn.softmax(e + prior, axis=-1)
    aw = jnp.where(mask, aw, 1e-8)
    ctx = jnp.einsum('bt,btd->bd', aw, inputs)
    return ctx, aw


# ----------------------------------------------------------------------------
if __name__ == "__main__":
    B, T, De = 32, 200, 64
    Dq, A = 32, 32
    F_dim, K, L = 8, 21, 11

    key = jax.random.PRNGKey(0)
    ks = jax.random.split(key, 10)
    scale = 0.1
    params = {
        "w1": scale * jax.random.normal(ks[0], (Dq, A), jnp.float32),
        "b1": scale * jax.random.normal(ks[1], (A,), jnp.float32),
        "w2": scale * jax.random.normal(ks[2], (A, F_dim * K), jnp.float32),
        "b2": scale * jax.random.normal(ks[3], (F_dim * K,), jnp.float32),
        "w3": scale * jax.random.normal(ks[4], (F_dim, A), jnp.float32),
        "b3": scale * jax.random.normal(ks[5], (A,), jnp.float32),
        "w4": scale * jax.random.normal(ks[6], (A, 1), jnp.float32),
    }

    query = jax.random.normal(ks[7], (B, Dq), jnp.float32)
    inputs = jax.random.normal(ks[8], (B, T, De), jnp.float32)
    mask = jnp.ones((B, T), dtype=bool).at[1, T - 7:].set(False)
    # init_states(): one-hot previous attention weights
    prev_attn = jnp.zeros((B, T), jnp.float32).at[:, 0].set(1.0)

    ctx, aw = mdca_forward(params, query, inputs, mask, prev_attn,
                           dynamic_filter_dim=F_dim, dynamic_kernel_size=K,
                           prior_filter_len=L, block_b=8)   # Bb=8 -> grid=(4,)
    jax.block_until_ready((ctx, aw))

    ctx_exp, aw_exp = mdca_reference(params, query, inputs, mask, prev_attn,
                                     dynamic_filter_dim=F_dim,
                                     dynamic_kernel_size=K,
                                     prior_filter_len=L)

    # aw: exact softmax divide; remaining diffs come from matmul/tanh rounding.
    assert jnp.allclose(aw, aw_exp, atol=2e-3, rtol=2e-3), "attention mismatch"
    # ctx: values are cast to bf16 for the context matmul (f32 accumulate).
    assert jnp.allclose(ctx, ctx_exp, atol=3e-2, rtol=3e-2), "context mismatch"

    print("KERNEL_OK")
</pallas_src>

<mosaic_0001>
module attributes {stable_mosaic.version = 11 : i64} {
  func.func @_mdca_kernel(%arg0: i32, %arg1: memref<8x8x21xf32, #tpu.memory_space<vmem>>, %arg2: memref<8x276xf32, #tpu.memory_space<vmem>>, %arg3: memref<8x256xf32, #tpu.memory_space<vmem>>, %arg4: memref<8x256xi32, #tpu.memory_space<vmem>>, %arg5: memref<8x256x64xbf16, #tpu.memory_space<vmem>>, %arg6: memref<32x8xf32, #tpu.memory_space<vmem>>, %arg7: memref<32x1xf32, #tpu.memory_space<vmem>>, %arg8: memref<1x32xf32, #tpu.memory_space<vmem>>, %arg9: memref<8x64xf32, #tpu.memory_space<vmem>>, %arg10: memref<8x256xf32, #tpu.memory_space<vmem>>, %arg11: memref<8x2048xf32, #tpu.memory_space<vmem>>, %arg12: memref<8x256xf32, #tpu.memory_space<vmem>>) attributes {dimension_semantics = [#tpu.dimension_semantics<parallel>], iteration_bounds = array<i64: 4>, scalar_prefetch = 0 : i64, scratch_operands = 2 : i64, tpu.core_type = #tpu.core_type<tc>, window_params = [{transform_indices = @transform_0, window_bounds = array<i64: 8, 8, 21>}, {transform_indices = @transform_1, window_bounds = array<i64: 8, 276>}, {transform_indices = @transform_2, window_bounds = array<i64: 8, 256>}, {transform_indices = @transform_3, window_bounds = array<i64: 8, 256>}, {transform_indices = @transform_4, window_bounds = array<i64: 8, 256, 64>}, {pipeline_mode = #tpu.pipeline_mode<synchronous>, transform_indices = @transform_5, window_bounds = array<i64: 32, 8>}, {pipeline_mode = #tpu.pipeline_mode<synchronous>, transform_indices = @transform_6, window_bounds = array<i64: 32, 1>}, {pipeline_mode = #tpu.pipeline_mode<synchronous>, transform_indices = @transform_7, window_bounds = array<i64: 1, 32>}, {transform_indices = @transform_8, window_bounds = array<i64: 8, 64>}, {transform_indices = @transform_9, window_bounds = array<i64: 8, 256>}]} {
    %c0 = arith.constant 0 : index
    %c0_0 = arith.constant 0 : index
    %c0_1 = arith.constant 0 : index
    %0 = vector.load %arg1[%c0, %c0_0, %c0_1] : memref<8x8x21xf32, #tpu.memory_space<vmem>>, vector<8x8x21xf32>
    %1 = vector.extract_strided_slice %0 {offsets = [0, 0, 0], sizes = [8, 8, 1], strides = [1, 1, 1]} : vector<8x8x21xf32> to vector<8x8x1xf32>
    %c0_2 = arith.constant 0 : index
    %c0_3 = arith.constant 0 : index
    %2 = vector.load %arg2[%c0_2, %c0_3] : memref<8x276xf32, #tpu.memory_space<vmem>>, vector<8x256xf32>
    %3 = vector.shape_cast %2 : vector<8x256xf32> to vector<8x1x256xf32>
    %4 = vector.broadcast %1 : vector<8x8x1xf32> to vector<8x8x256xf32>
    %5 = vector.broadcast %3 : vector<8x1x256xf32> to vector<8x8x256xf32>
    %6 = arith.mulf %4, %5 : vector<8x8x256xf32>
    %7 = vector.extract_strided_slice %0 {offsets = [0, 0, 1], sizes = [8, 8, 1], strides = [1, 1, 1]} : vector<8x8x21xf32> to vector<8x8x1xf32>
    %c0_4 = arith.constant 0 : index
    %c1 = arith.constant 1 : index
    %8 = vector.load %arg2[%c0_4, %c1] : memref<8x276xf32, #tpu.memory_space<vmem>>, vector<8x256xf32>
    %9 = vector.shape_cast %8 : vector<8x256xf32> to vector<8x1x256xf32>
    %10 = vector.broadcast %7 : vector<8x8x1xf32> to vector<8x8x256xf32>
    %11 = vector.broadcast %9 : vector<8x1x256xf32> to vector<8x8x256xf32>
    %12 = arith.mulf %10, %11 : vector<8x8x256xf32>
    %13 = arith.addf %6, %12 : vector<8x8x256xf32>
    %14 = vector.extract_strided_slice %0 {offsets = [0, 0, 2], sizes = [8, 8, 1], strides = [1, 1, 1]} : vector<8x8x21xf32> to vector<8x8x1xf32>
    %c0_5 = arith.constant 0 : index
    %c2 = arith.constant 2 : index
    %15 = vector.load %arg2[%c0_5, %c2] : memref<8x276xf32, #tpu.memory_space<vmem>>, vector<8x256xf32>
    %16 = vector.shape_cast %15 : vector<8x256xf32> to vector<8x1x256xf32>
    %17 = vector.broadcast %14 : vector<8x8x1xf32> to vector<8x8x256xf32>
    %18 = vector.broadcast %16 : vector<8x1x256xf32> to vector<8x8x256xf32>
    %19 = arith.mulf %17, %18 : vector<8x8x256xf32>
    %20 = arith.addf %13, %19 : vector<8x8x256xf32>
    %21 = vector.extract_strided_slice %0 {offsets = [0, 0, 3], sizes = [8, 8, 1], strides = [1, 1, 1]} : vector<8x8x21xf32> to vector<8x8x1xf32>
    %c0_6 = arith.constant 0 : index
    %c3 = arith.constant 3 : index
    %22 = vector.load %arg2[%c0_6, %c3] : memref<8x276xf32, #tpu.memory_space<vmem>>, vector<8x256xf32>
    %23 = vector.shape_cast %22 : vector<8x256xf32> to vector<8x1x256xf32>
    %24 = vector.broadcast %21 : vector<8x8x1xf32> to vector<8x8x256xf32>
    %25 = vector.broadcast %23 : vector<8x1x256xf32> to vector<8x8x256xf32>
    %26 = arith.mulf %24, %25 : vector<8x8x256xf32>
    %27 = arith.addf %20, %26 : vector<8x8x256xf32>
    %28 = vector.extract_strided_slice %0 {offsets = [0, 0, 4], sizes = [8, 8, 1], strides = [1, 1, 1]} : vector<8x8x21xf32> to vector<8x8x1xf32>
    %c0_7 = arith.constant 0 : index
    %c4 = arith.constant 4 : index
    %29 = vector.load %arg2[%c0_7, %c4] : memref<8x276xf32, #tpu.memory_space<vmem>>, vector<8x256xf32>
    %30 = vector.shape_cast %29 : vector<8x256xf32> to vector<8x1x256xf32>
    %31 = vector.broadcast %28 : vector<8x8x1xf32> to vector<8x8x256xf32>
    %32 = vector.broadcast %30 : vector<8x1x256xf32> to vector<8x8x256xf32>
    %33 = arith.mulf %31, %32 : vector<8x8x256xf32>
    %34 = arith.addf %27, %33 : vector<8x8x256xf32>
    %35 = vector.extract_strided_slice %0 {offsets = [0, 0, 5], sizes = [8, 8, 1], strides = [1, 1, 1]} : vector<8x8x21xf32> to vector<8x8x1xf32>
    %c0_8 = arith.constant 0 : index
    %c5 = arith.constant 5 : index
    %36 = vector.load %arg2[%c0_8, %c5] : memref<8x276xf32, #tpu.memory_space<vmem>>, vector<8x256xf32>
    %37 = vector.shape_cast %36 : vector<8x256xf32> to vector<8x1x256xf32>
    %38 = vector.broadcast %35 : vector<8x8x1xf32> to vector<8x8x256xf32>
    %39 = vector.broadcast %37 : vector<8x1x256xf32> to vector<8x8x256xf32>
    %40 = arith.mulf %38, %39 : vector<8x8x256xf32>
    %41 = arith.addf %34, %40 : vector<8x8x256xf32>
    %42 = vector.extract_strided_slice %0 {offsets = [0, 0, 6], sizes = [8, 8, 1], strides = [1, 1, 1]} : vector<8x8x21xf32> to vector<8x8x1xf32>
    %c0_9 = arith.constant 0 : index
    %c6 = arith.constant 6 : index
    %43 = vector.load %arg2[%c0_9, %c6] : memref<8x276xf32, #tpu.memory_space<vmem>>, vector<8x256xf32>
    %44 = vector.shape_cast %43 : vector<8x256xf32> to vector<8x1x256xf32>
    %45 = vector.broadcast %42 : vector<8x8x1xf32> to vector<8x8x256xf32>
    %46 = vector.broadcast %44 : vector<8x1x256xf32> to vector<8x8x256xf32>
    %47 = arith.mulf %45, %46 : vector<8x8x256xf32>
    %48 = arith.addf %41, %47 : vector<8x8x256xf32>
    %49 = vector.extract_strided_slice %0 {offsets = [0, 0, 7], sizes = [8, 8, 1], strides = [1, 1, 1]} : vector<8x8x21xf32> to vector<8x8x1xf32>
    %c0_10 = arith.constant 0 : index
    %c7 = arith.constant 7 : index
    %50 = vector.load %arg2[%c0_10, %c7] : memref<8x276xf32, #tpu.memory_space<vmem>>, vector<8x256xf32>
    %51 = vector.shape_cast %50 : vector<8x256xf32> to vector<8x1x256xf32>
    %52 = vector.broadcast %49 : vector<8x8x1xf32> to vector<8x8x256xf32>
    %53 = vector.broadcast %51 : vector<8x1x256xf32> to vector<8x8x256xf32>
    %54 = arith.mulf %52, %53 : vector<8x8x256xf32>
    %55 = arith.addf %48, %54 : vector<8x8x256xf32>
    %56 = vector.extract_strided_slice %0 {offsets = [0, 0, 8], sizes = [8, 8, 1], strides = [1, 1, 1]} : vector<8x8x21xf32> to vector<8x8x1xf32>
    %c0_11 = arith.constant 0 : index
    %c8 = arith.constant 8 : index
    %57 = vector.load %arg2[%c0_11, %c8] : memref<8x276xf32, #tpu.memory_space<vmem>>, vector<8x256xf32>
    %58 = vector.shape_cast %57 : vector<8x256xf32> to vector<8x1x256xf32>
    %59 = vector.broadcast %56 : vector<8x8x1xf32> to vector<8x8x256xf32>
    %60 = vector.broadcast %58 : vector<8x1x256xf32> to vector<8x8x256xf32>
    %61 = arith.mulf %59, %60 : vector<8x8x256xf32>
    %62 = arith.addf %55, %61 : vector<8x8x256xf32>
    %63 = vector.extract_strided_slice %0 {offsets = [0, 0, 9], sizes = [8, 8, 1], strides = [1, 1, 1]} : vector<8x8x21xf32> to vector<8x8x1xf32>
    %c0_12 = arith.constant 0 : index
    %c9 = arith.constant 9 : index
    %64 = vector.load %arg2[%c0_12, %c9] : memref<8x276xf32, #tpu.memory_space<vmem>>, vector<8x256xf32>
    %65 = vector.shape_cast %64 : vector<8x256xf32> to vector<8x1x256xf32>
    %66 = vector.broadcast %63 : vector<8x8x1xf32> to vector<8x8x256xf32>
    %67 = vector.broadcast %65 : vector<8x1x256xf32> to vector<8x8x256xf32>
    %68 = arith.mulf %66, %67 : vector<8x8x256xf32>
    %69 = arith.addf %62, %68 : vector<8x8x256xf32>
    %70 = vector.extract_strided_slice %0 {offsets = [0, 0, 10], sizes = [8, 8, 1], strides = [1, 1, 1]} : vector<8x8x21xf32> to vector<8x8x1xf32>
    %c0_13 = arith.constant 0 : index
    %c10 = arith.constant 10 : index
    %71 = vector.load %arg2[%c0_13, %c10] : memref<8x276xf32, #tpu.memory_space<vmem>>, vector<8x256xf32>
    %72 = vector.shape_cast %71 : vector<8x256xf32> to vector<8x1x256xf32>
    %73 = vector.broadcast %70 : vector<8x8x1xf32> to vector<8x8x256xf32>
    %74 = vector.broadcast %72 : vector<8x1x256xf32> to vector<8x8x256xf32>
    %75 = arith.mulf %73, %74 : vector<8x8x256xf32>
    %76 = arith.addf %69, %75 : vector<8x8x256xf32>
    %77 = vector.extract_strided_slice %0 {offsets = [0, 0, 11], sizes = [8, 8, 1], strides = [1, 1, 1]} : vector<8x8x21xf32> to vector<8x8x1xf32>
    %c0_14 = arith.constant 0 : index
    %c11 = arith.constant 11 : index
    %78 = vector.load %arg2[%c0_14, %c11] : memref<8x276xf32, #tpu.memory_space<vmem>>, vector<8x256xf32>
    %79 = vector.shape_cast %78 : vector<8x256xf32> to vector<8x1x256xf32>
    %80 = vector.broadcast %77 : vector<8x8x1xf32> to vector<8x8x256xf32>
    %81 = vector.broadcast %79 : vector<8x1x256xf32> to vector<8x8x256xf32>
    %82 = arith.mulf %80, %81 : vector<8x8x256xf32>
    %83 = arith.addf %76, %82 : vector<8x8x256xf32>
    %84 = vector.extract_strided_slice %0 {offsets = [0, 0, 12], sizes = [8, 8, 1], strides = [1, 1, 1]} : vector<8x8x21xf32> to vector<8x8x1xf32>
    %c0_15 = arith.constant 0 : index
    %c12 = arith.constant 12 : index
    %85 = vector.load %arg2[%c0_15, %c12] : memref<8x276xf32, #tpu.memory_space<vmem>>, vector<8x256xf32>
    %86 = vector.shape_cast %85 : vector<8x256xf32> to vector<8x1x256xf32>
    %87 = vector.broadcast %84 : vector<8x8x1xf32> to vector<8x8x256xf32>
    %88 = vector.broadcast %86 : vector<8x1x256xf32> to vector<8x8x256xf32>
    %89 = arith.mulf %87, %88 : vector<8x8x256xf32>
    %90 = arith.addf %83, %89 : vector<8x8x256xf32>
    %91 = vector.extract_strided_slice %0 {offsets = [0, 0, 13], sizes = [8, 8, 1], strides = [1, 1, 1]} : vector<8x8x21xf32> to vector<8x8x1xf32>
    %c0_16 = arith.constant 0 : index
    %c13 = arith.constant 13 : index
    %92 = vector.load %arg2[%c0_16, %c13] : memref<8x276xf32, #tpu.memory_space<vmem>>, vector<8x256xf32>
    %93 = vector.shape_cast %92 : vector<8x256xf32> to vector<8x1x256xf32>
    %94 = vector.broadcast %91 : vector<8x8x1xf32> to vector<8x8x256xf32>
    %95 = vector.broadcast %93 : vector<8x1x256xf32> to vector<8x8x256xf32>
    %96 = arith.mulf %94, %95 : vector<8x8x256xf32>
    %97 = arith.addf %90, %96 : vector<8x8x256xf32>
    %98 = vector.extract_strided_slice %0 {offsets = [0, 0, 14], sizes = [8, 8, 1], strides = [1, 1, 1]} : vector<8x8x21xf32> to vector<8x8x1xf32>
    %c0_17 = arith.constant 0 : index
    %c14 = arith.constant 14 : index
    %99 = vector.load %arg2[%c0_17, %c14] : memref<8x276xf32, #tpu.memory_space<vmem>>, vector<8x256xf32>
    %100 = vector.shape_cast %99 : vector<8x256xf32> to vector<8x1x256xf32>
    %101 = vector.broadcast %98 : vector<8x8x1xf32> to vector<8x8x256xf32>
    %102 = vector.broadcast %100 : vector<8x1x256xf32> to vector<8x8x256xf32>
    %103 = arith.mulf %101, %102 : vector<8x8x256xf32>
    %104 = arith.addf %97, %103 : vector<8x8x256xf32>
    %105 = vector.extract_strided_slice %0 {offsets = [0, 0, 15], sizes = [8, 8, 1], strides = [1, 1, 1]} : vector<8x8x21xf32> to vector<8x8x1xf32>
    %c0_18 = arith.constant 0 : index
    %c15 = arith.constant 15 : index
    %106 = vector.load %arg2[%c0_18, %c15] : memref<8x276xf32, #tpu.memory_space<vmem>>, vector<8x256xf32>
    %107 = vector.shape_cast %106 : vector<8x256xf32> to vector<8x1x256xf32>
    %108 = vector.broadcast %105 : vector<8x8x1xf32> to vector<8x8x256xf32>
    %109 = vector.broadcast %107 : vector<8x1x256xf32> to vector<8x8x256xf32>
    %110 = arith.mulf %108, %109 : vector<8x8x256xf32>
    %111 = arith.addf %104, %110 : vector<8x8x256xf32>
    %112 = vector.extract_strided_slice %0 {offsets = [0, 0, 16], sizes = [8, 8, 1], strides = [1, 1, 1]} : vector<8x8x21xf32> to vector<8x8x1xf32>
    %c0_19 = arith.constant 0 : index
    %c16 = arith.constant 16 : index
    %113 = vector.load %arg2[%c0_19, %c16] : memref<8x276xf32, #tpu.memory_space<vmem>>, vector<8x256xf32>
    %114 = vector.shape_cast %113 : vector<8x256xf32> to vector<8x1x256xf32>
    %115 = vector.broadcast %112 : vector<8x8x1xf32> to vector<8x8x256xf32>
    %116 = vector.broadcast %114 : vector<8x1x256xf32> to vector<8x8x256xf32>
    %117 = arith.mulf %115, %116 : vector<8x8x256xf32>
    %118 = arith.addf %111, %117 : vector<8x8x256xf32>
    %119 = vector.extract_strided_slice %0 {offsets = [0, 0, 17], sizes = [8, 8, 1], strides = [1, 1, 1]} : vector<8x8x21xf32> to vector<8x8x1xf32>
    %c0_20 = arith.constant 0 : index
    %c17 = arith.constant 17 : index
    %120 = vector.load %arg2[%c0_20, %c17] : memref<8x276xf32, #tpu.memory_space<vmem>>, vector<8x256xf32>
    %121 = vector.shape_cast %120 : vector<8x256xf32> to vector<8x1x256xf32>
    %122 = vector.broadcast %119 : vector<8x8x1xf32> to vector<8x8x256xf32>
    %123 = vector.broadcast %121 : vector<8x1x256xf32> to vector<8x8x256xf32>
    %124 = arith.mulf %122, %123 : vector<8x8x256xf32>
    %125 = arith.addf %118, %124 : vector<8x8x256xf32>
    %126 = vector.extract_strided_slice %0 {offsets = [0, 0, 18], sizes = [8, 8, 1], strides = [1, 1, 1]} : vector<8x8x21xf32> to vector<8x8x1xf32>
    %c0_21 = arith.constant 0 : index
    %c18 = arith.constant 18 : index
    %127 = vector.load %arg2[%c0_21, %c18] : memref<8x276xf32, #tpu.memory_space<vmem>>, vector<8x256xf32>
    %128 = vector.shape_cast %127 : vector<8x256xf32> to vector<8x1x256xf32>
    %129 = vector.broadcast %126 : vector<8x8x1xf32> to vector<8x8x256xf32>
    %130 = vector.broadcast %128 : vector<8x1x256xf32> to vector<8x8x256xf32>
    %131 = arith.mulf %129, %130 : vector<8x8x256xf32>
    %132 = arith.addf %125, %131 : vector<8x8x256xf32>
    %133 = vector.extract_strided_slice %0 {offsets = [0, 0, 19], sizes = [8, 8, 1], strides = [1, 1, 1]} : vector<8x8x21xf32> to vector<8x8x1xf32>
    %c0_22 = arith.constant 0 : index
    %c19 = arith.constant 19 : index
    %134 = vector.load %arg2[%c0_22, %c19] : memref<8x276xf32, #tpu.memory_space<vmem>>, vector<8x256xf32>
    %135 = vector.shape_cast %134 : vector<8x256xf32> to vector<8x1x256xf32>
    %136 = vector.broadcast %133 : vector<8x8x1xf32> to vector<8x8x256xf32>
    %137 = vector.broadcast %135 : vector<8x1x256xf32> to vector<8x8x256xf32>
    %138 = arith.mulf %136, %137 : vector<8x8x256xf32>
    %139 = arith.addf %132, %138 : vector<8x8x256xf32>
    %140 = vector.extract_strided_slice %0 {offsets = [0, 0, 20], sizes = [8, 8, 1], strides = [1, 1, 1]} : vector<8x8x21xf32> to vector<8x8x1xf32>
    %c0_23 = arith.constant 0 : index
    %c20 = arith.constant 20 : index
    %141 = vector.load %arg2[%c0_23, %c20] : memref<8x276xf32, #tpu.memory_space<vmem>>, vector<8x256xf32>
    %142 = vector.shape_cast %141 : vector<8x256xf32> to vector<8x1x256xf32>
    %143 = vector.broadcast %140 : vector<8x8x1xf32> to vector<8x8x256xf32>
    %144 = vector.broadcast %142 : vector<8x1x256xf32> to vector<8x8x256xf32>
    %145 = arith.mulf %143, %144 : vector<8x8x256xf32>
    %146 = arith.addf %139, %145 : vector<8x8x256xf32>
    %147 = vector.extract_strided_slice %146 {offsets = [0, 0, 0], sizes = [1, 8, 256], strides = [1, 1, 1]} : vector<8x8x256xf32> to vector<1x8x256xf32>
    %148 = vector.shape_cast %147 : vector<1x8x256xf32> to vector<8x256xf32>
    %c0_24 = arith.constant 0 : index
    %c0_25 = arith.constant 0 : index
    %149 = vector.load %arg11[%c0_24, %c0_25] : memref<8x2048xf32, #tpu.memory_space<vmem>>, vector<8x256xf32>
    tpu.vector_store %arg11[%c0_24, %c0_25], %148 {strides = array<i32>} : memref<8x2048xf32, #tpu.memory_space<vmem>>, vector<8x256xf32>,
    %150 = vector.extract_strided_slice %146 {offsets = [1, 0, 0], sizes = [1, 8, 256], strides = [1, 1, 1]} : vector<8x8x256xf32> to vector<1x8x256xf32>
    %151 = vector.shape_cast %150 : vector<1x8x256xf32> to vector<8x256xf32>
    %c0_26 = arith.constant 0 : index
    %c256 = arith.constant 256 : index
    %152 = vector.load %arg11[%c0_26, %c256] : memref<8x2048xf32, #tpu.memory_space<vmem>>, vector<8x256xf32>
    tpu.vector_store %arg11[%c0_26, %c256], %151 {strides = array<i32>} : memref<8x2048xf32, #tpu.memory_space<vmem>>, vector<8x256xf32>,
    %153 = vector.extract_strided_slice %146 {offsets = [2, 0, 0], sizes = [1, 8, 256], strides = [1, 1, 1]} : vector<8x8x256xf32> to vector<1x8x256xf32>
    %154 = vector.shape_cast %153 : vector<1x8x256xf32> to vector<8x256xf32>
    %c0_27 = arith.constant 0 : index
    %c512 = arith.constant 512 : index
    %155 = vector.load %arg11[%c0_27, %c512] : memref<8x2048xf32, #tpu.memory_space<vmem>>, vector<8x256xf32>
    tpu.vector_store %arg11[%c0_27, %c512], %154 {strides = array<i32>} : memref<8x2048xf32, #tpu.memory_space<vmem>>, vector<8x256xf32>,
    %156 = vector.extract_strided_slice %146 {offsets = [3, 0, 0], sizes = [1, 8, 256], strides = [1, 1, 1]} : vector<8x8x256xf32> to vector<1x8x256xf32>
    %157 = vector.shape_cast %156 : vector<1x8x256xf32> to vector<8x256xf32>
    %c0_28 = arith.constant 0 : index
    %c768 = arith.constant 768 : index
    %158 = vector.load %arg11[%c0_28, %c768] : memref<8x2048xf32, #tpu.memory_space<vmem>>, vector<8x256xf32>
    tpu.vector_store %arg11[%c0_28, %c768], %157 {strides = array<i32>} : memref<8x2048xf32, #tpu.memory_space<vmem>>, vector<8x256xf32>,
    %159 = vector.extract_strided_slice %146 {offsets = [4, 0, 0], sizes = [1, 8, 256], strides = [1, 1, 1]} : vector<8x8x256xf32> to vector<1x8x256xf32>
    %160 = vector.shape_cast %159 : vector<1x8x256xf32> to vector<8x256xf32>
    %c0_29 = arith.constant 0 : index
    %c1024 = arith.constant 1024 : index
    %161 = vector.load %arg11[%c0_29, %c1024] : memref<8x2048xf32, #tpu.memory_space<vmem>>, vector<8x256xf32>
    tpu.vector_store %arg11[%c0_29, %c1024], %160 {strides = array<i32>} : memref<8x2048xf32, #tpu.memory_space<vmem>>, vector<8x256xf32>,
    %162 = vector.extract_strided_slice %146 {offsets = [5, 0, 0], sizes = [1, 8, 256], strides = [1, 1, 1]} : vector<8x8x256xf32> to vector<1x8x256xf32>
    %163 = vector.shape_cast %162 : vector<1x8x256xf32> to vector<8x256xf32>
    %c0_30 = arith.constant 0 : index
    %c1280 = arith.constant 1280 : index
    %164 = vector.load %arg11[%c0_30, %c1280] : memref<8x2048xf32, #tpu.memory_space<vmem>>, vector<8x256xf32>
    tpu.vector_store %arg11[%c0_30, %c1280], %163 {strides = array<i32>} : memref<8x2048xf32, #tpu.memory_space<vmem>>, vector<8x256xf32>,
    %165 = vector.extract_strided_slice %146 {offsets = [6, 0, 0], sizes = [1, 8, 256], strides = [1, 1, 1]} : vector<8x8x256xf32> to vector<1x8x256xf32>
    %166 = vector.shape_cast %165 : vector<1x8x256xf32> to vector<8x256xf32>
    %c0_31 = arith.constant 0 : index
    %c1536 = arith.constant 1536 : index
    %167 = vector.load %arg11[%c0_31, %c1536] : memref<8x2048xf32, #tpu.memory_space<vmem>>, vector<8x256xf32>
    tpu.vector_store %arg11[%c0_31, %c1536], %166 {strides = array<i32>} : memref<8x2048xf32, #tpu.memory_space<vmem>>, vector<8x256xf32>,
    %168 = vector.extract_strided_slice %146 {offsets = [7, 0, 0], sizes = [1, 8, 256], strides = [1, 1, 1]} : vector<8x8x256xf32> to vector<1x8x256xf32>
    %169 = vector.shape_cast %168 : vector<1x8x256xf32> to vector<8x256xf32>
    %c0_32 = arith.constant 0 : index
    %c1792 = arith.constant 1792 : index
    %170 = vector.load %arg11[%c0_32, %c1792] : memref<8x2048xf32, #tpu.memory_space<vmem>>, vector<8x256xf32>
    tpu.vector_store %arg11[%c0_32, %c1792], %169 {strides = array<i32>} : memref<8x2048xf32, #tpu.memory_space<vmem>>, vector<8x256xf32>,
    %c0_33 = arith.constant 0 : index
    %c0_34 = arith.constant 0 : index
    %171 = vector.load %arg11[%c0_33, %c0_34] : memref<8x2048xf32, #tpu.memory_space<vmem>>, vector<8x2048xf32>
    %c0_35 = arith.constant 0 : index
    %c0_36 = arith.constant 0 : index
    %172 = vector.load %arg6[%c0_35, %c0_36] : memref<32x8xf32, #tpu.memory_space<vmem>>, vector<32x8xf32>
    %cst = arith.constant dense<0.000000e+00> : vector<32x2048xf32>
    %173 = tpu.matmul %172, %171, %cst {dimension_numbers = #tpu.dot_dimension_numbers<[1], [0], [0], [1], [0, 0, 1, 1], [], []>} : vector<32x8xf32>, vector<8x2048xf32>, vector<32x2048xf32> -> vector<32x2048xf32>
    %c0_37 = arith.constant 0 : index
    %c0_38 = arith.constant 0 : index
    %174 = vector.load %arg7[%c0_37, %c0_38] : memref<32x1xf32, #tpu.memory_space<vmem>>, vector<32x1xf32>
    %175 = vector.broadcast %174 : vector<32x1xf32> to vector<32x2048xf32>
    %176 = arith.addf %173, %175 : vector<32x2048xf32>
    %177 = math.tanh %176 : vector<32x2048xf32>
    %c0_39 = arith.constant 0 : index
    %c0_40 = arith.constant 0 : index
    %178 = vector.load %arg8[%c0_39, %c0_40] : memref<1x32xf32, #tpu.memory_space<vmem>>, vector<1x32xf32>
    %cst_41 = arith.constant dense<0.000000e+00> : vector<1x2048xf32>
    %179 = tpu.matmul %178, %177, %cst_41 {dimension_numbers = #tpu.dot_dimension_numbers<[1], [0], [0], [1], [0, 0, 1, 1], [], []>} : vector<1x32xf32>, vector<32x2048xf32>, vector<1x2048xf32> -> vector<1x2048xf32>
    %180 = vector.extract_strided_slice %179 {offsets = [0, 0], sizes = [1, 256], strides = [1, 1]} : vector<1x2048xf32> to vector<1x256xf32>
    %c0_42 = arith.constant 0 : index
    %c0_43 = arith.constant 0 : index
    %181 = vector.load %arg12[%c0_42, %c0_43] : memref<8x256xf32, #tpu.memory_space<vmem>>, vector<1x256xf32>
    tpu.vector_store %arg12[%c0_42, %c0_43], %180 {strides = array<i32>} : memref<8x256xf32, #tpu.memory_space<vmem>>, vector<1x256xf32>,
    %182 = vector.extract_strided_slice %179 {offsets = [0, 256], sizes = [1, 256], strides = [1, 1]} : vector<1x2048xf32> to vector<1x256xf32>
    %c1_44 = arith.constant 1 : index
    %c0_45 = arith.constant 0 : index
    %183 = vector.load %arg12[%c1_44, %c0_45] : memref<8x256xf32, #tpu.memory_space<vmem>>, vector<1x256xf32>
    tpu.vector_store %arg12[%c1_44, %c0_45], %182 {strides = array<i32>} : memref<8x256xf32, #tpu.memory_space<vmem>>, vector<1x256xf32>,
    %184 = vector.extract_strided_slice %179 {offsets = [0, 512], sizes = [1, 256], strides = [1, 1]} : vector<1x2048xf32> to vector<1x256xf32>
    %c2_46 = arith.constant 2 : index
    %c0_47 = arith.constant 0 : index
    %185 = vector.load %arg12[%c2_46, %c0_47] : memref<8x256xf32, #tpu.memory_space<vmem>>, vector<1x256xf32>
    tpu.vector_store %arg12[%c2_46, %c0_47], %184 {strides = array<i32>} : memref<8x256xf32, #tpu.memory_space<vmem>>, vector<1x256xf32>,
    %186 = vector.extract_strided_slice %179 {offsets = [0, 768], sizes = [1, 256], strides = [1, 1]} : vector<1x2048xf32> to vector<1x256xf32>
    %c3_48 = arith.constant 3 : index
    %c0_49 = arith.constant 0 : index
    %187 = vector.load %arg12[%c3_48, %c0_49] : memref<8x256xf32, #tpu.memory_space<vmem>>, vector<1x256xf32>
    tpu.vector_store %arg12[%c3_48, %c0_49], %186 {strides = array<i32>} : memref<8x256xf32, #tpu.memory_space<vmem>>, vector<1x256xf32>,
    %188 = vector.extract_strided_slice %179 {offsets = [0, 1024], sizes = [1, 256], strides = [1, 1]} : vector<1x2048xf32> to vector<1x256xf32>
    %c4_50 = arith.constant 4 : index
    %c0_51 = arith.constant 0 : index
    %189 = vector.load %arg12[%c4_50, %c0_51] : memref<8x256xf32, #tpu.memory_space<vmem>>, vector<1x256xf32>
    tpu.vector_store %arg12[%c4_50, %c0_51], %188 {strides = array<i32>} : memref<8x256xf32, #tpu.memory_space<vmem>>, vector<1x256xf32>,
    %190 = vector.extract_strided_slice %179 {offsets = [0, 1280], sizes = [1, 256], strides = [1, 1]} : vector<1x2048xf32> to vector<1x256xf32>
    %c5_52 = arith.constant 5 : index
    %c0_53 = arith.constant 0 : index
    %191 = vector.load %arg12[%c5_52, %c0_53] : memref<8x256xf32, #tpu.memory_space<vmem>>, vector<1x256xf32>
    tpu.vector_store %arg12[%c5_52, %c0_53], %190 {strides = array<i32>} : memref<8x256xf32, #tpu.memory_space<vmem>>, vector<1x256xf32>,
    %192 = vector.extract_strided_slice %179 {offsets = [0, 1536], sizes = [1, 256], strides = [1, 1]} : vector<1x2048xf32> to vector<1x256xf32>
    %c6_54 = arith.constant 6 : index
    %c0_55 = arith.constant 0 : index
    %193 = vector.load %arg12[%c6_54, %c0_55] : memref<8x256xf32, #tpu.memory_space<vmem>>, vector<1x256xf32>
    tpu.vector_store %arg12[%c6_54, %c0_55], %192 {strides = array<i32>} : memref<8x256xf32, #tpu.memory_space<vmem>>, vector<1x256xf32>,
    %194 = vector.extract_strided_slice %179 {offsets = [0, 1792], sizes = [1, 256], strides = [1, 1]} : vector<1x2048xf32> to vector<1x256xf32>
    %c7_56 = arith.constant 7 : index
    %c0_57 = arith.constant 0 : index
    %195 = vector.load %arg12[%c7_56, %c0_57] : memref<8x256xf32, #tpu.memory_space<vmem>>, vector<1x256xf32>
    tpu.vector_store %arg12[%c7_56, %c0_57], %194 {strides = array<i32>} : memref<8x256xf32, #tpu.memory_space<vmem>>, vector<1x256xf32>,
    %c0_58 = arith.constant 0 : index
    %c0_59 = arith.constant 0 : index
    %196 = vector.load %arg12[%c0_58, %c0_59] : memref<8x256xf32, #tpu.memory_space<vmem>>, vector<8x256xf32>
    %c0_60 = arith.constant 0 : index
    %c0_61 = arith.constant 0 : index
    %197 = vector.load %arg3[%c0_60, %c0_61] : memref<8x256xf32, #tpu.memory_space<vmem>>, vector<8x256xf32>
    %198 = arith.addf %196, %197 : vector<8x256xf32>
    %cst_62 = arith.constant dense<0xFF800000> : vector<8xf32>
    %199 = vector.multi_reduction <maximumf>, %198, %cst_62 [1] : vector<8x256xf32> to vector<8xf32>
    %200 = vector.shape_cast %199 : vector<8xf32> to vector<8x1xf32>
    %201 = vector.broadcast %200 : vector<8x1xf32> to vector<8x256xf32>
    %202 = arith.subf %198, %201 : vector<8x256xf32>
    %203 = math.exp %202 : vector<8x256xf32>
    %cst_63 = arith.constant dense<0.000000e+00> : vector<8xf32>
    %204 = vector.multi_reduction <add>, %203, %cst_63 [1] : vector<8x256xf32> to vector<8xf32>
    %205 = vector.shape_cast %204 : vector<8xf32> to vector<8x1xf32>
    %206 = vector.broadcast %205 : vector<8x1xf32> to vector<8x256xf32>
    %207 = arith.divf %203, %206 : vector<8x256xf32>
    %c0_64 = arith.constant 0 : index
    %c0_65 = arith.constant 0 : index
    %208 = vector.load %arg4[%c0_64, %c0_65] : memref<8x256xi32, #tpu.memory_space<vmem>>, vector<8x256xi32>
    %c0_i32 = arith.constant 0 : i32
    %209 = vector.broadcast %c0_i32 : i32 to vector<8x256xi32>
    %210 = arith.cmpi ne, %208, %209 : vector<8x256xi32>
    %cst_66 = arith.constant 9.99999993E-9 : f32
    %211 = vector.broadcast %cst_66 : f32 to vector<8x256xf32>
    %212 = arith.select %210, %207, %211 : vector<8x256xi1>, vector<8x256xf32>
    %c0_67 = arith.constant 0 : index
    %c0_68 = arith.constant 0 : index
    %213 = vector.load %arg10[%c0_67, %c0_68] : memref<8x256xf32, #tpu.memory_space<vmem>>, vector<8x256xf32>
    tpu.vector_store %arg10[%c0_67, %c0_68], %212 {strides = array<i32>} : memref<8x256xf32, #tpu.memory_space<vmem>>, vector<8x256xf32>,
    %214 = vector.shape_cast %212 : vector<8x256xf32> to vector<8x1x256xf32>
    %215 = arith.truncf %214 : vector<8x1x256xf32> to vector<8x1x256xbf16>
    %c0_69 = arith.constant 0 : index
    %c0_70 = arith.constant 0 : index
    %c0_71 = arith.constant 0 : index
    %216 = vector.load %arg5[%c0_69, %c0_70, %c0_71] : memref<8x256x64xbf16, #tpu.memory_space<vmem>>, vector<8x256x64xbf16>
    %cst_72 = arith.constant dense<0.000000e+00> : vector<8x1x64xf32>
    %217 = tpu.matmul %215, %216, %cst_72 {dimension_numbers = #tpu.dot_dimension_numbers<[2], [1], [1], [2], [0, 0, 0, 1, 1, 2], [0], [0]>} : vector<8x1x256xbf16>, vector<8x256x64xbf16>, vector<8x1x64xf32> -> vector<8x1x64xf32>
    %218 = vector.shape_cast %217 : vector<8x1x64xf32> to vector<8x64xf32>
    %c0_73 = arith.constant 0 : index
    %c0_74 = arith.constant 0 : index
    %219 = vector.load %arg9[%c0_73, %c0_74] : memref<8x64xf32, #tpu.memory_space<vmem>>, vector<8x64xf32>
    tpu.vector_store %arg9[%c0_73, %c0_74], %218 {strides = array<i32>} : memref<8x64xf32, #tpu.memory_space<vmem>>, vector<8x64xf32>,
    return
  }
  func.func @transform_0(%arg0: i32) -> (i32, i32, i32) {
    %c0_i32 = arith.constant 0 : i32
    %c0_i32_0 = arith.constant 0 : i32
    %c0_i32_1 = arith.constant 0 : i32
    return %arg0, %c0_i32, %c0_i32_0 : i32, i32, i32
  }
  func.func @transform_1(%arg0: i32) -> (i32, i32) {
    %c0_i32 = arith.constant 0 : i32
    %c0_i32_0 = arith.constant 0 : i32
    return %arg0, %c0_i32 : i32, i32
  }
  func.func @transform_2(%arg0: i32) -> (i32, i32) {
    %c0_i32 = arith.constant 0 : i32
    %c0_i32_0 = arith.constant 0 : i32
    return %arg0, %c0_i32 : i32, i32
  }
  func.func @transform_3(%arg0: i32) -> (i32, i32) {
    %c0_i32 = arith.constant 0 : i32
    %c0_i32_0 = arith.constant 0 : i32
    return %arg0, %c0_i32 : i32, i32
  }
  func.func @transform_4(%arg0: i32) -> (i32, i32, i32) {
    %c0_i32 = arith.constant 0 : i32
    %c0_i32_0 = arith.constant 0 : i32
    %c0_i32_1 = arith.constant 0 : i32
    return %arg0, %c0_i32, %c0_i32_0 : i32, i32, i32
  }
  func.func @transform_5(%arg0: i32) -> (i32, i32) {
    %c0_i32 = arith.constant 0 : i32
    %c0_i32_0 = arith.constant 0 : i32
    %c0_i32_1 = arith.constant 0 : i32
    return %c0_i32, %c0_i32_0 : i32, i32
  }
  func.func @transform_6(%arg0: i32) -> (i32, i32) {
    %c0_i32 = arith.constant 0 : i32
    %c0_i32_0 = arith.constant 0 : i32
    %c0_i32_1 = arith.constant 0 : i32
    return %c0_i32, %c0_i32_0 : i32, i32
  }
  func.func @transform_7(%arg0: i32) -> (i32, i32) {
    %c0_i32 = arith.constant 0 : i32
    %c0_i32_0 = arith.constant 0 : i32
    %c0_i32_1 = arith.constant 0 : i32
    return %c0_i32, %c0_i32_0 : i32, i32
  }
  func.func @transform_8(%arg0: i32) -> (i32, i32) {
    %c0_i32 = arith.constant 0 : i32
    %c0_i32_0 = arith.constant 0 : i32
    return %arg0, %c0_i32 : i32, i32
  }
  func.func @transform_9(%arg0: i32) -> (i32, i32) {
    %c0_i32 = arith.constant 0 : i32
    %c0_i32_0 = arith.constant 0 : i32
    return %arg0, %c0_i32 : i32, i32
  }
}

</mosaic_0001>

<llo_original>
// kernel: tpu_custom_call.1
$region0: #{tpu_custom_call.1}
  #allocation0 [shape = 'u32[]', space=smem, size = 0x4, offset = 0x4, fixed_abs, tag = 'smem constant byte address 0x4 - core index']
  #allocation1 [shape = 'u32[72,128]{1,0:T(1,128)}', space=vmem, size = 0x9000, scoped, tag = 'internal scratch']
  #allocation2 [shape = 'f32[8,2048]{1,0:T(8,128)}', space=vmem, size = 0x10000, scoped, tag = 'scratch operand']
  #allocation3 [shape = 'f32[8,256]{1,0:T(8,128)}', space=vmem, size = 0x2000, scoped, tag = 'scratch operand']
  %s0 = inlined_call_operand.vmem [shape: f32[32,8,21], index: 0, kind: input, shape index: {}]
  %s1 = inlined_call_operand.vmem [shape: f32[32,276], index: 1, kind: input, shape index: {}]
  %s2 = inlined_call_operand.vmem [shape: f32[32,256], index: 2, kind: input, shape index: {}]
  %s3 = inlined_call_operand.vmem [shape: s32[32,256], index: 3, kind: input, shape index: {}]
  %s4 = inlined_call_operand.vmem [shape: bf16[32,256,64], index: 4, kind: input, shape index: {}]
  %s5 = inlined_call_operand.vmem [shape: f32[32,8], index: 5, kind: input, shape index: {}]
  %s6 = inlined_call_operand.vmem [shape: f32[32,1], index: 6, kind: input, shape index: {}]
  %s7 = inlined_call_operand.vmem [shape: f32[1,32], index: 7, kind: input, shape index: {}]
  %s8 = inlined_call_operand.hbm [shape: f32[32,64], index: 8, kind: output, shape index: {0}]
  %s9 = inlined_call_operand.hbm [shape: f32[32,256], index: 9, kind: output, shape index: {1}]
  %10 = xla_tuple %s8, %s9
  %s11 = sld [smem:[#allocation0]]
  $region73: #{tpu_custom_call.1} parent=0
    _
  %s13 = ssub.s32 1, %s11
  %s14 = scalar_select 0, %s13, %s11
  $region1: #{tpu_custom_call.1} parent=0
    #allocation4 [shape = 'u8[8192]{0}', space=vmem, size = 0x2000, scoped, tag = 'output window, operand 0']
    #allocation5 [shape = 's32[2]{0}', space=sflag, size = 0x8, scoped, tag = 'scoped memory for tpu_custom_call.1']
    #allocation6 [shape = 'u8[16384]{0}', space=vmem, size = 0x4000, scoped, tag = 'output window, operand 1']
    #allocation7 [shape = 's32[2]{0}', space=sflag, size = 0x8, scoped, tag = 'scoped memory for tpu_custom_call.1']
    %15 = vsyncpa [#allocation5], 0
    %s16 = scalar_lea.sflag [#allocation5], 1
    %17 = vsyncpa %s16, 0
    %18 = vsyncpa [#allocation7], 0
    %s19 = scalar_lea.sflag [#allocation7], 1
    %20 = vsyncpa %s19, 0
    loop: start=0, step=1, limit=6
    $region2: #{tpu_custom_call.1} parent=1 // loop_pre_header
      _
    $region3: #{tpu_custom_call.1} parent=1 // loop_header
      %s22 = sphi 0, %s26
      %p23 = scmp.ge.s32.totalorder %s22, 6
      %s32 = sphi 0, %s34
      %s35 = sphi 0, %s32
      %s36 = sphi 0, %s35
      %s52 = sphi 0, %s36
      %s58 = sphi 0, %s60
      %s61 = sphi 0, %s58
      %s62 = sphi 0, %s61
      %s78 = sphi 0, %s62
      %s84 = sphi 0, %s86
      %s87 = sphi 0, %s84
      %s88 = sphi 0, %s87
      %s104 = sphi 0, %s88
      %s110 = sphi 0, %s112
      %s113 = sphi 0, %s110
      %s114 = sphi 0, %s113
      %s130 = sphi 0, %s114
      %s136 = sphi 0, %s138
      %s139 = sphi 0, %s136
      %s140 = sphi 0, %s139
      %s156 = sphi 0, %s140
      %s160 = sphi 0, %s160
      %s162 = sphi 0, %s160
      %s163 = sphi 0, %s162
      %s177 = sphi 0, %s163
      %s181 = sphi 0, %s181
      %s183 = sphi 0, %s181
      %s184 = sphi 0, %s183
      %s198 = sphi 0, %s184
      %s202 = sphi 0, %s202
      %s204 = sphi 0, %s202
      %s205 = sphi 0, %s204
      %s219 = sphi 0, %s205
      %s225 = sphi 0, %s227
      %s228 = sphi 0, %s225
      %s229 = sphi 0, %s228
      %s245 = sphi 0, %s229
      %s251 = sphi 0, %s253
      %s254 = sphi 0, %s251
      %s255 = sphi 0, %s254
      %s271 = sphi 0, %s255
    $region4: #{tpu_custom_call.1} parent=1 // loop_header_branch
      %25 = sbr.rel (%p23) target = $region8
    $region5: #{tpu_custom_call.1} parent=1 // loop_body
      %s27 = ssub.s32 %s22, 1
      %s28 = ssub.s32 %s22, 2
      %s29 = sadd.s32 %s22, 1
      %s30 = ssub.s32 %s22, %s29
      %p31 = scmp.eq.s32.totalorder %s30, 0
      %s33 = sadd.s32 %s32, 1
      %s34 = scalar_select %p31, %s32, %s33
      %p37 = pneg %p31
      %p38 = scmp.eq.s32.totalorder %s22, 3
      %p39 = por %p37, %p38
      %p40 = scmp.ne.s32.totalorder %s32, %s35
      %p41 = scmp.eq.s32.totalorder %s22, 0
      %p42 = por %p40, %p41
      %p43 = scmp.ne.s32.totalorder %s32, %s35
      %p44 = scmp.eq.s32.totalorder %s27, 3
      %p45 = por %p43, %p44
      %p46 = scmp.ne.s32.totalorder %s35, %s36
      %p47 = scmp.eq.s32.totalorder %s27, 0
      %p48 = por %p46, %p47
      %p49 = scmp.ne.s32.totalorder %s35, %s36
      %p50 = scmp.eq.s32.totalorder %s28, 3
      %p51 = por %p49, %p50
      %p53 = scmp.ne.s32.totalorder %s36, %s52
      %p54 = scmp.eq.s32.totalorder %s28, 0
      %p55 = por %p53, %p54
      %s56 = ssub.s32 %s22, %s29
      %p57 = scmp.eq.s32.totalorder %s56, 0
      %s59 = sadd.s32 %s58, 1
      %s60 = scalar_select %p57, %s58, %s59
      %p63 = pneg %p57
      %p64 = scmp.eq.s32.totalorder %s22, 3
      %p65 = por %p63, %p64
      %p66 = scmp.ne.s32.totalorder %s58, %s61
      %p67 = scmp.eq.s32.totalorder %s22, 0
      %p68 = por %p66, %p67
      %p69 = scmp.ne.s32.totalorder %s58, %s61
      %p70 = scmp.eq.s32.totalorder %s27, 3
      %p71 = por %p69, %p70
      %p72 = scmp.ne.s32.totalorder %s61, %s62
      %p73 = scmp.eq.s32.totalorder %s27, 0
      %p74 = por %p72, %p73
      %p75 = scmp.ne.s32.totalorder %s61, %s62
      %p76 = scmp.eq.s32.totalorder %s28, 3
      %p77 = por %p75, %p76
      %p79 = scmp.ne.s32.totalorder %s62, %s78
      %p80 = scmp.eq.s32.totalorder %s28, 0
      %p81 = por %p79, %p80
      %s82 = ssub.s32 %s22, %s29
      %p83 = scmp.eq.s32.totalorder %s82, 0
      %s85 = sadd.s32 %s84, 1
      %s86 = scalar_select %p83, %s84, %s85
      %p89 = pneg %p83
      %p90 = scmp.eq.s32.totalorder %s22, 3
      %p91 = por %p89, %p90
      %p92 = scmp.ne.s32.totalorder %s84, %s87
      %p93 = scmp.eq.s32.totalorder %s22, 0
      %p94 = por %p92, %p93
      %p95 = scmp.ne.s32.totalorder %s84, %s87
      %p96 = scmp.eq.s32.totalorder %s27, 3
      %p97 = por %p95, %p96
      %p98 = scmp.ne.s32.totalorder %s87, %s88
      %p99 = scmp.eq.s32.totalorder %s27, 0
      %p100 = por %p98, %p99
      %p101 = scmp.ne.s32.totalorder %s87, %s88
      %p102 = scmp.eq.s32.totalorder %s28, 3
      %p103 = por %p101, %p102
      %p105 = scmp.ne.s32.totalorder %s88, %s104
      %p106 = scmp.eq.s32.totalorder %s28, 0
      %p107 = por %p105, %p106
      %s108 = ssub.s32 %s22, %s29
      %p109 = scmp.eq.s32.totalorder %s108, 0
      %s111 = sadd.s32 %s110, 1
      %s112 = scalar_select %p109, %s110, %s111
      %p115 = pneg %p109
      %p116 = scmp.eq.s32.totalorder %s22, 3
      %p117 = por %p115, %p116
      %p118 = scmp.ne.s32.totalorder %s110, %s113
      %p119 = scmp.eq.s32.totalorder %s22, 0
      %p120 = por %p118, %p119
      %p121 = scmp.ne.s32.totalorder %s110, %s113
      %p122 = scmp.eq.s32.totalorder %s27, 3
      %p123 = por %p121, %p122
      %p124 = scmp.ne.s32.totalorder %s113, %s114
      %p125 = scmp.eq.s32.totalorder %s27, 0
      %p126 = por %p124, %p125
      %p127 = scmp.ne.s32.totalorder %s113, %s114
      %p128 = scmp.eq.s32.totalorder %s28, 3
      %p129 = por %p127, %p128
      %p131 = scmp.ne.s32.totalorder %s114, %s130
      %p132 = scmp.eq.s32.totalorder %s28, 0
      %p133 = por %p131, %p132
      %s134 = ssub.s32 %s22, %s29
      %p135 = scmp.eq.s32.totalorder %s134, 0
      %s137 = sadd.s32 %s136, 1
      %s138 = scalar_select %p135, %s136, %s137
      %p141 = pneg %p135
      %p142 = scmp.eq.s32.totalorder %s22, 3
      %p143 = por %p141, %p142
      %p144 = scmp.ne.s32.totalorder %s136, %s139
      %p145 = scmp.eq.s32.totalorder %s22, 0
      %p146 = por %p144, %p145
      %p147 = scmp.ne.s32.totalorder %s136, %s139
      %p148 = scmp.eq.s32.totalorder %s27, 3
      %p149 = por %p147, %p148
      %p150 = scmp.ne.s32.totalorder %s139, %s140
      %p151 = scmp.eq.s32.totalorder %s27, 0
      %p152 = por %p150, %p151
      %p153 = scmp.ne.s32.totalorder %s139, %s140
      %p154 = scmp.eq.s32.totalorder %s28, 3
      %p155 = por %p153, %p154
      %p157 = scmp.ne.s32.totalorder %s140, %s156
      %p158 = scmp.eq.s32.totalorder %s28, 0
      %p159 = por %p157, %p158
      %s161 = sadd.s32 %s160, 1
      %p164 = scmp.eq.s32.totalorder %s22, 3
      %p165 = scmp.ne.s32.totalorder %s160, %s162
      %p166 = scmp.eq.s32.totalorder %s22, 0
      %p167 = por %p165, %p166
      %p168 = scmp.ne.s32.totalorder %s160, %s162
      %p169 = scmp.eq.s32.totalorder %s27, 3
      %p170 = por %p168, %p169
      %p171 = scmp.ne.s32.totalorder %s162, %s163
      %p172 = scmp.eq.s32.totalorder %s27, 0
      %p173 = por %p171, %p172
      %p174 = scmp.ne.s32.totalorder %s162, %s163
      %p175 = scmp.eq.s32.totalorder %s28, 3
      %p176 = por %p174, %p175
      %p178 = scmp.ne.s32.totalorder %s163, %s177
      %p179 = scmp.eq.s32.totalorder %s28, 0
      %p180 = por %p178, %p179
      %s182 = sadd.s32 %s181, 1
      %p185 = scmp.eq.s32.totalorder %s22, 3
      %p186 = scmp.ne.s32.totalorder %s181, %s183
      %p187 = scmp.eq.s32.totalorder %s22, 0
      %p188 = por %p186, %p187
      %p189 = scmp.ne.s32.totalorder %s181, %s183
      %p190 = scmp.eq.s32.totalorder %s27, 3
      %p191 = por %p189, %p190
      %p192 = scmp.ne.s32.totalorder %s183, %s184
      %p193 = scmp.eq.s32.totalorder %s27, 0
      %p194 = por %p192, %p193
      %p195 = scmp.ne.s32.totalorder %s183, %s184
      %p196 = scmp.eq.s32.totalorder %s28, 3
      %p197 = por %p195, %p196
      %p199 = scmp.ne.s32.totalorder %s184, %s198
      %p200 = scmp.eq.s32.totalorder %s28, 0
      %p201 = por %p199, %p200
      %s203 = sadd.s32 %s202, 1
      %p206 = scmp.eq.s32.totalorder %s22, 3
      %p207 = scmp.ne.s32.totalorder %s202, %s204
      %p208 = scmp.eq.s32.totalorder %s22, 0
      %p209 = por %p207, %p208
      %p210 = scmp.ne.s32.totalorder %s202, %s204
      %p211 = scmp.eq.s32.totalorder %s27, 3
      %p212 = por %p210, %p211
      %p213 = scmp.ne.s32.totalorder %s204, %s205
      %p214 = scmp.eq.s32.totalorder %s27, 0
      %p215 = por %p213, %p214
      %p216 = scmp.ne.s32.totalorder %s204, %s205
      %p217 = scmp.eq.s32.totalorder %s28, 3
      %p218 = por %p216, %p217
      %p220 = scmp.ne.s32.totalorder %s205, %s219
      %p221 = scmp.eq.s32.totalorder %s28, 0
      %p222 = por %p220, %p221
      %s223 = ssub.s32 %s22, %s29
      %p224 = scmp.eq.s32.totalorder %s223, 0
      %s226 = sadd.s32 %s225, 1
      %s227 = scalar_select %p224, %s225, %s226
      %p230 = pneg %p224
      %p231 = scmp.eq.s32.totalorder %s22, 3
      %p232 = por %p230, %p231
      %p233 = scmp.ne.s32.totalorder %s225, %s228
      %p234 = scmp.eq.s32.totalorder %s22, 0
      %p235 = por %p233, %p234
      %p236 = scmp.ne.s32.totalorder %s225, %s228
      %p237 = scmp.eq.s32.totalorder %s27, 3
      %p238 = por %p236, %p237
      %p239 = scmp.ne.s32.totalorder %s228, %s229
      %p240 = scmp.eq.s32.totalorder %s27, 0
      %p241 = por %p239, %p240
      %p242 = scmp.ne.s32.totalorder %s228, %s229
      %p243 = scmp.eq.s32.totalorder %s28, 3
      %p244 = por %p242, %p243
      %p246 = scmp.ne.s32.totalorder %s229, %s245
      %p247 = scmp.eq.s32.totalorder %s28, 0
      %p248 = por %p246, %p247
      %s249 = ssub.s32 %s22, %s29
      %p250 = scmp.eq.s32.totalorder %s249, 0
      %s252 = sadd.s32 %s251, 1
      %s253 = scalar_select %p250, %s251, %s252
      %p256 = pneg %p250
      %p257 = scmp.eq.s32.totalorder %s22, 3
      %p258 = por %p256, %p257
      %p259 = scmp.ne.s32.totalorder %s251, %s254
      %p260 = scmp.eq.s32.totalorder %s22, 0
      %p261 = por %p259, %p260
      %p262 = scmp.ne.s32.totalorder %s251, %s254
      %p263 = scmp.eq.s32.totalorder %s27, 3
      %p264 = por %p262, %p263
      %p265 = scmp.ne.s32.totalorder %s254, %s255
      %p266 = scmp.eq.s32.totalorder %s27, 0
      %p267 = por %p265, %p266
      %p268 = scmp.ne.s32.totalorder %s254, %s255
      %p269 = scmp.eq.s32.totalorder %s28, 3
      %p270 = por %p268, %p269
      %p272 = scmp.ne.s32.totalorder %s255, %s271
      %p273 = scmp.eq.s32.totalorder %s28, 0
      %p274 = por %p272, %p273
      %p275 = scmp.le.s32.totalorder 1, %s22
      %p276 = scmp.lt.s32.totalorder %s22, 5
      %p277 = pnand %p275, %p276
      %p278 = pneg %p277
      // Predicated region
      $region9: #{tpu_custom_call.1} parent=5 // pred_check
        _
      $region10: #{tpu_custom_call.1} parent=5 // pred_check_branch
        %280 = sbr.rel (%p277) target = $region12
      $region11: #{tpu_custom_call.1} parent=5 // pred_region
        %s281 = ssub.s32 %s22, 1
        // Predicated region
        $region13: #{tpu_custom_call.1} parent=11 // pred_check
          %p282 = pneg %p173
        $region14: #{tpu_custom_call.1} parent=11 // pred_check_branch
          %284 = sbr.rel (%p282) target = $region16
        $region15: #{tpu_custom_call.1} parent=11 // pred_region
          _
        $region16: #{tpu_custom_call.1} parent=11 // pred_fallthru
          _
        // Predicated region
        $region17: #{tpu_custom_call.1} parent=11 // pred_check
          %p285 = pneg %p194
        $region18: #{tpu_custom_call.1} parent=11 // pred_check_branch
          %287 = sbr.rel (%p285) target = $region20
        $region19: #{tpu_custom_call.1} parent=11 // pred_region
          _
        $region20: #{tpu_custom_call.1} parent=11 // pred_fallthru
          _
        // Predicated region
        $region21: #{tpu_custom_call.1} parent=11 // pred_check
          %p288 = pneg %p215
        $region22: #{tpu_custom_call.1} parent=11 // pred_check_branch
          %290 = sbr.rel (%p288) target = $region24
        $region23: #{tpu_custom_call.1} parent=11 // pred_region
          _
        $region24: #{tpu_custom_call.1} parent=11 // pred_fallthru
          _
      $region12: #{tpu_custom_call.1} parent=5 // pred_fallthru
        _
      %p291 = scmp.lt.s32.totalorder %s22, 4
      // Predicated region
      $region25: #{tpu_custom_call.1} parent=5 // pred_check
        %p292 = pneg %p291
      $region26: #{tpu_custom_call.1} parent=5 // pred_check_branch
        %294 = sbr.rel (%p292) target = $region28
      $region27: #{tpu_custom_call.1} parent=5 // pred_region
        // Predicated region
        $region29: #{tpu_custom_call.1} parent=27 // pred_check
          %p295 = pneg %p42
        $region30: #{tpu_custom_call.1} parent=27 // pred_check_branch
          %297 = sbr.rel (%p295) target = $region32
        $region31: #{tpu_custom_call.1} parent=27 // pred_region
          %s298 = smul.u32 8, %s22
          %p299 = scmp.lt.s32.totalorder %s298, 31
          %s300 = scalar_select %p299, %s298, 31
          %s301 = smul.addr %s300, 8
          %s302 = scalar_lea.vmem %s0, %s301
          %s303 = smul.u32 8, %s22
        $region32: #{tpu_custom_call.1} parent=27 // pred_fallthru
          _
        // Predicated region
        $region33: #{tpu_custom_call.1} parent=27 // pred_check
          %p304 = pneg %p68
        $region34: #{tpu_custom_call.1} parent=27 // pred_check_branch
          %306 = sbr.rel (%p304) target = $region36
        $region35: #{tpu_custom_call.1} parent=27 // pred_region
          %p307 = scmp.lt.s32.totalorder %s22, 3
          %s308 = scalar_select %p307, %s22, 3
          %s309 = smul.addr %s308, 3
          %s310 = smul.addr %s309, 8
          %s311 = scalar_lea.vmem %s1, %s310
        $region36: #{tpu_custom_call.1} parent=27 // pred_fallthru
          _
        // Predicated region
        $region37: #{tpu_custom_call.1} parent=27 // pred_check
          %p312 = pneg %p94
        $region38: #{tpu_custom_call.1} parent=27 // pred_check_branch
          %314 = sbr.rel (%p312) target = $region40
        $region39: #{tpu_custom_call.1} parent=27 // pred_region
          %p315 = scmp.lt.s32.totalorder %s22, 3
          %s316 = scalar_select %p315, %s22, 3
          %s317 = smul.addr %s316, 2
          %s318 = smul.addr %s317, 8
          %s319 = scalar_lea.vmem %s2, %s318
        $region40: #{tpu_custom_call.1} parent=27 // pred_fallthru
          _
        // Predicated region
        $region41: #{tpu_custom_call.1} parent=27 // pred_check
          %p320 = pneg %p120
        $region42: #{tpu_custom_call.1} parent=27 // pred_check_branch
          %322 = sbr.rel (%p320) target = $region44
        $region43: #{tpu_custom_call.1} parent=27 // pred_region
          %p323 = scmp.lt.s32.totalorder %s22, 3
          %s324 = scalar_select %p323, %s22, 3
          %s325 = smul.addr %s324, 2
          %s326 = smul.addr %s325, 8
          %s327 = scalar_lea.vmem %s3, %s326
        $region44: #{tpu_custom_call.1} parent=27 // pred_fallthru
          _
        // Predicated region
        $region45: #{tpu_custom_call.1} parent=27 // pred_check
          %p328 = pneg %p146
        $region46: #{tpu_custom_call.1} parent=27 // pred_check_branch
          %330 = sbr.rel (%p328) target = $region48
        $region47: #{tpu_custom_call.1} parent=27 // pred_region
          %s331 = smul.u32 8, %s22
          %p332 = scmp.lt.s32.totalorder %s331, 31
          %s333 = scalar_select %p332, %s331, 31
          %s334 = smul.addr %s333, 32
          %s335 = smul.addr %s334, 4
          %s336 = scalar_lea.vmem %s4, %s335
          %s337 = smul.u32 8, %s22
        $region48: #{tpu_custom_call.1} parent=27 // pred_fallthru
          _
      $region28: #{tpu_custom_call.1} parent=5 // pred_fallthru
        _
      %p338 = scmp.le.s32.totalorder 1, %s22
      %p339 = scmp.lt.s32.totalorder %s22, 5
      %p340 = pnand %p338, %p339
      %p341 = pneg %p340
      // Predicated region
      $region49: #{tpu_custom_call.1} parent=5 // pred_check
        _
      $region50: #{tpu_custom_call.1} parent=5 // pred_check_branch
        %343 = sbr.rel (%p340) target = $region52
      $region51: #{tpu_custom_call.1} parent=5 // pred_region
        %s344 = ssub.s32 %s22, 1
        %s345 = smul.u32 8, %s27
        %p346 = scmp.lt.s32.totalorder %s345, 31
        %s347 = scalar_select %p346, %s345, 31
        %s348 = smul.addr %s347, 8
        %s349 = scalar_lea.vmem %s0, %s348
        %p350 = pneg %p48
        %p351 = pneg %p45
        %p352 = scmp.lt.s32.totalorder %s27, 3
        %s353 = scalar_select %p352, %s27, 3
        %s354 = smul.addr %s353, 3
        %s355 = smul.addr %s354, 8
        %s356 = scalar_lea.vmem %s1, %s355
        %p357 = pneg %p74
        %p358 = pneg %p71
        %p359 = scmp.lt.s32.totalorder %s27, 3
        %s360 = scalar_select %p359, %s27, 3
        %s361 = smul.addr %s360, 2
        %s362 = smul.addr %s361, 8
        %s363 = scalar_lea.vmem %s2, %s362
        %p364 = pneg %p100
        %p365 = pneg %p97
        %p366 = scmp.lt.s32.totalorder %s27, 3
        %s367 = scalar_select %p366, %s27, 3
        %s368 = smul.addr %s367, 2
        %s369 = smul.addr %s368, 8
        %s370 = scalar_lea.vmem %s3, %s369
        %p371 = pneg %p126
        %p372 = pneg %p123
        %s373 = smul.u32 8, %s27
        %p374 = scmp.lt.s32.totalorder %s373, 31
        %s375 = scalar_select %p374, %s373, 31
        %s376 = smul.addr %s375, 32
        %s377 = smul.addr %s376, 4
        %s378 = scalar_lea.vmem %s4, %s377
        %p379 = pneg %p152
        %p380 = pneg %p149
        %p381 = pneg %p173
        %p382 = pneg %p170
        %p383 = pneg %p194
        %p384 = pneg %p191
        %p385 = pneg %p215
        %p386 = pneg %p212
        %p387 = pneg %p241
        %p388 = pneg %p238
        %s389 = sand.u32 %s228, 1
        %s390 = scalar_lea.sflag [#allocation5], %s389
        %s391 = sand.u32 %s228, 1
        %s392 = smul.addr %s391, 8
        %s393 = scalar_lea.vmem [#allocation4], %s392
        %p394 = pneg %p267
        %p395 = pneg %p264
        %s396 = sand.u32 %s254, 1
        %s397 = scalar_lea.sflag [#allocation7], %s396
        %s398 = sand.u32 %s254, 1
        %s399 = smul.addr %s398, 16
        %s400 = scalar_lea.vmem [#allocation6], %s399
        %s401 = smul.u32 8, %s27
        %p402 = scmp.lt.s32.totalorder %s401, 31
        %s403 = scalar_select %p402, %s401, 31
        %s404 = smul.addr %s403, 8
        %s405 = scalar_lea.vmem %s0, %s404
        %s406 = smul.u32 8, %s27
        %p407 = scmp.lt.s32.totalorder %s27, 3
        %s408 = scalar_select %p407, %s27, 3
        %s409 = smul.addr %s408, 3
        %s410 = smul.addr %s409, 8
        %s411 = scalar_lea.vmem %s1, %s410
        %p412 = scmp.lt.s32.totalorder %s27, 3
        %s413 = scalar_select %p412, %s27, 3
        %s414 = smul.addr %s413, 2
        %s415 = smul.addr %s414, 8
        %s416 = scalar_lea.vmem %s2, %s415
        %p417 = scmp.lt.s32.totalorder %s27, 3
        %s418 = scalar_select %p417, %s27, 3
        %s419 = smul.addr %s418, 2
        %s420 = smul.addr %s419, 8
        %s421 = scalar_lea.vmem %s3, %s420
        %s422 = smul.u32 8, %s27
        %p423 = scmp.lt.s32.totalorder %s422, 31
        %s424 = scalar_select %p423, %s422, 31
        %s425 = smul.addr %s424, 32
        %s426 = smul.addr %s425, 4
        %s427 = scalar_lea.vmem %s4, %s426
        %s428 = smul.u32 8, %s27
        %v429 = vld [vmem:[%s405] sm:$0xff]
        %v430 = vld [vmem:[%s405 + $0x8] sm:$0xff]
        %v431 = vld [vmem:[%s405 + $0x10] sm:$0xff]
        %v432 = vld [vmem:[%s405 + $0x18] sm:$0xff]
        %v433 = vld [vmem:[%s405 + $0x20] sm:$0xff]
        %v434 = vld [vmem:[%s405 + $0x28] sm:$0xff]
        %v435 = vld [vmem:[%s405 + $0x30] sm:$0xff]
        %v436 = vld [vmem:[%s405 + $0x38] sm:$0xff]
        %v437 = vld [vmem:[%s411] sm:$0xff]
        %v438 = vld [vmem:[%s411 + $0x8] sm:$0xff]
        %v441 = vrot.slane %v438, 7
        %vm442 = vcmask 1040384
        %v443 = vsel %vm442, %v437, %v441
        %vm444 = vcmask 1041409
        %v445 = vsel %vm444, %v437, %v441
        %v446 = vrot.slane %v445, 1
        %vm447 = vcmask 1042434
        %v448 = vsel %vm447, %v437, %v441
        %v449 = vrot.slane %v448, 2
        %vm450 = vcmask 1043459
        %v451 = vsel %vm450, %v437, %v441
        %v452 = vrot.slane %v451, 3
        %vm453 = vcmask 1044484
        %v454 = vsel %vm453, %v437, %v441
        %v455 = vrot.slane %v454, 4
        %vm456 = vcmask 1045509
        %v457 = vsel %vm456, %v437, %v441
        %v458 = vrot.slane %v457, 5
        %vm459 = vcmask 1046534
        %v460 = vsel %vm459, %v437, %v441
        %v461 = vrot.slane %v460, 6
        %vm462 = vcmask 1046528
        %v463 = vsel %vm462, %v441, %v437
        %v464 = vrot.slane %v463, 7
        %466 = vset.pattern.permute.xlu0 0
        %467 = vperm.xlu0 %466, %v429
        %v468 = vpop.permute.xlu0 %467
        %471 = vset.pattern.permute.xlu0 0
        %472 = vperm.xlu0 %471, %v430
        %v473 = vpop.permute.xlu0 %472
        %476 = vset.pattern.permute.xlu0 0
        %477 = vperm.xlu0 %476, %v431
        %v478 = vpop.permute.xlu0 %477
        %481 = vset.pattern.permute.xlu0 0
        %482 = vperm.xlu0 %481, %v432
        %v483 = vpop.permute.xlu0 %482
        %486 = vset.pattern.permute.xlu0 0
        %487 = vperm.xlu0 %486, %v433
        %v488 = vpop.permute.xlu0 %487
        %491 = vset.pattern.permute.xlu0 0
        %492 = vperm.xlu0 %491, %v434
        %v493 = vpop.permute.xlu0 %492
        %496 = vset.pattern.permute.xlu0 0
        %497 = vperm.xlu0 %496, %v435
        %v498 = vpop.permute.xlu0 %497
        %501 = vset.pattern.permute.xlu0 0
        %502 = vperm.xlu0 %501, %v436
        %v503 = vpop.permute.xlu0 %502
        %v505 = vperm.slane %v443, 0
        %v506 = vperm.slane %v443, 1
        %v507 = vperm.slane %v446, 0
        %v508 = vperm.slane %v446, 1
        %v509 = vperm.slane %v449, 0
        %v510 = vperm.slane %v449, 1
        %v511 = vperm.slane %v452, 0
        %v512 = vperm.slane %v452, 1
        %v513 = vperm.slane %v455, 0
        %v514 = vperm.slane %v455, 1
        %v515 = vperm.slane %v458, 0
        %v516 = vperm.slane %v458, 1
        %v517 = vperm.slane %v461, 0
        %v518 = vperm.slane %v461, 1
        %v519 = vperm.slane %v464, 0
        %v520 = vperm.slane %v464, 1
        %v537 = vmul.f32 %v468, %v505
        %v538 = vmul.f32 %v468, %v506
        %v539 = vmul.f32 %v473, %v507
        %v540 = vmul.f32 %v473, %v508
        %v541 = vmul.f32 %v478, %v509
        %v542 = vmul.f32 %v478, %v510
        %v543 = vmul.f32 %v483, %v511
        %v544 = vmul.f32 %v483, %v512
        %v545 = vmul.f32 %v488, %v513
        %v546 = vmul.f32 %v488, %v514
        %v547 = vmul.f32 %v493, %v515
        %v548 = vmul.f32 %v493, %v516
        %v549 = vmul.f32 %v498, %v517
        %v550 = vmul.f32 %v498, %v518
        %v551 = vmul.f32 %v503, %v519
        %v552 = vmul.f32 %v503, %v520
        %v553 = vld [vmem:[%s411] sm:$0xff]
        %v554 = vld [vmem:[%s411 + $0x8] sm:$0xff]
        %v555 = vld [vmem:[%s411 + $0x10] sm:$0xff]
        %v559 = vrot.slane %v554, 7
        %v560 = vrot.slane %v555, 6
        %v561 = vsel %vm442, %v553, %v559
        %vm562 = vcmask 1041408
        %v563 = vsel %vm562, %v561, %v560
        %v564 = vsel %vm444, %v553, %v559
        %vm565 = vcmask 1042433
        %v566 = vsel %vm565, %v564, %v560
        %v567 = vrot.slane %v566, 1
        %v568 = vsel %vm447, %v553, %v559
        %vm569 = vcmask 1043458
        %v570 = vsel %vm569, %v568, %v560
        %v571 = vrot.slane %v570, 2
        %v572 = vsel %vm450, %v553, %v559
        %vm573 = vcmask 1044483
        %v574 = vsel %vm573, %v572, %v560
        %v575 = vrot.slane %v574, 3
        %v576 = vsel %vm453, %v553, %v559
        %vm577 = vcmask 1045508
        %v578 = vsel %vm577, %v576, %v560
        %v579 = vrot.slane %v578, 4
        %v580 = vsel %vm456, %v553, %v559
        %vm581 = vcmask 1046533
        %v582 = vsel %vm581, %v580, %v560
        %v583 = vrot.slane %v582, 5
        %v584 = vsel %vm459, %v553, %v559
        %vm585 = vcmask 1045504
        %v586 = vsel %vm585, %v560, %v584
        %v587 = vrot.slane %v586, 6
        %v588 = vsel %vm462, %v559, %v553
        %vm589 = vcmask 1046529
        %v590 = vsel %vm589, %v560, %v588
        %v591 = vrot.slane %v590, 7
        %592 = vset.pattern.permute.xlu0 1
        %593 = vperm.xlu0 %592, %v429
        %v594 = vpop.permute.xlu0 %593
        %596 = vset.pattern.permute.xlu0 1
        %597 = vperm.xlu0 %596, %v430
        %v598 = vpop.permute.xlu0 %597
        %600 = vset.pattern.permute.xlu0 1
        %601 = vperm.xlu0 %600, %v431
        %v602 = vpop.permute.xlu0 %601
        %604 = vset.pattern.permute.xlu0 1
        %605 = vperm.xlu0 %604, %v432
        %v606 = vpop.permute.xlu0 %605
        %608 = vset.pattern.permute.xlu0 1
        %609 = vperm.xlu0 %608, %v433
        %v610 = vpop.permute.xlu0 %609
        %612 = vset.pattern.permute.xlu0 1
        %613 = vperm.xlu0 %612, %v434
        %v614 = vpop.permute.xlu0 %613
        %616 = vset.pattern.permute.xlu0 1
        %617 = vperm.xlu0 %616, %v435
        %v618 = vpop.permute.xlu0 %617
        %620 = vset.pattern.permute.xlu0 1
        %621 = vperm.xlu0 %620, %v436
        %v622 = vpop.permute.xlu0 %621
        %v624 = vperm.slane %v563, 0
        %v625 = vperm.slane %v563, 1
        %v626 = vperm.slane %v563, 2
        %v627 = vperm.slane %v567, 0
        %v628 = vperm.slane %v567, 1
        %v629 = vperm.slane %v567, 2
        %v630 = vperm.slane %v571, 0
        %v631 = vperm.slane %v571, 1
        %v632 = vperm.slane %v571, 2
        %v633 = vperm.slane %v575, 0
        %v634 = vperm.slane %v575, 1
        %v635 = vperm.slane %v575, 2
        %v636 = vperm.slane %v579, 0
        %v637 = vperm.slane %v579, 1
        %v638 = vperm.slane %v579, 2
        %v639 = vperm.slane %v583, 0
        %v640 = vperm.slane %v583, 1
        %v641 = vperm.slane %v583, 2
        %v642 = vperm.slane %v587, 0
        %v643 = vperm.slane %v587, 1
        %v644 = vperm.slane %v587, 2
        %v645 = vperm.slane %v591, 0
        %v646 = vperm.slane %v591, 1
        %v647 = vperm.slane %v591, 2
        %v672 = vmul.f32 %v594, %v624
        %v673 = vmul.f32 %v594, %v625
        %v674 = vmul.f32 %v594, %v626
        %v675 = vmul.f32 %v598, %v627
        %v676 = vmul.f32 %v598, %v628
        %v677 = vmul.f32 %v598, %v629
        %v678 = vmul.f32 %v602, %v630
        %v679 = vmul.f32 %v602, %v631
        %v680 = vmul.f32 %v602, %v632
        %v681 = vmul.f32 %v606, %v633
        %v682 = vmul.f32 %v606, %v634
        %v683 = vmul.f32 %v606, %v635
        %v684 = vmul.f32 %v610, %v636
        %v685 = vmul.f32 %v610, %v637
        %v686 = vmul.f32 %v610, %v638
        %v687 = vmul.f32 %v614, %v639
        %v688 = vmul.f32 %v614, %v640
        %v689 = vmul.f32 %v614, %v641
        %v690 = vmul.f32 %v618, %v642
        %v691 = vmul.f32 %v618, %v643
        %v692 = vmul.f32 %v618, %v644
        %v693 = vmul.f32 %v622, %v645
        %v694 = vmul.f32 %v622, %v646
        %v695 = vmul.f32 %v622, %v647
        %720 = vrot.lane.b32.xlu0 %v672, 127
        %v721 = vpop.permute.xlu0 %720
        %722 = vrot.lane.b32.xlu0 %v673, 127
        %v723 = vpop.permute.xlu0 %722
        %724 = vrot.lane.b32.xlu0 %v674, 127
        %v725 = vpop.permute.xlu0 %724
        %726 = vrot.lane.b32.xlu0 %v675, 127
        %v727 = vpop.permute.xlu0 %726
        %728 = vrot.lane.b32.xlu0 %v676, 127
        %v729 = vpop.permute.xlu0 %728
        %730 = vrot.lane.b32.xlu0 %v677, 127
        %v731 = vpop.permute.xlu0 %730
        %732 = vrot.lane.b32.xlu0 %v678, 127
        %v733 = vpop.permute.xlu0 %732
        %734 = vrot.lane.b32.xlu0 %v679, 127
        %v735 = vpop.permute.xlu0 %734
        %736 = vrot.lane.b32.xlu0 %v680, 127
        %v737 = vpop.permute.xlu0 %736
        %738 = vrot.lane.b32.xlu0 %v681, 127
        %v739 = vpop.permute.xlu0 %738
        %740 = vrot.lane.b32.xlu0 %v682, 127
        %v741 = vpop.permute.xlu0 %740
        %742 = vrot.lane.b32.xlu0 %v683, 127
        %v743 = vpop.permute.xlu0 %742
        %744 = vrot.lane.b32.xlu0 %v684, 127
        %v745 = vpop.permute.xlu0 %744
        %746 = vrot.lane.b32.xlu0 %v685, 127
        %v747 = vpop.permute.xlu0 %746
        %748 = vrot.lane.b32.xlu0 %v686, 127
        %v749 = vpop.permute.xlu0 %748
        %750 = vrot.lane.b32.xlu0 %v687, 127
        %v751 = vpop.permute.xlu0 %750
        %752 = vrot.lane.b32.xlu0 %v688, 127
        %v753 = vpop.permute.xlu0 %752
        %754 = vrot.lane.b32.xlu0 %v689, 127
        %v755 = vpop.permute.xlu0 %754
        %756 = vrot.lane.b32.xlu0 %v690, 127
        %v757 = vpop.permute.xlu0 %756
        %758 = vrot.lane.b32.xlu0 %v691, 127
        %v759 = vpop.permute.xlu0 %758
        %760 = vrot.lane.b32.xlu0 %v692, 127
        %v761 = vpop.permute.xlu0 %760
        %762 = vrot.lane.b32.xlu0 %v693, 127
        %v763 = vpop.permute.xlu0 %762
        %764 = vrot.lane.b32.xlu0 %v694, 127
        %v765 = vpop.permute.xlu0 %764
        %766 = vrot.lane.b32.xlu0 %v695, 127
        %v767 = vpop.permute.xlu0 %766
        %vm768 = vcmask 1039360
        %v769 = vsel %vm768, %v721, %v723
        %v770 = vsel %vm768, %v723, %v725
        %v771 = vsel %vm768, %v727, %v729
        %v772 = vsel %vm768, %v729, %v731
        %v773 = vsel %vm768, %v733, %v735
        %v774 = vsel %vm768, %v735, %v737
        %v775 = vsel %vm768, %v739, %v741
        %v776 = vsel %vm768, %v741, %v743
        %v777 = vsel %vm768, %v745, %v747
        %v778 = vsel %vm768, %v747, %v749
        %v779 = vsel %vm768, %v751, %v753
        %v780 = vsel %vm768, %v753, %v755
        %v781 = vsel %vm768, %v757, %v759
        %v782 = vsel %vm768, %v759, %v761
        %v783 = vsel %vm768, %v763, %v765
        %v784 = vsel %vm768, %v765, %v767
        %v801 = vadd.f32 %v537, %v769
        %v802 = vadd.f32 %v538, %v770
        %v803 = vadd.f32 %v539, %v771
        %v804 = vadd.f32 %v540, %v772
        %v805 = vadd.f32 %v541, %v773
        %v806 = vadd.f32 %v542, %v774
        %v807 = vadd.f32 %v543, %v775
        %v808 = vadd.f32 %v544, %v776
        %v809 = vadd.f32 %v545, %v777
        %v810 = vadd.f32 %v546, %v778
        %v811 = vadd.f32 %v547, %v779
        %v812 = vadd.f32 %v548, %v780
        %v813 = vadd.f32 %v549, %v781
        %v814 = vadd.f32 %v550, %v782
        %v815 = vadd.f32 %v551, %v783
        %v816 = vadd.f32 %v552, %v784
        %817 = vset.pattern.permute.xlu0 2
        %818 = vperm.xlu0 %817, %v429
        %v819 = vpop.permute.xlu0 %818
        %821 = vset.pattern.permute.xlu0 2
        %822 = vperm.xlu0 %821, %v430
        %v823 = vpop.permute.xlu0 %822
        %825 = vset.pattern.permute.xlu0 2
        %826 = vperm.xlu0 %825, %v431
        %v827 = vpop.permute.xlu0 %826
        %829 = vset.pattern.permute.xlu0 2
        %830 = vperm.xlu0 %829, %v432
        %v831 = vpop.permute.xlu0 %830
        %833 = vset.pattern.permute.xlu0 2
        %834 = vperm.xlu0 %833, %v433
        %v835 = vpop.permute.xlu0 %834
        %837 = vset.pattern.permute.xlu0 2
        %838 = vperm.xlu0 %837, %v434
        %v839 = vpop.permute.xlu0 %838
        %841 = vset.pattern.permute.xlu0 2
        %842 = vperm.xlu0 %841, %v435
        %v843 = vpop.permute.xlu0 %842
        %845 = vset.pattern.permute.xlu0 2
        %846 = vperm.xlu0 %845, %v436
        %v847 = vpop.permute.xlu0 %846
        %v849 = vmul.f32 %v819, %v624
        %v850 = vmul.f32 %v819, %v625
        %v851 = vmul.f32 %v819, %v626
        %v852 = vmul.f32 %v823, %v627
        %v853 = vmul.f32 %v823, %v628
        %v854 = vmul.f32 %v823, %v629
        %v855 = vmul.f32 %v827, %v630
        %v856 = vmul.f32 %v827, %v631
        %v857 = vmul.f32 %v827, %v632
        %v858 = vmul.f32 %v831, %v633
        %v859 = vmul.f32 %v831, %v634
        %v860 = vmul.f32 %v831, %v635
        %v861 = vmul.f32 %v835, %v636
        %v862 = vmul.f32 %v835, %v637
        %v863 = vmul.f32 %v835, %v638
        %v864 = vmul.f32 %v839, %v639
        %v865 = vmul.f32 %v839, %v640
        %v866 = vmul.f32 %v839, %v641
        %v867 = vmul.f32 %v843, %v642
        %v868 = vmul.f32 %v843, %v643
        %v869 = vmul.f32 %v843, %v644
        %v870 = vmul.f32 %v847, %v645
        %v871 = vmul.f32 %v847, %v646
        %v872 = vmul.f32 %v847, %v647
        %897 = vrot.lane.b32.xlu0 %v849, 126
        %v898 = vpop.permute.xlu0 %897
        %899 = vrot.lane.b32.xlu0 %v850, 126
        %v900 = vpop.permute.xlu0 %899
        %901 = vrot.lane.b32.xlu0 %v851, 126
        %v902 = vpop.permute.xlu0 %901
        %903 = vrot.lane.b32.xlu0 %v852, 126
        %v904 = vpop.permute.xlu0 %903
        %905 = vrot.lane.b32.xlu0 %v853, 126
        %v906 = vpop.permute.xlu0 %905
        %907 = vrot.lane.b32.xlu0 %v854, 126
        %v908 = vpop.permute.xlu0 %907
        %909 = vrot.lane.b32.xlu0 %v855, 126
        %v910 = vpop.permute.xlu0 %909
        %911 = vrot.lane.b32.xlu0 %v856, 126
        %v912 = vpop.permute.xlu0 %911
        %913 = vrot.lane.b32.xlu0 %v857, 126
        %v914 = vpop.permute.xlu0 %913
        %915 = vrot.lane.b32.xlu0 %v858, 126
        %v916 = vpop.permute.xlu0 %915
        %917 = vrot.lane.b32.xlu0 %v859, 126
        %v918 = vpop.permute.xlu0 %917
        %919 = vrot.lane.b32.xlu0 %v860, 126
        %v920 = vpop.permute.xlu0 %919
        %921 = vrot.lane.b32.xlu0 %v861, 126
        %v922 = vpop.permute.xlu0 %921
        %923 = vrot.lane.b32.xlu0 %v862, 126
        %v924 = vpop.permute.xlu0 %923
        %925 = vrot.lane.b32.xlu0 %v863, 126
        %v926 = vpop.permute.xlu0 %925
        %927 = vrot.lane.b32.xlu0 %v864, 126
        %v928 = vpop.permute.xlu0 %927
        %929 = vrot.lane.b32.xlu0 %v865, 126
        %v930 = vpop.permute.xlu0 %929
        %931 = vrot.lane.b32.xlu0 %v866, 126
        %v932 = vpop.permute.xlu0 %931
        %933 = vrot.lane.b32.xlu0 %v867, 126
        %v934 = vpop.permute.xlu0 %933
        %935 = vrot.lane.b32.xlu0 %v868, 126
        %v936 = vpop.permute.xlu0 %935
        %937 = vrot.lane.b32.xlu0 %v869, 126
        %v938 = vpop.permute.xlu0 %937
        %939 = vrot.lane.b32.xlu0 %v870, 126
        %v940 = vpop.permute.xlu0 %939
        %941 = vrot.lane.b32.xlu0 %v871, 126
        %v942 = vpop.permute.xlu0 %941
        %943 = vrot.lane.b32.xlu0 %v872, 126
        %v944 = vpop.permute.xlu0 %943
        %vm945 = vcmask 1031168
        %v946 = vsel %vm945, %v898, %v900
        %v947 = vsel %vm945, %v900, %v902
        %v948 = vsel %vm945, %v904, %v906
        %v949 = vsel %vm945, %v906, %v908
        %v950 = vsel %vm945, %v910, %v912
        %v951 = vsel %vm945, %v912, %v914
        %v952 = vsel %vm945, %v916, %v918
        %v953 = vsel %vm945, %v918, %v920
        %v954 = vsel %vm945, %v922, %v924
        %v955 = vsel %vm945, %v924, %v926
        %v956 = vsel %vm945, %v928, %v930
        %v957 = vsel %vm945, %v930, %v932
        %v958 = vsel %vm945, %v934, %v936
        %v959 = vsel %vm945, %v936, %v938
        %v960 = vsel %vm945, %v940, %v942
        %v961 = vsel %vm945, %v942, %v944
        %v978 = vadd.f32 %v801, %v946
        %v979 = vadd.f32 %v802, %v947
        %v980 = vadd.f32 %v803, %v948
        %v981 = vadd.f32 %v804, %v949
        %v982 = vadd.f32 %v805, %v950
        %v983 = vadd.f32 %v806, %v951
        %v984 = vadd.f32 %v807, %v952
        %v985 = vadd.f32 %v808, %v953
        %v986 = vadd.f32 %v809, %v954
        %v987 = vadd.f32 %v810, %v955
        %v988 = vadd.f32 %v811, %v956
        %v989 = vadd.f32 %v812, %v957
        %v990 = vadd.f32 %v813, %v958
        %v991 = vadd.f32 %v814, %v959
        %v992 = vadd.f32 %v815, %v960
        %v993 = vadd.f32 %v816, %v961
        %994 = vset.pattern.permute.xlu0 3
        %995 = vperm.xlu0 %994, %v429
        %v996 = vpop.permute.xlu0 %995
        %998 = vset.pattern.permute.xlu0 3
        %999 = vperm.xlu0 %998, %v430
        %v1000 = vpop.permute.xlu0 %999
        %1002 = vset.pattern.permute.xlu0 3
        %1003 = vperm.xlu0 %1002, %v431
        %v1004 = vpop.permute.xlu0 %1003
        %1006 = vset.pattern.permute.xlu0 3
        %1007 = vperm.xlu0 %1006, %v432
        %v1008 = vpop.permute.xlu0 %1007
        %1010 = vset.pattern.permute.xlu0 3
        %1011 = vperm.xlu0 %1010, %v433
        %v1012 = vpop.permute.xlu0 %1011
        %1014 = vset.pattern.permute.xlu0 3
        %1015 = vperm.xlu0 %1014, %v434
        %v1016 = vpop.permute.xlu0 %1015
        %1018 = vset.pattern.permute.xlu0 3
        %1019 = vperm.xlu0 %1018, %v435
        %v1020 = vpop.permute.xlu0 %1019
        %1022 = vset.pattern.permute.xlu0 3
        %1023 = vperm.xlu0 %1022, %v436
        %v1024 = vpop.permute.xlu0 %1023
        %v1026 = vmul.f32 %v996, %v624
        %v1027 = vmul.f32 %v996, %v625
        %v1028 = vmul.f32 %v996, %v626
        %v1029 = vmul.f32 %v1000, %v627
        %v1030 = vmul.f32 %v1000, %v628
        %v1031 = vmul.f32 %v1000, %v629
        %v1032 = vmul.f32 %v1004, %v630
        %v1033 = vmul.f32 %v1004, %v631
        %v1034 = vmul.f32 %v1004, %v632
        %v1035 = vmul.f32 %v1008, %v633
        %v1036 = vmul.f32 %v1008, %v634
        %v1037 = vmul.f32 %v1008, %v635
        %v1038 = vmul.f32 %v1012, %v636
        %v1039 = vmul.f32 %v1012, %v637
        %v1040 = vmul.f32 %v1012, %v638
        %v1041 = vmul.f32 %v1016, %v639
        %v1042 = vmul.f32 %v1016, %v640
        %v1043 = vmul.f32 %v1016, %v641
        %v1044 = vmul.f32 %v1020, %v642
        %v1045 = vmul.f32 %v1020, %v643
        %v1046 = vmul.f32 %v1020, %v644
        %v1047 = vmul.f32 %v1024, %v645
        %v1048 = vmul.f32 %v1024, %v646
        %v1049 = vmul.f32 %v1024, %v647
        %1074 = vrot.lane.b32.xlu0 %v1026, 125
        %v1075 = vpop.permute.xlu0 %1074
        %1076 = vrot.lane.b32.xlu0 %v1027, 125
        %v1077 = vpop.permute.xlu0 %1076
        %1078 = vrot.lane.b32.xlu0 %v1028, 125
        %v1079 = vpop.permute.xlu0 %1078
        %1080 = vrot.lane.b32.xlu0 %v1029, 125
        %v1081 = vpop.permute.xlu0 %1080
        %1082 = vrot.lane.b32.xlu0 %v1030, 125
        %v1083 = vpop.permute.xlu0 %1082
        %1084 = vrot.lane.b32.xlu0 %v1031, 125
        %v1085 = vpop.permute.xlu0 %1084
        %1086 = vrot.lane.b32.xlu0 %v1032, 125
        %v1087 = vpop.permute.xlu0 %1086
        %1088 = vrot.lane.b32.xlu0 %v1033, 125
        %v1089 = vpop.permute.xlu0 %1088
        %1090 = vrot.lane.b32.xlu0 %v1034, 125
        %v1091 = vpop.permute.xlu0 %1090
        %1092 = vrot.lane.b32.xlu0 %v1035, 125
        %v1093 = vpop.permute.xlu0 %1092
        %1094 = vrot.lane.b32.xlu0 %v1036, 125
        %v1095 = vpop.permute.xlu0 %1094
        %1096 = vrot.lane.b32.xlu0 %v1037, 125
        %v1097 = vpop.permute.xlu0 %1096
        %1098 = vrot.lane.b32.xlu0 %v1038, 125
        %v1099 = vpop.permute.xlu0 %1098
        %1100 = vrot.lane.b32.xlu0 %v1039, 125
        %v1101 = vpop.permute.xlu0 %1100
        %1102 = vrot.lane.b32.xlu0 %v1040, 125
        %v1103 = vpop.permute.xlu0 %1102
        %1104 = vrot.lane.b32.xlu0 %v1041, 125
        %v1105 = vpop.permute.xlu0 %1104
        %1106 = vrot.lane.b32.xlu0 %v1042, 125
        %v1107 = vpop.permute.xlu0 %1106
        %1108 = vrot.lane.b32.xlu0 %v1043, 125
        %v1109 = vpop.permute.xlu0 %1108
        %1110 = vrot.lane.b32.xlu0 %v1044, 125
        %v1111 = vpop.permute.xlu0 %1110
        %1112 = vrot.lane.b32.xlu0 %v1045, 125
        %v1113 = vpop.permute.xlu0 %1112
        %1114 = vrot.lane.b32.xlu0 %v1046, 125
        %v1115 = vpop.permute.xlu0 %1114
        %1116 = vrot.lane.b32.xlu0 %v1047, 125
        %v1117 = vpop.permute.xlu0 %1116
        %1118 = vrot.lane.b32.xlu0 %v1048, 125
        %v1119 = vpop.permute.xlu0 %1118
        %1120 = vrot.lane.b32.xlu0 %v1049, 125
        %v1121 = vpop.permute.xlu0 %1120
        %vm1122 = vcmask 1022976
        %v1123 = vsel %vm1122, %v1075, %v1077
        %v1124 = vsel %vm1122, %v1077, %v1079
        %v1125 = vsel %vm1122, %v1081, %v1083
        %v1126 = vsel %vm1122, %v1083, %v1085
        %v1127 = vsel %vm1122, %v1087, %v1089
        %v1128 = vsel %vm1122, %v1089, %v1091
        %v1129 = vsel %vm1122, %v1093, %v1095
        %v1130 = vsel %vm1122, %v1095, %v1097
        %v1131 = vsel %vm1122, %v1099, %v1101
        %v1132 = vsel %vm1122, %v1101, %v1103
        %v1133 = vsel %vm1122, %v1105, %v1107
        %v1134 = vsel %vm1122, %v1107, %v1109
        %v1135 = vsel %vm1122, %v1111, %v1113
        %v1136 = vsel %vm1122, %v1113, %v1115
        %v1137 = vsel %vm1122, %v1117, %v1119
        %v1138 = vsel %vm1122, %v1119, %v1121
        %v1155 = vadd.f32 %v978, %v1123
        %v1156 = vadd.f32 %v979, %v1124
        %v1157 = vadd.f32 %v980, %v1125
        %v1158 = vadd.f32 %v981, %v1126
        %v1159 = vadd.f32 %v982, %v1127
        %v1160 = vadd.f32 %v983, %v1128
        %v1161 = vadd.f32 %v984, %v1129
        %v1162 = vadd.f32 %v985, %v1130
        %v1163 = vadd.f32 %v986, %v1131
        %v1164 = vadd.f32 %v987, %v1132
        %v1165 = vadd.f32 %v988, %v1133
        %v1166 = vadd.f32 %v989, %v1134
        %v1167 = vadd.f32 %v990, %v1135
        %v1168 = vadd.f32 %v991, %v1136
        %v1169 = vadd.f32 %v992, %v1137
        %v1170 = vadd.f32 %v993, %v1138
        %1171 = vset.pattern.permute.xlu0 4
        %1172 = vperm.xlu0 %1171, %v429
        %v1173 = vpop.permute.xlu0 %1172
        %1175 = vset.pattern.permute.xlu0 4
        %1176 = vperm.xlu0 %1175, %v430
        %v1177 = vpop.permute.xlu0 %1176
        %1179 = vset.pattern.permute.xlu0 4
        %1180 = vperm.xlu0 %1179, %v431
        %v1181 = vpop.permute.xlu0 %1180
        %1183 = vset.pattern.permute.xlu0 4
        %1184 = vperm.xlu0 %1183, %v432
        %v1185 = vpop.permute.xlu0 %1184
        %1187 = vset.pattern.permute.xlu0 4
        %1188 = vperm.xlu0 %1187, %v433
        %v1189 = vpop.permute.xlu0 %1188
        %1191 = vset.pattern.permute.xlu0 4
        %1192 = vperm.xlu0 %1191, %v434
        %v1193 = vpop.permute.xlu0 %1192
        %1195 = vset.pattern.permute.xlu0 4
        %1196 = vperm.xlu0 %1195, %v435
        %v1197 = vpop.permute.xlu0 %1196
        %1199 = vset.pattern.permute.xlu0 4
        %1200 = vperm.xlu0 %1199, %v436
        %v1201 = vpop.permute.xlu0 %1200
        %v1203 = vmul.f32 %v1173, %v624
        %v1204 = vmul.f32 %v1173, %v625
        %v1205 = vmul.f32 %v1173, %v626
        %v1206 = vmul.f32 %v1177, %v627
        %v1207 = vmul.f32 %v1177, %v628
        %v1208 = vmul.f32 %v1177, %v629
        %v1209 = vmul.f32 %v1181, %v630
        %v1210 = vmul.f32 %v1181, %v631
        %v1211 = vmul.f32 %v1181, %v632
        %v1212 = vmul.f32 %v1185, %v633
        %v1213 = vmul.f32 %v1185, %v634
        %v1214 = vmul.f32 %v1185, %v635
        %v1215 = vmul.f32 %v1189, %v636
        %v1216 = vmul.f32 %v1189, %v637
        %v1217 = vmul.f32 %v1189, %v638
        %v1218 = vmul.f32 %v1193, %v639
        %v1219 = vmul.f32 %v1193, %v640
        %v1220 = vmul.f32 %v1193, %v641
        %v1221 = vmul.f32 %v1197, %v642
        %v1222 = vmul.f32 %v1197, %v643
        %v1223 = vmul.f32 %v1197, %v644
        %v1224 = vmul.f32 %v1201, %v645
        %v1225 = vmul.f32 %v1201, %v646
        %v1226 = vmul.f32 %v1201, %v647
        %1251 = vrot.lane.b32.xlu0 %v1203, 124
        %v1252 = vpop.permute.xlu0 %1251
        %1253 = vrot.lane.b32.xlu0 %v1204, 124
        %v1254 = vpop.permute.xlu0 %1253
        %1255 = vrot.lane.b32.xlu0 %v1205, 124
        %v1256 = vpop.permute.xlu0 %1255
        %1257 = vrot.lane.b32.xlu0 %v1206, 124
        %v1258 = vpop.permute.xlu0 %1257
        %1259 = vrot.lane.b32.xlu0 %v1207, 124
        %v1260 = vpop.permute.xlu0 %1259
        %1261 = vrot.lane.b32.xlu0 %v1208, 124
        %v1262 = vpop.permute.xlu0 %1261
        %1263 = vrot.lane.b32.xlu0 %v1209, 124
        %v1264 = vpop.permute.xlu0 %1263
        %1265 = vrot.lane.b32.xlu0 %v1210, 124
        %v1266 = vpop.permute.xlu0 %1265
        %1267 = vrot.lane.b32.xlu0 %v1211, 124
        %v1268 = vpop.permute.xlu0 %1267
        %1269 = vrot.lane.b32.xlu0 %v1212, 124
        %v1270 = vpop.permute.xlu0 %1269
        %1271 = vrot.lane.b32.xlu0 %v1213, 124
        %v1272 = vpop.permute.xlu0 %1271
        %1273 = vrot.lane.b32.xlu0 %v1214, 124
        %v1274 = vpop.permute.xlu0 %1273
        %1275 = vrot.lane.b32.xlu0 %v1215, 124
        %v1276 = vpop.permute.xlu0 %1275
        %1277 = vrot.lane.b32.xlu0 %v1216, 124
        %v1278 = vpop.permute.xlu0 %1277
        %1279 = vrot.lane.b32.xlu0 %v1217, 124
        %v1280 = vpop.permute.xlu0 %1279
        %1281 = vrot.lane.b32.xlu0 %v1218, 124
        %v1282 = vpop.permute.xlu0 %1281
        %1283 = vrot.lane.b32.xlu0 %v1219, 124
        %v1284 = vpop.permute.xlu0 %1283
        %1285 = vrot.lane.b32.xlu0 %v1220, 124
        %v1286 = vpop.permute.xlu0 %1285
        %1287 = vrot.lane.b32.xlu0 %v1221, 124
        %v1288 = vpop.permute.xlu0 %1287
        %1289 = vrot.lane.b32.xlu0 %v1222, 124
        %v1290 = vpop.permute.xlu0 %1289
        %1291 = vrot.lane.b32.xlu0 %v1223, 124
        %v1292 = vpop.permute.xlu0 %1291
        %1293 = vrot.lane.b32.xlu0 %v1224, 124
        %v1294 = vpop.permute.xlu0 %1293
        %1295 = vrot.lane.b32.xlu0 %v1225, 124
        %v1296 = vpop.permute.xlu0 %1295
        %1297 = vrot.lane.b32.xlu0 %v1226, 124
        %v1298 = vpop.permute.xlu0 %1297
        %vm1299 = vcmask 1014784
        %v1300 = vsel %vm1299, %v1252, %v1254
        %v1301 = vsel %vm1299, %v1254, %v1256
        %v1302 = vsel %vm1299, %v1258, %v1260
        %v1303 = vsel %vm1299, %v1260, %v1262
        %v1304 = vsel %vm1299, %v1264, %v1266
        %v1305 = vsel %vm1299, %v1266, %v1268
        %v1306 = vsel %vm1299, %v1270, %v1272
        %v1307 = vsel %vm1299, %v1272, %v1274
        %v1308 = vsel %vm1299, %v1276, %v1278
        %v1309 = vsel %vm1299, %v1278, %v1280
        %v1310 = vsel %vm1299, %v1282, %v1284
        %v1311 = vsel %vm1299, %v1284, %v1286
        %v1312 = vsel %vm1299, %v1288, %v1290
        %v1313 = vsel %vm1299, %v1290, %v1292
        %v1314 = vsel %vm1299, %v1294, %v1296
        %v1315 = vsel %vm1299, %v1296, %v1298
        %v1332 = vadd.f32 %v1155, %v1300
        %v1333 = vadd.f32 %v1156, %v1301
        %v1334 = vadd.f32 %v1157, %v1302
        %v1335 = vadd.f32 %v1158, %v1303
        %v1336 = vadd.f32 %v1159, %v1304
        %v1337 = vadd.f32 %v1160, %v1305
        %v1338 = vadd.f32 %v1161, %v1306
        %v1339 = vadd.f32 %v1162, %v1307
        %v1340 = vadd.f32 %v1163, %v1308
        %v1341 = vadd.f32 %v1164, %v1309
        %v1342 = vadd.f32 %v1165, %v1310
        %v1343 = vadd.f32 %v1166, %v1311
        %v1344 = vadd.f32 %v1167, %v1312
        %v1345 = vadd.f32 %v1168, %v1313
        %v1346 = vadd.f32 %v1169, %v1314
        %v1347 = vadd.f32 %v1170, %v1315
        %1348 = vset.pattern.permute.xlu0 5
        %1349 = vperm.xlu0 %1348, %v429
        %v1350 = vpop.permute.xlu0 %1349
        %1352 = vset.pattern.permute.xlu0 5
        %1353 = vperm.xlu0 %1352, %v430
        %v1354 = vpop.permute.xlu0 %1353
        %1356 = vset.pattern.permute.xlu0 5
        %1357 = vperm.xlu0 %1356, %v431
        %v1358 = vpop.permute.xlu0 %1357
        %1360 = vset.pattern.permute.xlu0 5
        %1361 = vperm.xlu0 %1360, %v432
        %v1362 = vpop.permute.xlu0 %1361
        %1364 = vset.pattern.permute.xlu0 5
        %1365 = vperm.xlu0 %1364, %v433
        %v1366 = vpop.permute.xlu0 %1365
        %1368 = vset.pattern.permute.xlu0 5
        %1369 = vperm.xlu0 %1368, %v434
        %v1370 = vpop.permute.xlu0 %1369
        %1372 = vset.pattern.permute.xlu0 5
        %1373 = vperm.xlu0 %1372, %v435
        %v1374 = vpop.permute.xlu0 %1373
        %1376 = vset.pattern.permute.xlu0 5
        %1377 = vperm.xlu0 %1376, %v436
        %v1378 = vpop.permute.xlu0 %1377
        %v1380 = vmul.f32 %v1350, %v624
        %v1381 = vmul.f32 %v1350, %v625
        %v1382 = vmul.f32 %v1350, %v626
        %v1383 = vmul.f32 %v1354, %v627
        %v1384 = vmul.f32 %v1354, %v628
        %v1385 = vmul.f32 %v1354, %v629
        %v1386 = vmul.f32 %v1358, %v630
        %v1387 = vmul.f32 %v1358, %v631
        %v1388 = vmul.f32 %v1358, %v632
        %v1389 = vmul.f32 %v1362, %v633
        %v1390 = vmul.f32 %v1362, %v634
        %v1391 = vmul.f32 %v1362, %v635
        %v1392 = vmul.f32 %v1366, %v636
        %v1393 = vmul.f32 %v1366, %v637
        %v1394 = vmul.f32 %v1366, %v638
        %v1395 = vmul.f32 %v1370, %v639
        %v1396 = vmul.f32 %v1370, %v640
        %v1397 = vmul.f32 %v1370, %v641
        %v1398 = vmul.f32 %v1374, %v642
        %v1399 = vmul.f32 %v1374, %v643
        %v1400 = vmul.f32 %v1374, %v644
        %v1401 = vmul.f32 %v1378, %v645
        %v1402 = vmul.f32 %v1378, %v646
        %v1403 = vmul.f32 %v1378, %v647
        %1428 = vrot.lane.b32.xlu0 %v1380, 123
        %v1429 = vpop.permute.xlu0 %1428
        %1430 = vrot.lane.b32.xlu0 %v1381, 123
        %v1431 = vpop.permute.xlu0 %1430
        %1432 = vrot.lane.b32.xlu0 %v1382, 123
        %v1433 = vpop.permute.xlu0 %1432
        %1434 = vrot.lane.b32.xlu0 %v1383, 123
        %v1435 = vpop.permute.xlu0 %1434
        %1436 = vrot.lane.b32.xlu0 %v1384, 123
        %v1437 = vpop.permute.xlu0 %1436
        %1438 = vrot.lane.b32.xlu0 %v1385, 123
        %v1439 = vpop.permute.xlu0 %1438
        %1440 = vrot.lane.b32.xlu0 %v1386, 123
        %v1441 = vpop.permute.xlu0 %1440
        %1442 = vrot.lane.b32.xlu0 %v1387, 123
        %v1443 = vpop.permute.xlu0 %1442
        %1444 = vrot.lane.b32.xlu0 %v1388, 123
        %v1445 = vpop.permute.xlu0 %1444
        %1446 = vrot.lane.b32.xlu0 %v1389, 123
        %v1447 = vpop.permute.xlu0 %1446
        %1448 = vrot.lane.b32.xlu0 %v1390, 123
        %v1449 = vpop.permute.xlu0 %1448
        %1450 = vrot.lane.b32.xlu0 %v1391, 123
        %v1451 = vpop.permute.xlu0 %1450
        %1452 = vrot.lane.b32.xlu0 %v1392, 123
        %v1453 = vpop.permute.xlu0 %1452
        %1454 = vrot.lane.b32.xlu0 %v1393, 123
        %v1455 = vpop.permute.xlu0 %1454
        %1456 = vrot.lane.b32.xlu0 %v1394, 123
        %v1457 = vpop.permute.xlu0 %1456
        %1458 = vrot.lane.b32.xlu0 %v1395, 123
        %v1459 = vpop.permute.xlu0 %1458
        %1460 = vrot.lane.b32.xlu0 %v1396, 123
        %v1461 = vpop.permute.xlu0 %1460
        %1462 = vrot.lane.b32.xlu0 %v1397, 123
        %v1463 = vpop.permute.xlu0 %1462
        %1464 = vrot.lane.b32.xlu0 %v1398, 123
        %v1465 = vpop.permute.xlu0 %1464
        %1466 = vrot.lane.b32.xlu0 %v1399, 123
        %v1467 = vpop.permute.xlu0 %1466
        %1468 = vrot.lane.b32.xlu0 %v1400, 123
        %v1469 = vpop.permute.xlu0 %1468
        %1470 = vrot.lane.b32.xlu0 %v1401, 123
        %v1471 = vpop.permute.xlu0 %1470
        %1472 = vrot.lane.b32.xlu0 %v1402, 123
        %v1473 = vpop.permute.xlu0 %1472
        %1474 = vrot.lane.b32.xlu0 %v1403, 123
        %v1475 = vpop.permute.xlu0 %1474
        %vm1476 = vcmask 1006592
        %v1477 = vsel %vm1476, %v1429, %v1431
        %v1478 = vsel %vm1476, %v1431, %v1433
        %v1479 = vsel %vm1476, %v1435, %v1437
        %v1480 = vsel %vm1476, %v1437, %v1439
        %v1481 = vsel %vm1476, %v1441, %v1443
        %v1482 = vsel %vm1476, %v1443, %v1445
        %v1483 = vsel %vm1476, %v1447, %v1449
        %v1484 = vsel %vm1476, %v1449, %v1451
        %v1485 = vsel %vm1476, %v1453, %v1455
        %v1486 = vsel %vm1476, %v1455, %v1457
        %v1487 = vsel %vm1476, %v1459, %v1461
        %v1488 = vsel %vm1476, %v1461, %v1463
        %v1489 = vsel %vm1476, %v1465, %v1467
        %v1490 = vsel %vm1476, %v1467, %v1469
        %v1491 = vsel %vm1476, %v1471, %v1473
        %v1492 = vsel %vm1476, %v1473, %v1475
        %v1509 = vadd.f32 %v1332, %v1477
        %v1510 = vadd.f32 %v1333, %v1478
        %v1511 = vadd.f32 %v1334, %v1479
        %v1512 = vadd.f32 %v1335, %v1480
        %v1513 = vadd.f32 %v1336, %v1481
        %v1514 = vadd.f32 %v1337, %v1482
        %v1515 = vadd.f32 %v1338, %v1483
        %v1516 = vadd.f32 %v1339, %v1484
        %v1517 = vadd.f32 %v1340, %v1485
        %v1518 = vadd.f32 %v1341, %v1486
        %v1519 = vadd.f32 %v1342, %v1487
        %v1520 = vadd.f32 %v1343, %v1488
        %v1521 = vadd.f32 %v1344, %v1489
        %v1522 = vadd.f32 %v1345, %v1490
        %v1523 = vadd.f32 %v1346, %v1491
        %v1524 = vadd.f32 %v1347, %v1492
        %1525 = vset.pattern.permute.xlu0 6
        %1526 = vperm.xlu0 %1525, %v429
        %v1527 = vpop.permute.xlu0 %1526
        %1529 = vset.pattern.permute.xlu0 6
        %1530 = vperm.xlu0 %1529, %v430
        %v1531 = vpop.permute.xlu0 %1530
        %1533 = vset.pattern.permute.xlu0 6
        %1534 = vperm.xlu0 %1533, %v431
        %v1535 = vpop.permute.xlu0 %1534
        %1537 = vset.pattern.permute.xlu0 6
        %1538 = vperm.xlu0 %1537, %v432
        %v1539 = vpop.permute.xlu0 %1538
        %1541 = vset.pattern.permute.xlu0 6
        %1542 = vperm.xlu0 %1541, %v433
        %v1543 = vpop.permute.xlu0 %1542
        %1545 = vset.pattern.permute.xlu0 6
        %1546 = vperm.xlu0 %1545, %v434
        %v1547 = vpop.permute.xlu0 %1546
        %1549 = vset.pattern.permute.xlu0 6
        %1550 = vperm.xlu0 %1549, %v435
        %v1551 = vpop.permute.xlu0 %1550
        %1553 = vset.pattern.permute.xlu0 6
        %1554 = vperm.xlu0 %1553, %v436
        %v1555 = vpop.permute.xlu0 %1554
        %v1557 = vmul.f32 %v1527, %v624
        %v1558 = vmul.f32 %v1527, %v625
        %v1559 = vmul.f32 %v1527, %v626
        %v1560 = vmul.f32 %v1531, %v627
        %v1561 = vmul.f32 %v1531, %v628
        %v1562 = vmul.f32 %v1531, %v629
        %v1563 = vmul.f32 %v1535, %v630
        %v1564 = vmul.f32 %v1535, %v631
        %v1565 = vmul.f32 %v1535, %v632
        %v1566 = vmul.f32 %v1539, %v633
        %v1567 = vmul.f32 %v1539, %v634
        %v1568 = vmul.f32 %v1539, %v635
        %v1569 = vmul.f32 %v1543, %v636
        %v1570 = vmul.f32 %v1543, %v637
        %v1571 = vmul.f32 %v1543, %v638
        %v1572 = vmul.f32 %v1547, %v639
        %v1573 = vmul.f32 %v1547, %v640
        %v1574 = vmul.f32 %v1547, %v641
        %v1575 = vmul.f32 %v1551, %v642
        %v1576 = vmul.f32 %v1551, %v643
        %v1577 = vmul.f32 %v1551, %v644
        %v1578 = vmul.f32 %v1555, %v645
        %v1579 = vmul.f32 %v1555, %v646
        %v1580 = vmul.f32 %v1555, %v647
        %1605 = vrot.lane.b32.xlu0 %v1557, 122
        %v1606 = vpop.permute.xlu0 %1605
        %1607 = vrot.lane.b32.xlu0 %v1558, 122
        %v1608 = vpop.permute.xlu0 %1607
        %1609 = vrot.lane.b32.xlu0 %v1559, 122
        %v1610 = vpop.permute.xlu0 %1609
        %1611 = vrot.lane.b32.xlu0 %v1560, 122
        %v1612 = vpop.permute.xlu0 %1611
        %1613 = vrot.lane.b32.xlu0 %v1561, 122
        %v1614 = vpop.permute.xlu0 %1613
        %1615 = vrot.lane.b32.xlu0 %v1562, 122
        %v1616 = vpop.permute.xlu0 %1615
        %1617 = vrot.lane.b32.xlu0 %v1563, 122
        %v1618 = vpop.permute.xlu0 %1617
        %1619 = vrot.lane.b32.xlu0 %v1564, 122
        %v1620 = vpop.permute.xlu0 %1619
        %1621 = vrot.lane.b32.xlu0 %v1565, 122
        %v1622 = vpop.permute.xlu0 %1621
        %1623 = vrot.lane.b32.xlu0 %v1566, 122
        %v1624 = vpop.permute.xlu0 %1623
        %1625 = vrot.lane.b32.xlu0 %v1567, 122
        %v1626 = vpop.permute.xlu0 %1625
        %1627 = vrot.lane.b32.xlu0 %v1568, 122
        %v1628 = vpop.permute.xlu0 %1627
        %1629 = vrot.lane.b32.xlu0 %v1569, 122
        %v1630 = vpop.permute.xlu0 %1629
        %1631 = vrot.lane.b32.xlu0 %v1570, 122
        %v1632 = vpop.permute.xlu0 %1631
        %1633 = vrot.lane.b32.xlu0 %v1571, 122
        %v1634 = vpop.permute.xlu0 %1633
        %1635 = vrot.lane.b32.xlu0 %v1572, 122
        %v1636 = vpop.permute.xlu0 %1635
        %1637 = vrot.lane.b32.xlu0 %v1573, 122
        %v1638 = vpop.permute.xlu0 %1637
        %1639 = vrot.lane.b32.xlu0 %v1574, 122
        %v1640 = vpop.permute.xlu0 %1639
        %1641 = vrot.lane.b32.xlu0 %v1575, 122
        %v1642 = vpop.permute.xlu0 %1641
        %1643 = vrot.lane.b32.xlu0 %v1576, 122
        %v1644 = vpop.permute.xlu0 %1643
        %1645 = vrot.lane.b32.xlu0 %v1577, 122
        %v1646 = vpop.permute.xlu0 %1645
        %1647 = vrot.lane.b32.xlu0 %v1578, 122
        %v1648 = vpop.permute.xlu0 %1647
        %1649 = vrot.lane.b32.xlu0 %v1579, 122
        %v1650 = vpop.permute.xlu0 %1649
        %1651 = vrot.lane.b32.xlu0 %v1580, 122
        %v1652 = vpop.permute.xlu0 %1651
        %vm1653 = vcmask 998400
        %v1654 = vsel %vm1653, %v1606, %v1608
        %v1655 = vsel %vm1653, %v1608, %v1610
        %v1656 = vsel %vm1653, %v1612, %v1614
        %v1657 = vsel %vm1653, %v1614, %v1616
        %v1658 = vsel %vm1653, %v1618, %v1620
        %v1659 = vsel %vm1653, %v1620, %v1622
        %v1660 = vsel %vm1653, %v1624, %v1626
        %v1661 = vsel %vm1653, %v1626, %v1628
        %v1662 = vsel %vm1653, %v1630, %v1632
        %v1663 = vsel %vm1653, %v1632, %v1634
        %v1664 = vsel %vm1653, %v1636, %v1638
        %v1665 = vsel %vm1653, %v1638, %v1640
        %v1666 = vsel %vm1653, %v1642, %v1644
        %v1667 = vsel %vm1653, %v1644, %v1646
        %v1668 = vsel %vm1653, %v1648, %v1650
        %v1669 = vsel %vm1653, %v1650, %v1652
        %v1686 = vadd.f32 %v1509, %v1654
        %v1687 = vadd.f32 %v1510, %v1655
        %v1688 = vadd.f32 %v1511, %v1656
        %v1689 = vadd.f32 %v1512, %v1657
        %v1690 = vadd.f32 %v1513, %v1658
        %v1691 = vadd.f32 %v1514, %v1659
        %v1692 = vadd.f32 %v1515, %v1660
        %v1693 = vadd.f32 %v1516, %v1661
        %v1694 = vadd.f32 %v1517, %v1662
        %v1695 = vadd.f32 %v1518, %v1663
        %v1696 = vadd.f32 %v1519, %v1664
        %v1697 = vadd.f32 %v1520, %v1665
        %v1698 = vadd.f32 %v1521, %v1666
        %v1699 = vadd.f32 %v1522, %v1667
        %v1700 = vadd.f32 %v1523, %v1668
        %v1701 = vadd.f32 %v1524, %v1669
        %1702 = vset.pattern.permute.xlu0 7
        %1703 = vperm.xlu0 %1702, %v429
        %v1704 = vpop.permute.xlu0 %1703
        %1706 = vset.pattern.permute.xlu0 7
        %1707 = vperm.xlu0 %1706, %v430
        %v1708 = vpop.permute.xlu0 %1707
        %1710 = vset.pattern.permute.xlu0 7
        %1711 = vperm.xlu0 %1710, %v431
        %v1712 = vpop.permute.xlu0 %1711
        %1714 = vset.pattern.permute.xlu0 7
        %1715 = vperm.xlu0 %1714, %v432
        %v1716 = vpop.permute.xlu0 %1715
        %1718 = vset.pattern.permute.xlu0 7
        %1719 = vperm.xlu0 %1718, %v433
        %v1720 = vpop.permute.xlu0 %1719
        %1722 = vset.pattern.permute.xlu0 7
        %1723 = vperm.xlu0 %1722, %v434
        %v1724 = vpop.permute.xlu0 %1723
        %1726 = vset.pattern.permute.xlu0 7
        %1727 = vperm.xlu0 %1726, %v435
        %v1728 = vpop.permute.xlu0 %1727
        %1730 = vset.pattern.permute.xlu0 7
        %1731 = vperm.xlu0 %1730, %v436
        %v1732 = vpop.permute.xlu0 %1731
        %v1734 = vmul.f32 %v1704, %v624
        %v1735 = vmul.f32 %v1704, %v625
        %v1736 = vmul.f32 %v1704, %v626
        %v1737 = vmul.f32 %v1708, %v627
        %v1738 = vmul.f32 %v1708, %v628
        %v1739 = vmul.f32 %v1708, %v629
        %v1740 = vmul.f32 %v1712, %v630
        %v1741 = vmul.f32 %v1712, %v631
        %v1742 = vmul.f32 %v1712, %v632
        %v1743 = vmul.f32 %v1716, %v633
        %v1744 = vmul.f32 %v1716, %v634
        %v1745 = vmul.f32 %v1716, %v635
        %v1746 = vmul.f32 %v1720, %v636
        %v1747 = vmul.f32 %v1720, %v637
        %v1748 = vmul.f32 %v1720, %v638
        %v1749 = vmul.f32 %v1724, %v639
        %v1750 = vmul.f32 %v1724, %v640
        %v1751 = vmul.f32 %v1724, %v641
        %v1752 = vmul.f32 %v1728, %v642
        %v1753 = vmul.f32 %v1728, %v643
        %v1754 = vmul.f32 %v1728, %v644
        %v1755 = vmul.f32 %v1732, %v645
        %v1756 = vmul.f32 %v1732, %v646
        %v1757 = vmul.f32 %v1732, %v647
        %1782 = vrot.lane.b32.xlu0 %v1734, 121
        %v1783 = vpop.permute.xlu0 %1782
        %1784 = vrot.lane.b32.xlu0 %v1735, 121
        %v1785 = vpop.permute.xlu0 %1784
        %1786 = vrot.lane.b32.xlu0 %v1736, 121
        %v1787 = vpop.permute.xlu0 %1786
        %1788 = vrot.lane.b32.xlu0 %v1737, 121
        %v1789 = vpop.permute.xlu0 %1788
        %1790 = vrot.lane.b32.xlu0 %v1738, 121
        %v1791 = vpop.permute.xlu0 %1790
        %1792 = vrot.lane.b32.xlu0 %v1739, 121
        %v1793 = vpop.permute.xlu0 %1792
        %1794 = vrot.lane.b32.xlu0 %v1740, 121
        %v1795 = vpop.permute.xlu0 %1794
        %1796 = vrot.lane.b32.xlu0 %v1741, 121
        %v1797 = vpop.permute.xlu0 %1796
        %1798 = vrot.lane.b32.xlu0 %v1742, 121
        %v1799 = vpop.permute.xlu0 %1798
        %1800 = vrot.lane.b32.xlu0 %v1743, 121
        %v1801 = vpop.permute.xlu0 %1800
        %1802 = vrot.lane.b32.xlu0 %v1744, 121
        %v1803 = vpop.permute.xlu0 %1802
        %1804 = vrot.lane.b32.xlu0 %v1745, 121
        %v1805 = vpop.permute.xlu0 %1804
        %1806 = vrot.lane.b32.xlu0 %v1746, 121
        %v1807 = vpop.permute.xlu0 %1806
        %1808 = vrot.lane.b32.xlu0 %v1747, 121
        %v1809 = vpop.permute.xlu0 %1808
        %1810 = vrot.lane.b32.xlu0 %v1748, 121
        %v1811 = vpop.permute.xlu0 %1810
        %1812 = vrot.lane.b32.xlu0 %v1749, 121
        %v1813 = vpop.permute.xlu0 %1812
        %1814 = vrot.lane.b32.xlu0 %v1750, 121
        %v1815 = vpop.permute.xlu0 %1814
        %1816 = vrot.lane.b32.xlu0 %v1751, 121
        %v1817 = vpop.permute.xlu0 %1816
        %1818 = vrot.lane.b32.xlu0 %v1752, 121
        %v1819 = vpop.permute.xlu0 %1818
        %1820 = vrot.lane.b32.xlu0 %v1753, 121
        %v1821 = vpop.permute.xlu0 %1820
        %1822 = vrot.lane.b32.xlu0 %v1754, 121
        %v1823 = vpop.permute.xlu0 %1822
        %1824 = vrot.lane.b32.xlu0 %v1755, 121
        %v1825 = vpop.permute.xlu0 %1824
        %1826 = vrot.lane.b32.xlu0 %v1756, 121
        %v1827 = vpop.permute.xlu0 %1826
        %1828 = vrot.lane.b32.xlu0 %v1757, 121
        %v1829 = vpop.permute.xlu0 %1828
        %vm1830 = vcmask 990208
        %v1831 = vsel %vm1830, %v1783, %v1785
        %v1832 = vsel %vm1830, %v1785, %v1787
        %v1833 = vsel %vm1830, %v1789, %v1791
        %v1834 = vsel %vm1830, %v1791, %v1793
        %v1835 = vsel %vm1830, %v1795, %v1797
        %v1836 = vsel %vm1830, %v1797, %v1799
        %v1837 = vsel %vm1830, %v1801, %v1803
        %v1838 = vsel %vm1830, %v1803, %v1805
        %v1839 = vsel %vm1830, %v1807, %v1809
        %v1840 = vsel %vm1830, %v1809, %v1811
        %v1841 = vsel %vm1830, %v1813, %v1815
        %v1842 = vsel %vm1830, %v1815, %v1817
        %v1843 = vsel %vm1830, %v1819, %v1821
        %v1844 = vsel %vm1830, %v1821, %v1823
        %v1845 = vsel %vm1830, %v1825, %v1827
        %v1846 = vsel %vm1830, %v1827, %v1829
        %v1863 = vadd.f32 %v1686, %v1831
        %v1864 = vadd.f32 %v1687, %v1832
        %v1865 = vadd.f32 %v1688, %v1833
        %v1866 = vadd.f32 %v1689, %v1834
        %v1867 = vadd.f32 %v1690, %v1835
        %v1868 = vadd.f32 %v1691, %v1836
        %v1869 = vadd.f32 %v1692, %v1837
        %v1870 = vadd.f32 %v1693, %v1838
        %v1871 = vadd.f32 %v1694, %v1839
        %v1872 = vadd.f32 %v1695, %v1840
        %v1873 = vadd.f32 %v1696, %v1841
        %v1874 = vadd.f32 %v1697, %v1842
        %v1875 = vadd.f32 %v1698, %v1843
        %v1876 = vadd.f32 %v1699, %v1844
        %v1877 = vadd.f32 %v1700, %v1845
        %v1878 = vadd.f32 %v1701, %v1846
        %1879 = vset.pattern.permute.xlu0 8
        %1880 = vperm.xlu0 %1879, %v429
        %v1881 = vpop.permute.xlu0 %1880
        %1883 = vset.pattern.permute.xlu0 8
        %1884 = vperm.xlu0 %1883, %v430
        %v1885 = vpop.permute.xlu0 %1884
        %1887 = vset.pattern.permute.xlu0 8
        %1888 = vperm.xlu0 %1887, %v431
        %v1889 = vpop.permute.xlu0 %1888
        %1891 = vset.pattern.permute.xlu0 8
        %1892 = vperm.xlu0 %1891, %v432
        %v1893 = vpop.permute.xlu0 %1892
        %1895 = vset.pattern.permute.xlu0 8
        %1896 = vperm.xlu0 %1895, %v433
        %v1897 = vpop.permute.xlu0 %1896
        %1899 = vset.pattern.permute.xlu0 8
        %1900 = vperm.xlu0 %1899, %v434
        %v1901 = vpop.permute.xlu0 %1900
        %1903 = vset.pattern.permute.xlu0 8
        %1904 = vperm.xlu0 %1903, %v435
        %v1905 = vpop.permute.xlu0 %1904
        %1907 = vset.pattern.permute.xlu0 8
        %1908 = vperm.xlu0 %1907, %v436
        %v1909 = vpop.permute.xlu0 %1908
        %v1911 = vmul.f32 %v1881, %v624
        %v1912 = vmul.f32 %v1881, %v625
        %v1913 = vmul.f32 %v1881, %v626
        %v1914 = vmul.f32 %v1885, %v627
        %v1915 = vmul.f32 %v1885, %v628
        %v1916 = vmul.f32 %v1885, %v629
        %v1917 = vmul.f32 %v1889, %v630
        %v1918 = vmul.f32 %v1889, %v631
        %v1919 = vmul.f32 %v1889, %v632
        %v1920 = vmul.f32 %v1893, %v633
        %v1921 = vmul.f32 %v1893, %v634
        %v1922 = vmul.f32 %v1893, %v635
        %v1923 = vmul.f32 %v1897, %v636
        %v1924 = vmul.f32 %v1897, %v637
        %v1925 = vmul.f32 %v1897, %v638
        %v1926 = vmul.f32 %v1901, %v639
        %v1927 = vmul.f32 %v1901, %v640
        %v1928 = vmul.f32 %v1901, %v641
        %v1929 = vmul.f32 %v1905, %v642
        %v1930 = vmul.f32 %v1905, %v643
        %v1931 = vmul.f32 %v1905, %v644
        %v1932 = vmul.f32 %v1909, %v645
        %v1933 = vmul.f32 %v1909, %v646
        %v1934 = vmul.f32 %v1909, %v647
        %1959 = vrot.lane.b32.xlu0 %v1911, 120
        %v1960 = vpop.permute.xlu0 %1959
        %1961 = vrot.lane.b32.xlu0 %v1912, 120
        %v1962 = vpop.permute.xlu0 %1961
        %1963 = vrot.lane.b32.xlu0 %v1913, 120
        %v1964 = vpop.permute.xlu0 %1963
        %1965 = vrot.lane.b32.xlu0 %v1914, 120
        %v1966 = vpop.permute.xlu0 %1965
        %1967 = vrot.lane.b32.xlu0 %v1915, 120
        %v1968 = vpop.permute.xlu0 %1967
        %1969 = vrot.lane.b32.xlu0 %v1916, 120
        %v1970 = vpop.permute.xlu0 %1969
        %1971 = vrot.lane.b32.xlu0 %v1917, 120
        %v1972 = vpop.permute.xlu0 %1971
        %1973 = vrot.lane.b32.xlu0 %v1918, 120
        %v1974 = vpop.permute.xlu0 %1973
        %1975 = vrot.lane.b32.xlu0 %v1919, 120
        %v1976 = vpop.permute.xlu0 %1975
        %1977 = vrot.lane.b32.xlu0 %v1920, 120
        %v1978 = vpop.permute.xlu0 %1977
        %1979 = vrot.lane.b32.xlu0 %v1921, 120
        %v1980 = vpop.permute.xlu0 %1979
        %1981 = vrot.lane.b32.xlu0 %v1922, 120
        %v1982 = vpop.permute.xlu0 %1981
        %1983 = vrot.lane.b32.xlu0 %v1923, 120
        %v1984 = vpop.permute.xlu0 %1983
        %1985 = vrot.lane.b32.xlu0 %v1924, 120
        %v1986 = vpop.permute.xlu0 %1985
        %1987 = vrot.lane.b32.xlu0 %v1925, 120
        %v1988 = vpop.permute.xlu0 %1987
        %1989 = vrot.lane.b32.xlu0 %v1926, 120
        %v1990 = vpop.permute.xlu0 %1989
        %1991 = vrot.lane.b32.xlu0 %v1927, 120
        %v1992 = vpop.permute.xlu0 %1991
        %1993 = vrot.lane.b32.xlu0 %v1928, 120
        %v1994 = vpop.permute.xlu0 %1993
        %1995 = vrot.lane.b32.xlu0 %v1929, 120
        %v1996 = vpop.permute.xlu0 %1995
        %1997 = vrot.lane.b32.xlu0 %v1930, 120
        %v1998 = vpop.permute.xlu0 %1997
        %1999 = vrot.lane.b32.xlu0 %v1931, 120
        %v2000 = vpop.permute.xlu0 %1999
        %2001 = vrot.lane.b32.xlu0 %v1932, 120
        %v2002 = vpop.permute.xlu0 %2001
        %2003 = vrot.lane.b32.xlu0 %v1933, 120
        %v2004 = vpop.permute.xlu0 %2003
        %2005 = vrot.lane.b32.xlu0 %v1934, 120
        %v2006 = vpop.permute.xlu0 %2005
        %vm2007 = vcmask 982016
        %v2008 = vsel %vm2007, %v1960, %v1962
        %v2009 = vsel %vm2007, %v1962, %v1964
        %v2010 = vsel %vm2007, %v1966, %v1968
        %v2011 = vsel %vm2007, %v1968, %v1970
        %v2012 = vsel %vm2007, %v1972, %v1974
        %v2013 = vsel %vm2007, %v1974, %v1976
        %v2014 = vsel %vm2007, %v1978, %v1980
        %v2015 = vsel %vm2007, %v1980, %v1982
        %v2016 = vsel %vm2007, %v1984, %v1986
        %v2017 = vsel %vm2007, %v1986, %v1988
        %v2018 = vsel %vm2007, %v1990, %v1992
        %v2019 = vsel %vm2007, %v1992, %v1994
        %v2020 = vsel %vm2007, %v1996, %v1998
        %v2021 = vsel %vm2007, %v1998, %v2000
        %v2022 = vsel %vm2007, %v2002, %v2004
        %v2023 = vsel %vm2007, %v2004, %v2006
        %v2040 = vadd.f32 %v1863, %v2008
        %v2041 = vadd.f32 %v1864, %v2009
        %v2042 = vadd.f32 %v1865, %v2010
        %v2043 = vadd.f32 %v1866, %v2011
        %v2044 = vadd.f32 %v1867, %v2012
        %v2045 = vadd.f32 %v1868, %v2013
        %v2046 = vadd.f32 %v1869, %v2014
        %v2047 = vadd.f32 %v1870, %v2015
        %v2048 = vadd.f32 %v1871, %v2016
        %v2049 = vadd.f32 %v1872, %v2017
        %v2050 = vadd.f32 %v1873, %v2018
        %v2051 = vadd.f32 %v1874, %v2019
        %v2052 = vadd.f32 %v1875, %v2020
        %v2053 = vadd.f32 %v1876, %v2021
        %v2054 = vadd.f32 %v1877, %v2022
        %v2055 = vadd.f32 %v1878, %v2023
        %2056 = vset.pattern.permute.xlu0 9
        %2057 = vperm.xlu0 %2056, %v429
        %v2058 = vpop.permute.xlu0 %2057
        %2060 = vset.pattern.permute.xlu0 9
        %2061 = vperm.xlu0 %2060, %v430
        %v2062 = vpop.permute.xlu0 %2061
        %2064 = vset.pattern.permute.xlu0 9
        %2065 = vperm.xlu0 %2064, %v431
        %v2066 = vpop.permute.xlu0 %2065
        %2068 = vset.pattern.permute.xlu0 9
        %2069 = vperm.xlu0 %2068, %v432
        %v2070 = vpop.permute.xlu0 %2069
        %2072 = vset.pattern.permute.xlu0 9
        %2073 = vperm.xlu0 %2072, %v433
        %v2074 = vpop.permute.xlu0 %2073
        %2076 = vset.pattern.permute.xlu0 9
        %2077 = vperm.xlu0 %2076, %v434
        %v2078 = vpop.permute.xlu0 %2077
        %2080 = vset.pattern.permute.xlu0 9
        %2081 = vperm.xlu0 %2080, %v435
        %v2082 = vpop.permute.xlu0 %2081
        %2084 = vset.pattern.permute.xlu0 9
        %2085 = vperm.xlu0 %2084, %v436
        %v2086 = vpop.permute.xlu0 %2085
        %v2088 = vmul.f32 %v2058, %v624
        %v2089 = vmul.f32 %v2058, %v625
        %v2090 = vmul.f32 %v2058, %v626
        %v2091 = vmul.f32 %v2062, %v627
        %v2092 = vmul.f32 %v2062, %v628
        %v2093 = vmul.f32 %v2062, %v629
        %v2094 = vmul.f32 %v2066, %v630
        %v2095 = vmul.f32 %v2066, %v631
        %v2096 = vmul.f32 %v2066, %v632
        %v2097 = vmul.f32 %v2070, %v633
        %v2098 = vmul.f32 %v2070, %v634
        %v2099 = vmul.f32 %v2070, %v635
        %v2100 = vmul.f32 %v2074, %v636
        %v2101 = vmul.f32 %v2074, %v637
        %v2102 = vmul.f32 %v2074, %v638
        %v2103 = vmul.f32 %v2078, %v639
        %v2104 = vmul.f32 %v2078, %v640
        %v2105 = vmul.f32 %v2078, %v641
        %v2106 = vmul.f32 %v2082, %v642
        %v2107 = vmul.f32 %v2082, %v643
        %v2108 = vmul.f32 %v2082, %v644
        %v2109 = vmul.f32 %v2086, %v645
        %v2110 = vmul.f32 %v2086, %v646
        %v2111 = vmul.f32 %v2086, %v647
        %2136 = vrot.lane.b32.xlu0 %v2088, 119
        %v2137 = vpop.permute.xlu0 %2136
        %2138 = vrot.lane.b32.xlu0 %v2089, 119
        %v2139 = vpop.permute.xlu0 %2138
        %2140 = vrot.lane.b32.xlu0 %v2090, 119
        %v2141 = vpop.permute.xlu0 %2140
        %2142 = vrot.lane.b32.xlu0 %v2091, 119
        %v2143 = vpop.permute.xlu0 %2142
        %2144 = vrot.lane.b32.xlu0 %v2092, 119
        %v2145 = vpop.permute.xlu0 %2144
        %2146 = vrot.lane.b32.xlu0 %v2093, 119
        %v2147 = vpop.permute.xlu0 %2146
        %2148 = vrot.lane.b32.xlu0 %v2094, 119
        %v2149 = vpop.permute.xlu0 %2148
        %2150 = vrot.lane.b32.xlu0 %v2095, 119
        %v2151 = vpop.permute.xlu0 %2150
        %2152 = vrot.lane.b32.xlu0 %v2096, 119
        %v2153 = vpop.permute.xlu0 %2152
        %2154 = vrot.lane.b32.xlu0 %v2097, 119
        %v2155 = vpop.permute.xlu0 %2154
        %2156 = vrot.lane.b32.xlu0 %v2098, 119
        %v2157 = vpop.permute.xlu0 %2156
        %2158 = vrot.lane.b32.xlu0 %v2099, 119
        %v2159 = vpop.permute.xlu0 %2158
        %2160 = vrot.lane.b32.xlu0 %v2100, 119
        %v2161 = vpop.permute.xlu0 %2160
        %2162 = vrot.lane.b32.xlu0 %v2101, 119
        %v2163 = vpop.permute.xlu0 %2162
        %2164 = vrot.lane.b32.xlu0 %v2102, 119
        %v2165 = vpop.permute.xlu0 %2164
        %2166 = vrot.lane.b32.xlu0 %v2103, 119
        %v2167 = vpop.permute.xlu0 %2166
        %2168 = vrot.lane.b32.xlu0 %v2104, 119
        %v2169 = vpop.permute.xlu0 %2168
        %2170 = vrot.lane.b32.xlu0 %v2105, 119
        %v2171 = vpop.permute.xlu0 %2170
        %2172 = vrot.lane.b32.xlu0 %v2106, 119
        %v2173 = vpop.permute.xlu0 %2172
        %2174 = vrot.lane.b32.xlu0 %v2107, 119
        %v2175 = vpop.permute.xlu0 %2174
        %2176 = vrot.lane.b32.xlu0 %v2108, 119
        %v2177 = vpop.permute.xlu0 %2176
        %2178 = vrot.lane.b32.xlu0 %v2109, 119
        %v2179 = vpop.permute.xlu0 %2178
        %2180 = vrot.lane.b32.xlu0 %v2110, 119
        %v2181 = vpop.permute.xlu0 %2180
        %2182 = vrot.lane.b32.xlu0 %v2111, 119
        %v2183 = vpop.permute.xlu0 %2182
        %vm2184 = vcmask 973824
        %v2185 = vsel %vm2184, %v2137, %v2139
        %v2186 = vsel %vm2184, %v2139, %v2141
        %v2187 = vsel %vm2184, %v2143, %v2145
        %v2188 = vsel %vm2184, %v2145, %v2147
        %v2189 = vsel %vm2184, %v2149, %v2151
        %v2190 = vsel %vm2184, %v2151, %v2153
        %v2191 = vsel %vm2184, %v2155, %v2157
        %v2192 = vsel %vm2184, %v2157, %v2159
        %v2193 = vsel %vm2184, %v2161, %v2163
        %v2194 = vsel %vm2184, %v2163, %v2165
        %v2195 = vsel %vm2184, %v2167, %v2169
        %v2196 = vsel %vm2184, %v2169, %v2171
        %v2197 = vsel %vm2184, %v2173, %v2175
        %v2198 = vsel %vm2184, %v2175, %v2177
        %v2199 = vsel %vm2184, %v2179, %v2181
        %v2200 = vsel %vm2184, %v2181, %v2183
        %v2217 = vadd.f32 %v2040, %v2185
        %v2218 = vadd.f32 %v2041, %v2186
        %v2219 = vadd.f32 %v2042, %v2187
        %v2220 = vadd.f32 %v2043, %v2188
        %v2221 = vadd.f32 %v2044, %v2189
        %v2222 = vadd.f32 %v2045, %v2190
        %v2223 = vadd.f32 %v2046, %v2191
        %v2224 = vadd.f32 %v2047, %v2192
        %v2225 = vadd.f32 %v2048, %v2193
        %v2226 = vadd.f32 %v2049, %v2194
        %v2227 = vadd.f32 %v2050, %v2195
        %v2228 = vadd.f32 %v2051, %v2196
        %v2229 = vadd.f32 %v2052, %v2197
        %v2230 = vadd.f32 %v2053, %v2198
        %v2231 = vadd.f32 %v2054, %v2199
        %v2232 = vadd.f32 %v2055, %v2200
        %2233 = vset.pattern.permute.xlu0 10
        %2234 = vperm.xlu0 %2233, %v429
        %v2235 = vpop.permute.xlu0 %2234
        %2237 = vset.pattern.permute.xlu0 10
        %2238 = vperm.xlu0 %2237, %v430
        %v2239 = vpop.permute.xlu0 %2238
        %2241 = vset.pattern.permute.xlu0 10
        %2242 = vperm.xlu0 %2241, %v431
        %v2243 = vpop.permute.xlu0 %2242
        %2245 = vset.pattern.permute.xlu0 10
        %2246 = vperm.xlu0 %2245, %v432
        %v2247 = vpop.permute.xlu0 %2246
        %2249 = vset.pattern.permute.xlu0 10
        %2250 = vperm.xlu0 %2249, %v433
        %v2251 = vpop.permute.xlu0 %2250
        %2253 = vset.pattern.permute.xlu0 10
        %2254 = vperm.xlu0 %2253, %v434
        %v2255 = vpop.permute.xlu0 %2254
        %2257 = vset.pattern.permute.xlu0 10
        %2258 = vperm.xlu0 %2257, %v435
        %v2259 = vpop.permute.xlu0 %2258
        %2261 = vset.pattern.permute.xlu0 10
        %2262 = vperm.xlu0 %2261, %v436
        %v2263 = vpop.permute.xlu0 %2262
        %v2265 = vmul.f32 %v2235, %v624
        %v2266 = vmul.f32 %v2235, %v625
        %v2267 = vmul.f32 %v2235, %v626
        %v2268 = vmul.f32 %v2239, %v627
        %v2269 = vmul.f32 %v2239, %v628
        %v2270 = vmul.f32 %v2239, %v629
        %v2271 = vmul.f32 %v2243, %v630
        %v2272 = vmul.f32 %v2243, %v631
        %v2273 = vmul.f32 %v2243, %v632
        %v2274 = vmul.f32 %v2247, %v633
        %v2275 = vmul.f32 %v2247, %v634
        %v2276 = vmul.f32 %v2247, %v635
        %v2277 = vmul.f32 %v2251, %v636
        %v2278 = vmul.f32 %v2251, %v637
        %v2279 = vmul.f32 %v2251, %v638
        %v2280 = vmul.f32 %v2255, %v639
        %v2281 = vmul.f32 %v2255, %v640
        %v2282 = vmul.f32 %v2255, %v641
        %v2283 = vmul.f32 %v2259, %v642
        %v2284 = vmul.f32 %v2259, %v643
        %v2285 = vmul.f32 %v2259, %v644
        %v2286 = vmul.f32 %v2263, %v645
        %v2287 = vmul.f32 %v2263, %v646
        %v2288 = vmul.f32 %v2263, %v647
        %2313 = vrot.lane.b32.xlu0 %v2265, 118
        %v2314 = vpop.permute.xlu0 %2313
        %2315 = vrot.lane.b32.xlu0 %v2266, 118
        %v2316 = vpop.permute.xlu0 %2315
        %2317 = vrot.lane.b32.xlu0 %v2267, 118
        %v2318 = vpop.permute.xlu0 %2317
        %2319 = vrot.lane.b32.xlu0 %v2268, 118
        %v2320 = vpop.permute.xlu0 %2319
        %2321 = vrot.lane.b32.xlu0 %v2269, 118
        %v2322 = vpop.permute.xlu0 %2321
        %2323 = vrot.lane.b32.xlu0 %v2270, 118
        %v2324 = vpop.permute.xlu0 %2323
        %2325 = vrot.lane.b32.xlu0 %v2271, 118
        %v2326 = vpop.permute.xlu0 %2325
        %2327 = vrot.lane.b32.xlu0 %v2272, 118
        %v2328 = vpop.permute.xlu0 %2327
        %2329 = vrot.lane.b32.xlu0 %v2273, 118
        %v2330 = vpop.permute.xlu0 %2329
        %2331 = vrot.lane.b32.xlu0 %v2274, 118
        %v2332 = vpop.permute.xlu0 %2331
        %2333 = vrot.lane.b32.xlu0 %v2275, 118
        %v2334 = vpop.permute.xlu0 %2333
        %2335 = vrot.lane.b32.xlu0 %v2276, 118
        %v2336 = vpop.permute.xlu0 %2335
        %2337 = vrot.lane.b32.xlu0 %v2277, 118
        %v2338 = vpop.permute.xlu0 %2337
        %2339 = vrot.lane.b32.xlu0 %v2278, 118
        %v2340 = vpop.permute.xlu0 %2339
        %2341 = vrot.lane.b32.xlu0 %v2279, 118
        %v2342 = vpop.permute.xlu0 %2341
        %2343 = vrot.lane.b32.xlu0 %v2280, 118
        %v2344 = vpop.permute.xlu0 %2343
        %2345 = vrot.lane.b32.xlu0 %v2281, 118
        %v2346 = vpop.permute.xlu0 %2345
        %2347 = vrot.lane.b32.xlu0 %v2282, 118
        %v2348 = vpop.permute.xlu0 %2347
        %2349 = vrot.lane.b32.xlu0 %v2283, 118
        %v2350 = vpop.permute.xlu0 %2349
        %2351 = vrot.lane.b32.xlu0 %v2284, 118
        %v2352 = vpop.permute.xlu0 %2351
        %2353 = vrot.lane.b32.xlu0 %v2285, 118
        %v2354 = vpop.permute.xlu0 %2353
        %2355 = vrot.lane.b32.xlu0 %v2286, 118
        %v2356 = vpop.permute.xlu0 %2355
        %2357 = vrot.lane.b32.xlu0 %v2287, 118
        %v2358 = vpop.permute.xlu0 %2357
        %2359 = vrot.lane.b32.xlu0 %v2288, 118
        %v2360 = vpop.permute.xlu0 %2359
        %vm2361 = vcmask 965632
        %v2362 = vsel %vm2361, %v2314, %v2316
        %v2363 = vsel %vm2361, %v2316, %v2318
        %v2364 = vsel %vm2361, %v2320, %v2322
        %v2365 = vsel %vm2361, %v2322, %v2324
        %v2366 = vsel %vm2361, %v2326, %v2328
        %v2367 = vsel %vm2361, %v2328, %v2330
        %v2368 = vsel %vm2361, %v2332, %v2334
        %v2369 = vsel %vm2361, %v2334, %v2336
        %v2370 = vsel %vm2361, %v2338, %v2340
        %v2371 = vsel %vm2361, %v2340, %v2342
        %v2372 = vsel %vm2361, %v2344, %v2346
        %v2373 = vsel %vm2361, %v2346, %v2348
        %v2374 = vsel %vm2361, %v2350, %v2352
        %v2375 = vsel %vm2361, %v2352, %v2354
        %v2376 = vsel %vm2361, %v2356, %v2358
        %v2377 = vsel %vm2361, %v2358, %v2360
        %v2394 = vadd.f32 %v2217, %v2362
        %v2395 = vadd.f32 %v2218, %v2363
        %v2396 = vadd.f32 %v2219, %v2364
        %v2397 = vadd.f32 %v2220, %v2365
        %v2398 = vadd.f32 %v2221, %v2366
        %v2399 = vadd.f32 %v2222, %v2367
        %v2400 = vadd.f32 %v2223, %v2368
        %v2401 = vadd.f32 %v2224, %v2369
        %v2402 = vadd.f32 %v2225, %v2370
        %v2403 = vadd.f32 %v2226, %v2371
        %v2404 = vadd.f32 %v2227, %v2372
        %v2405 = vadd.f32 %v2228, %v2373
        %v2406 = vadd.f32 %v2229, %v2374
        %v2407 = vadd.f32 %v2230, %v2375
        %v2408 = vadd.f32 %v2231, %v2376
        %v2409 = vadd.f32 %v2232, %v2377
        %2410 = vset.pattern.permute.xlu0 11
        %2411 = vperm.xlu0 %2410, %v429
        %v2412 = vpop.permute.xlu0 %2411
        %2414 = vset.pattern.permute.xlu0 11
        %2415 = vperm.xlu0 %2414, %v430
        %v2416 = vpop.permute.xlu0 %2415
        %2418 = vset.pattern.permute.xlu0 11
        %2419 = vperm.xlu0 %2418, %v431
        %v2420 = vpop.permute.xlu0 %2419
        %2422 = vset.pattern.permute.xlu0 11
        %2423 = vperm.xlu0 %2422, %v432
        %v2424 = vpop.permute.xlu0 %2423
        %2426 = vset.pattern.permute.xlu0 11
        %2427 = vperm.xlu0 %2426, %v433
        %v2428 = vpop.permute.xlu0 %2427
        %2430 = vset.pattern.permute.xlu0 11
        %2431 = vperm.xlu0 %2430, %v434
        %v2432 = vpop.permute.xlu0 %2431
        %2434 = vset.pattern.permute.xlu0 11
        %2435 = vperm.xlu0 %2434, %v435
        %v2436 = vpop.permute.xlu0 %2435
        %2438 = vset.pattern.permute.xlu0 11
        %2439 = vperm.xlu0 %2438, %v436
        %v2440 = vpop.permute.xlu0 %2439
        %v2442 = vmul.f32 %v2412, %v624
        %v2443 = vmul.f32 %v2412, %v625
        %v2444 = vmul.f32 %v2412, %v626
        %v2445 = vmul.f32 %v2416, %v627
        %v2446 = vmul.f32 %v2416, %v628
        %v2447 = vmul.f32 %v2416, %v629
        %v2448 = vmul.f32 %v2420, %v630
        %v2449 = vmul.f32 %v2420, %v631
        %v2450 = vmul.f32 %v2420, %v632
        %v2451 = vmul.f32 %v2424, %v633
        %v2452 = vmul.f32 %v2424, %v634
        %v2453 = vmul.f32 %v2424, %v635
        %v2454 = vmul.f32 %v2428, %v636
        %v2455 = vmul.f32 %v2428, %v637
        %v2456 = vmul.f32 %v2428, %v638
        %v2457 = vmul.f32 %v2432, %v639
        %v2458 = vmul.f32 %v2432, %v640
        %v2459 = vmul.f32 %v2432, %v641
        %v2460 = vmul.f32 %v2436, %v642
        %v2461 = vmul.f32 %v2436, %v643
        %v2462 = vmul.f32 %v2436, %v644
        %v2463 = vmul.f32 %v2440, %v645
        %v2464 = vmul.f32 %v2440, %v646
        %v2465 = vmul.f32 %v2440, %v647
        %2490 = vrot.lane.b32.xlu0 %v2442, 117
        %v2491 = vpop.permute.xlu0 %2490
        %2492 = vrot.lane.b32.xlu0 %v2443, 117
        %v2493 = vpop.permute.xlu0 %2492
        %2494 = vrot.lane.b32.xlu0 %v2444, 117
        %v2495 = vpop.permute.xlu0 %2494
        %2496 = vrot.lane.b32.xlu0 %v2445, 117
        %v2497 = vpop.permute.xlu0 %2496
        %2498 = vrot.lane.b32.xlu0 %v2446, 117
        %v2499 = vpop.permute.xlu0 %2498
        %2500 = vrot.lane.b32.xlu0 %v2447, 117
        %v2501 = vpop.permute.xlu0 %2500
        %2502 = vrot.lane.b32.xlu0 %v2448, 117
        %v2503 = vpop.permute.xlu0 %2502
        %2504 = vrot.lane.b32.xlu0 %v2449, 117
        %v2505 = vpop.permute.xlu0 %2504
        %2506 = vrot.lane.b32.xlu0 %v2450, 117
        %v2507 = vpop.permute.xlu0 %2506
        %2508 = vrot.lane.b32.xlu0 %v2451, 117
        %v2509 = vpop.permute.xlu0 %2508
        %2510 = vrot.lane.b32.xlu0 %v2452, 117
        %v2511 = vpop.permute.xlu0 %2510
        %2512 = vrot.lane.b32.xlu0 %v2453, 117
        %v2513 = vpop.permute.xlu0 %2512
        %2514 = vrot.lane.b32.xlu0 %v2454, 117
        %v2515 = vpop.permute.xlu0 %2514
        %2516 = vrot.lane.b32.xlu0 %v2455, 117
        %v2517 = vpop.permute.xlu0 %2516
        %2518 = vrot.lane.b32.xlu0 %v2456, 117
        %v2519 = vpop.permute.xlu0 %2518
        %2520 = vrot.lane.b32.xlu0 %v2457, 117
        %v2521 = vpop.permute.xlu0 %2520
        %2522 = vrot.lane.b32.xlu0 %v2458, 117
        %v2523 = vpop.permute.xlu0 %2522
        %2524 = vrot.lane.b32.xlu0 %v2459, 117
        %v2525 = vpop.permute.xlu0 %2524
        %2526 = vrot.lane.b32.xlu0 %v2460, 117
        %v2527 = vpop.permute.xlu0 %2526
        %2528 = vrot.lane.b32.xlu0 %v2461, 117
        %v2529 = vpop.permute.xlu0 %2528
        %2530 = vrot.lane.b32.xlu0 %v2462, 117
        %v2531 = vpop.permute.xlu0 %2530
        %2532 = vrot.lane.b32.xlu0 %v2463, 117
        %v2533 = vpop.permute.xlu0 %2532
        %2534 = vrot.lane.b32.xlu0 %v2464, 117
        %v2535 = vpop.permute.xlu0 %2534
        %2536 = vrot.lane.b32.xlu0 %v2465, 117
        %v2537 = vpop.permute.xlu0 %2536
        %vm2538 = vcmask 957440
        %v2539 = vsel %vm2538, %v2491, %v2493
        %v2540 = vsel %vm2538, %v2493, %v2495
        %v2541 = vsel %vm2538, %v2497, %v2499
        %v2542 = vsel %vm2538, %v2499, %v2501
        %v2543 = vsel %vm2538, %v2503, %v2505
        %v2544 = vsel %vm2538, %v2505, %v2507
        %v2545 = vsel %vm2538, %v2509, %v2511
        %v2546 = vsel %vm2538, %v2511, %v2513
        %v2547 = vsel %vm2538, %v2515, %v2517
        %v2548 = vsel %vm2538, %v2517, %v2519
        %v2549 = vsel %vm2538, %v2521, %v2523
        %v2550 = vsel %vm2538, %v2523, %v2525
        %v2551 = vsel %vm2538, %v2527, %v2529
        %v2552 = vsel %vm2538, %v2529, %v2531
        %v2553 = vsel %vm2538, %v2533, %v2535
        %v2554 = vsel %vm2538, %v2535, %v2537
        %v2571 = vadd.f32 %v2394, %v2539
        %v2572 = vadd.f32 %v2395, %v2540
        %v2573 = vadd.f32 %v2396, %v2541
        %v2574 = vadd.f32 %v2397, %v2542
        %v2575 = vadd.f32 %v2398, %v2543
        %v2576 = vadd.f32 %v2399, %v2544
        %v2577 = vadd.f32 %v2400, %v2545
        %v2578 = vadd.f32 %v2401, %v2546
        %v2579 = vadd.f32 %v2402, %v2547
        %v2580 = vadd.f32 %v2403, %v2548
        %v2581 = vadd.f32 %v2404, %v2549
        %v2582 = vadd.f32 %v2405, %v2550
        %v2583 = vadd.f32 %v2406, %v2551
        %v2584 = vadd.f32 %v2407, %v2552
        %v2585 = vadd.f32 %v2408, %v2553
        %v2586 = vadd.f32 %v2409, %v2554
        %2587 = vset.pattern.permute.xlu0 12
        %2588 = vperm.xlu0 %2587, %v429
        %v2589 = vpop.permute.xlu0 %2588
        %2591 = vset.pattern.permute.xlu0 12
        %2592 = vperm.xlu0 %2591, %v430
        %v2593 = vpop.permute.xlu0 %2592
        %2595 = vset.pattern.permute.xlu0 12
        %2596 = vperm.xlu0 %2595, %v431
        %v2597 = vpop.permute.xlu0 %2596
        %2599 = vset.pattern.permute.xlu0 12
        %2600 = vperm.xlu0 %2599, %v432
        %v2601 = vpop.permute.xlu0 %2600
        %2603 = vset.pattern.permute.xlu0 12
        %2604 = vperm.xlu0 %2603, %v433
        %v2605 = vpop.permute.xlu0 %2604
        %2607 = vset.pattern.permute.xlu0 12
        %2608 = vperm.xlu0 %2607, %v434
        %v2609 = vpop.permute.xlu0 %2608
        %2611 = vset.pattern.permute.xlu0 12
        %2612 = vperm.xlu0 %2611, %v435
        %v2613 = vpop.permute.xlu0 %2612
        %2615 = vset.pattern.permute.xlu0 12
        %2616 = vperm.xlu0 %2615, %v436
        %v2617 = vpop.permute.xlu0 %2616
        %v2619 = vmul.f32 %v2589, %v624
        %v2620 = vmul.f32 %v2589, %v625
        %v2621 = vmul.f32 %v2589, %v626
        %v2622 = vmul.f32 %v2593, %v627
        %v2623 = vmul.f32 %v2593, %v628
        %v2624 = vmul.f32 %v2593, %v629
        %v2625 = vmul.f32 %v2597, %v630
        %v2626 = vmul.f32 %v2597, %v631
        %v2627 = vmul.f32 %v2597, %v632
        %v2628 = vmul.f32 %v2601, %v633
        %v2629 = vmul.f32 %v2601, %v634
        %v2630 = vmul.f32 %v2601, %v635
        %v2631 = vmul.f32 %v2605, %v636
        %v2632 = vmul.f32 %v2605, %v637
        %v2633 = vmul.f32 %v2605, %v638
        %v2634 = vmul.f32 %v2609, %v639
        %v2635 = vmul.f32 %v2609, %v640
        %v2636 = vmul.f32 %v2609, %v641
        %v2637 = vmul.f32 %v2613, %v642
        %v2638 = vmul.f32 %v2613, %v643
        %v2639 = vmul.f32 %v2613, %v644
        %v2640 = vmul.f32 %v2617, %v645
        %v2641 = vmul.f32 %v2617, %v646
        %v2642 = vmul.f32 %v2617, %v647
        %2667 = vrot.lane.b32.xlu0 %v2619, 116
        %v2668 = vpop.permute.xlu0 %2667
        %2669 = vrot.lane.b32.xlu0 %v2620, 116
        %v2670 = vpop.permute.xlu0 %2669
        %2671 = vrot.lane.b32.xlu0 %v2621, 116
        %v2672 = vpop.permute.xlu0 %2671
        %2673 = vrot.lane.b32.xlu0 %v2622, 116
        %v2674 = vpop.permute.xlu0 %2673
        %2675 = vrot.lane.b32.xlu0 %v2623, 116
        %v2676 = vpop.permute.xlu0 %2675
        %2677 = vrot.lane.b32.xlu0 %v2624, 116
        %v2678 = vpop.permute.xlu0 %2677
        %2679 = vrot.lane.b32.xlu0 %v2625, 116
        %v2680 = vpop.permute.xlu0 %2679
        %2681 = vrot.lane.b32.xlu0 %v2626, 116
        %v2682 = vpop.permute.xlu0 %2681
        %2683 = vrot.lane.b32.xlu0 %v2627, 116
        %v2684 = vpop.permute.xlu0 %2683
        %2685 = vrot.lane.b32.xlu0 %v2628, 116
        %v2686 = vpop.permute.xlu0 %2685
        %2687 = vrot.lane.b32.xlu0 %v2629, 116
        %v2688 = vpop.permute.xlu0 %2687
        %2689 = vrot.lane.b32.xlu0 %v2630, 116
        %v2690 = vpop.permute.xlu0 %2689
        %2691 = vrot.lane.b32.xlu0 %v2631, 116
        %v2692 = vpop.permute.xlu0 %2691
        %2693 = vrot.lane.b32.xlu0 %v2632, 116
        %v2694 = vpop.permute.xlu0 %2693
        %2695 = vrot.lane.b32.xlu0 %v2633, 116
        %v2696 = vpop.permute.xlu0 %2695
        %2697 = vrot.lane.b32.xlu0 %v2634, 116
        %v2698 = vpop.permute.xlu0 %2697
        %2699 = vrot.lane.b32.xlu0 %v2635, 116
        %v2700 = vpop.permute.xlu0 %2699
        %2701 = vrot.lane.b32.xlu0 %v2636, 116
        %v2702 = vpop.permute.xlu0 %2701
        %2703 = vrot.lane.b32.xlu0 %v2637, 116
        %v2704 = vpop.permute.xlu0 %2703
        %2705 = vrot.lane.b32.xlu0 %v2638, 116
        %v2706 = vpop.permute.xlu0 %2705
        %2707 = vrot.lane.b32.xlu0 %v2639, 116
        %v2708 = vpop.permute.xlu0 %2707
        %2709 = vrot.lane.b32.xlu0 %v2640, 116
        %v2710 = vpop.permute.xlu0 %2709
        %2711 = vrot.lane.b32.xlu0 %v2641, 116
        %v2712 = vpop.permute.xlu0 %2711
        %2713 = vrot.lane.b32.xlu0 %v2642, 116
        %v2714 = vpop.permute.xlu0 %2713
        %vm2715 = vcmask 949248
        %v2716 = vsel %vm2715, %v2668, %v2670
        %v2717 = vsel %vm2715, %v2670, %v2672
        %v2718 = vsel %vm2715, %v2674, %v2676
        %v2719 = vsel %vm2715, %v2676, %v2678
        %v2720 = vsel %vm2715, %v2680, %v2682
        %v2721 = vsel %vm2715, %v2682, %v2684
        %v2722 = vsel %vm2715, %v2686, %v2688
        %v2723 = vsel %vm2715, %v2688, %v2690
        %v2724 = vsel %vm2715, %v2692, %v2694
        %v2725 = vsel %vm2715, %v2694, %v2696
        %v2726 = vsel %vm2715, %v2698, %v2700
        %v2727 = vsel %vm2715, %v2700, %v2702
        %v2728 = vsel %vm2715, %v2704, %v2706
        %v2729 = vsel %vm2715, %v2706, %v2708
        %v2730 = vsel %vm2715, %v2710, %v2712
        %v2731 = vsel %vm2715, %v2712, %v2714
        %v2748 = vadd.f32 %v2571, %v2716
        %v2749 = vadd.f32 %v2572, %v2717
        %v2750 = vadd.f32 %v2573, %v2718
        %v2751 = vadd.f32 %v2574, %v2719
        %v2752 = vadd.f32 %v2575, %v2720
        %v2753 = vadd.f32 %v2576, %v2721
        %v2754 = vadd.f32 %v2577, %v2722
        %v2755 = vadd.f32 %v2578, %v2723
        %v2756 = vadd.f32 %v2579, %v2724
        %v2757 = vadd.f32 %v2580, %v2725
        %v2758 = vadd.f32 %v2581, %v2726
        %v2759 = vadd.f32 %v2582, %v2727
        %v2760 = vadd.f32 %v2583, %v2728
        %v2761 = vadd.f32 %v2584, %v2729
        %v2762 = vadd.f32 %v2585, %v2730
        %v2763 = vadd.f32 %v2586, %v2731
        %2764 = vset.pattern.permute.xlu0 13
        %2765 = vperm.xlu0 %2764, %v429
        %v2766 = vpop.permute.xlu0 %2765
        %2768 = vset.pattern.permute.xlu0 13
        %2769 = vperm.xlu0 %2768, %v430
        %v2770 = vpop.permute.xlu0 %2769
        %2772 = vset.pattern.permute.xlu0 13
        %2773 = vperm.xlu0 %2772, %v431
        %v2774 = vpop.permute.xlu0 %2773
        %2776 = vset.pattern.permute.xlu0 13
        %2777 = vperm.xlu0 %2776, %v432
        %v2778 = vpop.permute.xlu0 %2777
        %2780 = vset.pattern.permute.xlu0 13
        %2781 = vperm.xlu0 %2780, %v433
        %v2782 = vpop.permute.xlu0 %2781
        %2784 = vset.pattern.permute.xlu0 13
        %2785 = vperm.xlu0 %2784, %v434
        %v2786 = vpop.permute.xlu0 %2785
        %2788 = vset.pattern.permute.xlu0 13
        %2789 = vperm.xlu0 %2788, %v435
        %v2790 = vpop.permute.xlu0 %2789
        %2792 = vset.pattern.permute.xlu0 13
        %2793 = vperm.xlu0 %2792, %v436
        %v2794 = vpop.permute.xlu0 %2793
        %v2796 = vmul.f32 %v2766, %v624
        %v2797 = vmul.f32 %v2766, %v625
        %v2798 = vmul.f32 %v2766, %v626
        %v2799 = vmul.f32 %v2770, %v627
        %v2800 = vmul.f32 %v2770, %v628
        %v2801 = vmul.f32 %v2770, %v629
        %v2802 = vmul.f32 %v2774, %v630
        %v2803 = vmul.f32 %v2774, %v631
        %v2804 = vmul.f32 %v2774, %v632
        %v2805 = vmul.f32 %v2778, %v633
        %v2806 = vmul.f32 %v2778, %v634
        %v2807 = vmul.f32 %v2778, %v635
        %v2808 = vmul.f32 %v2782, %v636
        %v2809 = vmul.f32 %v2782, %v637
        %v2810 = vmul.f32 %v2782, %v638
        %v2811 = vmul.f32 %v2786, %v639
        %v2812 = vmul.f32 %v2786, %v640
        %v2813 = vmul.f32 %v2786, %v641
        %v2814 = vmul.f32 %v2790, %v642
        %v2815 = vmul.f32 %v2790, %v643
        %v2816 = vmul.f32 %v2790, %v644
        %v2817 = vmul.f32 %v2794, %v645
        %v2818 = vmul.f32 %v2794, %v646
        %v2819 = vmul.f32 %v2794, %v647
        %2844 = vrot.lane.b32.xlu0 %v2796, 115
        %v2845 = vpop.permute.xlu0 %2844
        %2846 = vrot.lane.b32.xlu0 %v2797, 115
        %v2847 = vpop.permute.xlu0 %2846
        %2848 = vrot.lane.b32.xlu0 %v2798, 115
        %v2849 = vpop.permute.xlu0 %2848
        %2850 = vrot.lane.b32.xlu0 %v2799, 115
        %v2851 = vpop.permute.xlu0 %2850
        %2852 = vrot.lane.b32.xlu0 %v2800, 115
        %v2853 = vpop.permute.xlu0 %2852
        %2854 = vrot.lane.b32.xlu0 %v2801, 115
        %v2855 = vpop.permute.xlu0 %2854
        %2856 = vrot.lane.b32.xlu0 %v2802, 115
        %v2857 = vpop.permute.xlu0 %2856
        %2858 = vrot.lane.b32.xlu0 %v2803, 115
        %v2859 = vpop.permute.xlu0 %2858
        %2860 = vrot.lane.b32.xlu0 %v2804, 115
        %v2861 = vpop.permute.xlu0 %2860
        %2862 = vrot.lane.b32.xlu0 %v2805, 115
        %v2863 = vpop.permute.xlu0 %2862
        %2864 = vrot.lane.b32.xlu0 %v2806, 115
        %v2865 = vpop.permute.xlu0 %2864
        %2866 = vrot.lane.b32.xlu0 %v2807, 115
        %v2867 = vpop.permute.xlu0 %2866
        %2868 = vrot.lane.b32.xlu0 %v2808, 115
        %v2869 = vpop.permute.xlu0 %2868
        %2870 = vrot.lane.b32.xlu0 %v2809, 115
        %v2871 = vpop.permute.xlu0 %2870
        %2872 = vrot.lane.b32.xlu0 %v2810, 115
        %v2873 = vpop.permute.xlu0 %2872
        %2874 = vrot.lane.b32.xlu0 %v2811, 115
        %v2875 = vpop.permute.xlu0 %2874
        %2876 = vrot.lane.b32.xlu0 %v2812, 115
        %v2877 = vpop.permute.xlu0 %2876
        %2878 = vrot.lane.b32.xlu0 %v2813, 115
        %v2879 = vpop.permute.xlu0 %2878
        %2880 = vrot.lane.b32.xlu0 %v2814, 115
        %v2881 = vpop.permute.xlu0 %2880
        %2882 = vrot.lane.b32.xlu0 %v2815, 115
        %v2883 = vpop.permute.xlu0 %2882
        %2884 = vrot.lane.b32.xlu0 %v2816, 115
        %v2885 = vpop.permute.xlu0 %2884
        %2886 = vrot.lane.b32.xlu0 %v2817, 115
        %v2887 = vpop.permute.xlu0 %2886
        %2888 = vrot.lane.b32.xlu0 %v2818, 115
        %v2889 = vpop.permute.xlu0 %2888
        %2890 = vrot.lane.b32.xlu0 %v2819, 115
        %v2891 = vpop.permute.xlu0 %2890
        %vm2892 = vcmask 941056
        %v2893 = vsel %vm2892, %v2845, %v2847
        %v2894 = vsel %vm2892, %v2847, %v2849
        %v2895 = vsel %vm2892, %v2851, %v2853
        %v2896 = vsel %vm2892, %v2853, %v2855
        %v2897 = vsel %vm2892, %v2857, %v2859
        %v2898 = vsel %vm2892, %v2859, %v2861
        %v2899 = vsel %vm2892, %v2863, %v2865
        %v2900 = vsel %vm2892, %v2865, %v2867
        %v2901 = vsel %vm2892, %v2869, %v2871
        %v2902 = vsel %vm2892, %v2871, %v2873
        %v2903 = vsel %vm2892, %v2875, %v2877
        %v2904 = vsel %vm2892, %v2877, %v2879
        %v2905 = vsel %vm2892, %v2881, %v2883
        %v2906 = vsel %vm2892, %v2883, %v2885
        %v2907 = vsel %vm2892, %v2887, %v2889
        %v2908 = vsel %vm2892, %v2889, %v2891
        %v2925 = vadd.f32 %v2748, %v2893
        %v2926 = vadd.f32 %v2749, %v2894
        %v2927 = vadd.f32 %v2750, %v2895
        %v2928 = vadd.f32 %v2751, %v2896
        %v2929 = vadd.f32 %v2752, %v2897
        %v2930 = vadd.f32 %v2753, %v2898
        %v2931 = vadd.f32 %v2754, %v2899
        %v2932 = vadd.f32 %v2755, %v2900
        %v2933 = vadd.f32 %v2756, %v2901
        %v2934 = vadd.f32 %v2757, %v2902
        %v2935 = vadd.f32 %v2758, %v2903
        %v2936 = vadd.f32 %v2759, %v2904
        %v2937 = vadd.f32 %v2760, %v2905
        %v2938 = vadd.f32 %v2761, %v2906
        %v2939 = vadd.f32 %v2762, %v2907
        %v2940 = vadd.f32 %v2763, %v2908
        %2941 = vset.pattern.permute.xlu0 14
        %2942 = vperm.xlu0 %2941, %v429
        %v2943 = vpop.permute.xlu0 %2942
        %2945 = vset.pattern.permute.xlu0 14
        %2946 = vperm.xlu0 %2945, %v430
        %v2947 = vpop.permute.xlu0 %2946
        %2949 = vset.pattern.permute.xlu0 14
        %2950 = vperm.xlu0 %2949, %v431
        %v2951 = vpop.permute.xlu0 %2950
        %2953 = vset.pattern.permute.xlu0 14
        %2954 = vperm.xlu0 %2953, %v432
        %v2955 = vpop.permute.xlu0 %2954
        %2957 = vset.pattern.permute.xlu0 14
        %2958 = vperm.xlu0 %2957, %v433
        %v2959 = vpop.permute.xlu0 %2958
        %2961 = vset.pattern.permute.xlu0 14
        %2962 = vperm.xlu0 %2961, %v434
        %v2963 = vpop.permute.xlu0 %2962
        %2965 = vset.pattern.permute.xlu0 14
        %2966 = vperm.xlu0 %2965, %v435
        %v2967 = vpop.permute.xlu0 %2966
        %2969 = vset.pattern.permute.xlu0 14
        %2970 = vperm.xlu0 %2969, %v436
        %v2971 = vpop.permute.xlu0 %2970
        %v2973 = vmul.f32 %v2943, %v624
        %v2974 = vmul.f32 %v2943, %v625
        %v2975 = vmul.f32 %v2943, %v626
        %v2976 = vmul.f32 %v2947, %v627
        %v2977 = vmul.f32 %v2947, %v628
        %v2978 = vmul.f32 %v2947, %v629
        %v2979 = vmul.f32 %v2951, %v630
        %v2980 = vmul.f32 %v2951, %v631
        %v2981 = vmul.f32 %v2951, %v632
        %v2982 = vmul.f32 %v2955, %v633
        %v2983 = vmul.f32 %v2955, %v634
        %v2984 = vmul.f32 %v2955, %v635
        %v2985 = vmul.f32 %v2959, %v636
        %v2986 = vmul.f32 %v2959, %v637
        %v2987 = vmul.f32 %v2959, %v638
        %v2988 = vmul.f32 %v2963, %v639
        %v2989 = vmul.f32 %v2963, %v640
        %v2990 = vmul.f32 %v2963, %v641
        %v2991 = vmul.f32 %v2967, %v642
        %v2992 = vmul.f32 %v2967, %v643
        %v2993 = vmul.f32 %v2967, %v644
        %v2994 = vmul.f32 %v2971, %v645
        %v2995 = vmul.f32 %v2971, %v646
        %v2996 = vmul.f32 %v2971, %v647
        %3021 = vrot.lane.b32.xlu0 %v2973, 114
        %v3022 = vpop.permute.xlu0 %3021
        %3023 = vrot.lane.b32.xlu0 %v2974, 114
        %v3024 = vpop.permute.xlu0 %3023
        %3025 = vrot.lane.b32.xlu0 %v2975, 114
        %v3026 = vpop.permute.xlu0 %3025
        %3027 = vrot.lane.b32.xlu0 %v2976, 114
        %v3028 = vpop.permute.xlu0 %3027
        %3029 = vrot.lane.b32.xlu0 %v2977, 114
        %v3030 = vpop.permute.xlu0 %3029
        %3031 = vrot.lane.b32.xlu0 %v2978, 114
        %v3032 = vpop.permute.xlu0 %3031
        %3033 = vrot.lane.b32.xlu0 %v2979, 114
        %v3034 = vpop.permute.xlu0 %3033
        %3035 = vrot.lane.b32.xlu0 %v2980, 114
        %v3036 = vpop.permute.xlu0 %3035
        %3037 = vrot.lane.b32.xlu0 %v2981, 114
        %v3038 = vpop.permute.xlu0 %3037
        %3039 = vrot.lane.b32.xlu0 %v2982, 114
        %v3040 = vpop.permute.xlu0 %3039
        %3041 = vrot.lane.b32.xlu0 %v2983, 114
        %v3042 = vpop.permute.xlu0 %3041
        %3043 = vrot.lane.b32.xlu0 %v2984, 114
        %v3044 = vpop.permute.xlu0 %3043
        %3045 = vrot.lane.b32.xlu0 %v2985, 114
        %v3046 = vpop.permute.xlu0 %3045
        %3047 = vrot.lane.b32.xlu0 %v2986, 114
        %v3048 = vpop.permute.xlu0 %3047
        %3049 = vrot.lane.b32.xlu0 %v2987, 114
        %v3050 = vpop.permute.xlu0 %3049
        %3051 = vrot.lane.b32.xlu0 %v2988, 114
        %v3052 = vpop.permute.xlu0 %3051
        %3053 = vrot.lane.b32.xlu0 %v2989, 114
        %v3054 = vpop.permute.xlu0 %3053
        %3055 = vrot.lane.b32.xlu0 %v2990, 114
        %v3056 = vpop.permute.xlu0 %3055
        %3057 = vrot.lane.b32.xlu0 %v2991, 114
        %v3058 = vpop.permute.xlu0 %3057
        %3059 = vrot.lane.b32.xlu0 %v2992, 114
        %v3060 = vpop.permute.xlu0 %3059
        %3061 = vrot.lane.b32.xlu0 %v2993, 114
        %v3062 = vpop.permute.xlu0 %3061
        %3063 = vrot.lane.b32.xlu0 %v2994, 114
        %v3064 = vpop.permute.xlu0 %3063
        %3065 = vrot.lane.b32.xlu0 %v2995, 114
        %v3066 = vpop.permute.xlu0 %3065
        %3067 = vrot.lane.b32.xlu0 %v2996, 114
        %v3068 = vpop.permute.xlu0 %3067
        %vm3069 = vcmask 932864
        %v3070 = vsel %vm3069, %v3022, %v3024
        %v3071 = vsel %vm3069, %v3024, %v3026
        %v3072 = vsel %vm3069, %v3028, %v3030
        %v3073 = vsel %vm3069, %v3030, %v3032
        %v3074 = vsel %vm3069, %v3034, %v3036
        %v3075 = vsel %vm3069, %v3036, %v3038
        %v3076 = vsel %vm3069, %v3040, %v3042
        %v3077 = vsel %vm3069, %v3042, %v3044
        %v3078 = vsel %vm3069, %v3046, %v3048
        %v3079 = vsel %vm3069, %v3048, %v3050
        %v3080 = vsel %vm3069, %v3052, %v3054
        %v3081 = vsel %vm3069, %v3054, %v3056
        %v3082 = vsel %vm3069, %v3058, %v3060
        %v3083 = vsel %vm3069, %v3060, %v3062
        %v3084 = vsel %vm3069, %v3064, %v3066
        %v3085 = vsel %vm3069, %v3066, %v3068
        %v3102 = vadd.f32 %v2925, %v3070
        %v3103 = vadd.f32 %v2926, %v3071
        %v3104 = vadd.f32 %v2927, %v3072
        %v3105 = vadd.f32 %v2928, %v3073
        %v3106 = vadd.f32 %v2929, %v3074
        %v3107 = vadd.f32 %v2930, %v3075
        %v3108 = vadd.f32 %v2931, %v3076
        %v3109 = vadd.f32 %v2932, %v3077
        %v3110 = vadd.f32 %v2933, %v3078
        %v3111 = vadd.f32 %v2934, %v3079
        %v3112 = vadd.f32 %v2935, %v3080
        %v3113 = vadd.f32 %v2936, %v3081
        %v3114 = vadd.f32 %v2937, %v3082
        %v3115 = vadd.f32 %v2938, %v3083
        %v3116 = vadd.f32 %v2939, %v3084
        %v3117 = vadd.f32 %v2940, %v3085
        %3118 = vset.pattern.permute.xlu0 15
        %3119 = vperm.xlu0 %3118, %v429
        %v3120 = vpop.permute.xlu0 %3119
        %3122 = vset.pattern.permute.xlu0 15
        %3123 = vperm.xlu0 %3122, %v430
        %v3124 = vpop.permute.xlu0 %3123
        %3126 = vset.pattern.permute.xlu0 15
        %3127 = vperm.xlu0 %3126, %v431
        %v3128 = vpop.permute.xlu0 %3127
        %3130 = vset.pattern.permute.xlu0 15
        %3131 = vperm.xlu0 %3130, %v432
        %v3132 = vpop.permute.xlu0 %3131
        %3134 = vset.pattern.permute.xlu0 15
        %3135 = vperm.xlu0 %3134, %v433
        %v3136 = vpop.permute.xlu0 %3135
        %3138 = vset.pattern.permute.xlu0 15
        %3139 = vperm.xlu0 %3138, %v434
        %v3140 = vpop.permute.xlu0 %3139
        %3142 = vset.pattern.permute.xlu0 15
        %3143 = vperm.xlu0 %3142, %v435
        %v3144 = vpop.permute.xlu0 %3143
        %3146 = vset.pattern.permute.xlu0 15
        %3147 = vperm.xlu0 %3146, %v436
        %v3148 = vpop.permute.xlu0 %3147
        %v3150 = vmul.f32 %v3120, %v624
        %v3151 = vmul.f32 %v3120, %v625
        %v3152 = vmul.f32 %v3120, %v626
        %v3153 = vmul.f32 %v3124, %v627
        %v3154 = vmul.f32 %v3124, %v628
        %v3155 = vmul.f32 %v3124, %v629
        %v3156 = vmul.f32 %v3128, %v630
        %v3157 = vmul.f32 %v3128, %v631
        %v3158 = vmul.f32 %v3128, %v632
        %v3159 = vmul.f32 %v3132, %v633
        %v3160 = vmul.f32 %v3132, %v634
        %v3161 = vmul.f32 %v3132, %v635
        %v3162 = vmul.f32 %v3136, %v636
        %v3163 = vmul.f32 %v3136, %v637
        %v3164 = vmul.f32 %v3136, %v638
        %v3165 = vmul.f32 %v3140, %v639
        %v3166 = vmul.f32 %v3140, %v640
        %v3167 = vmul.f32 %v3140, %v641
        %v3168 = vmul.f32 %v3144, %v642
        %v3169 = vmul.f32 %v3144, %v643
        %v3170 = vmul.f32 %v3144, %v644
        %v3171 = vmul.f32 %v3148, %v645
        %v3172 = vmul.f32 %v3148, %v646
        %v3173 = vmul.f32 %v3148, %v647
        %3198 = vrot.lane.b32.xlu0 %v3150, 113
        %v3199 = vpop.permute.xlu0 %3198
        %3200 = vrot.lane.b32.xlu0 %v3151, 113
        %v3201 = vpop.permute.xlu0 %3200
        %3202 = vrot.lane.b32.xlu0 %v3152, 113
        %v3203 = vpop.permute.xlu0 %3202
        %3204 = vrot.lane.b32.xlu0 %v3153, 113
        %v3205 = vpop.permute.xlu0 %3204
        %3206 = vrot.lane.b32.xlu0 %v3154, 113
        %v3207 = vpop.permute.xlu0 %3206
        %3208 = vrot.lane.b32.xlu0 %v3155, 113
        %v3209 = vpop.permute.xlu0 %3208
        %3210 = vrot.lane.b32.xlu0 %v3156, 113
        %v3211 = vpop.permute.xlu0 %3210
        %3212 = vrot.lane.b32.xlu0 %v3157, 113
        %v3213 = vpop.permute.xlu0 %3212
        %3214 = vrot.lane.b32.xlu0 %v3158, 113
        %v3215 = vpop.permute.xlu0 %3214
        %3216 = vrot.lane.b32.xlu0 %v3159, 113
        %v3217 = vpop.permute.xlu0 %3216
        %3218 = vrot.lane.b32.xlu0 %v3160, 113
        %v3219 = vpop.permute.xlu0 %3218
        %3220 = vrot.lane.b32.xlu0 %v3161, 113
        %v3221 = vpop.permute.xlu0 %3220
        %3222 = vrot.lane.b32.xlu0 %v3162, 113
        %v3223 = vpop.permute.xlu0 %3222
        %3224 = vrot.lane.b32.xlu0 %v3163, 113
        %v3225 = vpop.permute.xlu0 %3224
        %3226 = vrot.lane.b32.xlu0 %v3164, 113
        %v3227 = vpop.permute.xlu0 %3226
        %3228 = vrot.lane.b32.xlu0 %v3165, 113
        %v3229 = vpop.permute.xlu0 %3228
        %3230 = vrot.lane.b32.xlu0 %v3166, 113
        %v3231 = vpop.permute.xlu0 %3230
        %3232 = vrot.lane.b32.xlu0 %v3167, 113
        %v3233 = vpop.permute.xlu0 %3232
        %3234 = vrot.lane.b32.xlu0 %v3168, 113
        %v3235 = vpop.permute.xlu0 %3234
        %3236 = vrot.lane.b32.xlu0 %v3169, 113
        %v3237 = vpop.permute.xlu0 %3236
        %3238 = vrot.lane.b32.xlu0 %v3170, 113
        %v3239 = vpop.permute.xlu0 %3238
        %3240 = vrot.lane.b32.xlu0 %v3171, 113
        %v3241 = vpop.permute.xlu0 %3240
        %3242 = vrot.lane.b32.xlu0 %v3172, 113
        %v3243 = vpop.permute.xlu0 %3242
        %3244 = vrot.lane.b32.xlu0 %v3173, 113
        %v3245 = vpop.permute.xlu0 %3244
        %vm3246 = vcmask 924672
        %v3247 = vsel %vm3246, %v3199, %v3201
        %v3248 = vsel %vm3246, %v3201, %v3203
        %v3249 = vsel %vm3246, %v3205, %v3207
        %v3250 = vsel %vm3246, %v3207, %v3209
        %v3251 = vsel %vm3246, %v3211, %v3213
        %v3252 = vsel %vm3246, %v3213, %v3215
        %v3253 = vsel %vm3246, %v3217, %v3219
        %v3254 = vsel %vm3246, %v3219, %v3221
        %v3255 = vsel %vm3246, %v3223, %v3225
        %v3256 = vsel %vm3246, %v3225, %v3227
        %v3257 = vsel %vm3246, %v3229, %v3231
        %v3258 = vsel %vm3246, %v3231, %v3233
        %v3259 = vsel %vm3246, %v3235, %v3237
        %v3260 = vsel %vm3246, %v3237, %v3239
        %v3261 = vsel %vm3246, %v3241, %v3243
        %v3262 = vsel %vm3246, %v3243, %v3245
        %v3279 = vadd.f32 %v3102, %v3247
        %v3280 = vadd.f32 %v3103, %v3248
        %v3281 = vadd.f32 %v3104, %v3249
        %v3282 = vadd.f32 %v3105, %v3250
        %v3283 = vadd.f32 %v3106, %v3251
        %v3284 = vadd.f32 %v3107, %v3252
        %v3285 = vadd.f32 %v3108, %v3253
        %v3286 = vadd.f32 %v3109, %v3254
        %v3287 = vadd.f32 %v3110, %v3255
        %v3288 = vadd.f32 %v3111, %v3256
        %v3289 = vadd.f32 %v3112, %v3257
        %v3290 = vadd.f32 %v3113, %v3258
        %v3291 = vadd.f32 %v3114, %v3259
        %v3292 = vadd.f32 %v3115, %v3260
        %v3293 = vadd.f32 %v3116, %v3261
        %v3294 = vadd.f32 %v3117, %v3262
        %3295 = vset.pattern.permute.xlu0 16
        %3296 = vperm.xlu0 %3295, %v429
        %v3297 = vpop.permute.xlu0 %3296
        %3299 = vset.pattern.permute.xlu0 16
        %3300 = vperm.xlu0 %3299, %v430
        %v3301 = vpop.permute.xlu0 %3300
        %3303 = vset.pattern.permute.xlu0 16
        %3304 = vperm.xlu0 %3303, %v431
        %v3305 = vpop.permute.xlu0 %3304
        %3307 = vset.pattern.permute.xlu0 16
        %3308 = vperm.xlu0 %3307, %v432
        %v3309 = vpop.permute.xlu0 %3308
        %3311 = vset.pattern.permute.xlu0 16
        %3312 = vperm.xlu0 %3311, %v433
        %v3313 = vpop.permute.xlu0 %3312
        %3315 = vset.pattern.permute.xlu0 16
        %3316 = vperm.xlu0 %3315, %v434
        %v3317 = vpop.permute.xlu0 %3316
        %3319 = vset.pattern.permute.xlu0 16
        %3320 = vperm.xlu0 %3319, %v435
        %v3321 = vpop.permute.xlu0 %3320
        %3323 = vset.pattern.permute.xlu0 16
        %3324 = vperm.xlu0 %3323, %v436
        %v3325 = vpop.permute.xlu0 %3324
        %v3327 = vmul.f32 %v3297, %v624
        %v3328 = vmul.f32 %v3297, %v625
        %v3329 = vmul.f32 %v3297, %v626
        %v3330 = vmul.f32 %v3301, %v627
        %v3331 = vmul.f32 %v3301, %v628
        %v3332 = vmul.f32 %v3301, %v629
        %v3333 = vmul.f32 %v3305, %v630
        %v3334 = vmul.f32 %v3305, %v631
        %v3335 = vmul.f32 %v3305, %v632
        %v3336 = vmul.f32 %v3309, %v633
        %v3337 = vmul.f32 %v3309, %v634
        %v3338 = vmul.f32 %v3309, %v635
        %v3339 = vmul.f32 %v3313, %v636
        %v3340 = vmul.f32 %v3313, %v637
        %v3341 = vmul.f32 %v3313, %v638
        %v3342 = vmul.f32 %v3317, %v639
        %v3343 = vmul.f32 %v3317, %v640
        %v3344 = vmul.f32 %v3317, %v641
        %v3345 = vmul.f32 %v3321, %v642
        %v3346 = vmul.f32 %v3321, %v643
        %v3347 = vmul.f32 %v3321, %v644
        %v3348 = vmul.f32 %v3325, %v645
        %v3349 = vmul.f32 %v3325, %v646
        %v3350 = vmul.f32 %v3325, %v647
        %3375 = vrot.lane.b32.xlu0 %v3327, 112
        %v3376 = vpop.permute.xlu0 %3375
        %3377 = vrot.lane.b32.xlu0 %v3328, 112
        %v3378 = vpop.permute.xlu0 %3377
        %3379 = vrot.lane.b32.xlu0 %v3329, 112
        %v3380 = vpop.permute.xlu0 %3379
        %3381 = vrot.lane.b32.xlu0 %v3330, 112
        %v3382 = vpop.permute.xlu0 %3381
        %3383 = vrot.lane.b32.xlu0 %v3331, 112
        %v3384 = vpop.permute.xlu0 %3383
        %3385 = vrot.lane.b32.xlu0 %v3332, 112
        %v3386 = vpop.permute.xlu0 %3385
        %3387 = vrot.lane.b32.xlu0 %v3333, 112
        %v3388 = vpop.permute.xlu0 %3387
        %3389 = vrot.lane.b32.xlu0 %v3334, 112
        %v3390 = vpop.permute.xlu0 %3389
        %3391 = vrot.lane.b32.xlu0 %v3335, 112
        %v3392 = vpop.permute.xlu0 %3391
        %3393 = vrot.lane.b32.xlu0 %v3336, 112
        %v3394 = vpop.permute.xlu0 %3393
        %3395 = vrot.lane.b32.xlu0 %v3337, 112
        %v3396 = vpop.permute.xlu0 %3395
        %3397 = vrot.lane.b32.xlu0 %v3338, 112
        %v3398 = vpop.permute.xlu0 %3397
        %3399 = vrot.lane.b32.xlu0 %v3339, 112
        %v3400 = vpop.permute.xlu0 %3399
        %3401 = vrot.lane.b32.xlu0 %v3340, 112
        %v3402 = vpop.permute.xlu0 %3401
        %3403 = vrot.lane.b32.xlu0 %v3341, 112
        %v3404 = vpop.permute.xlu0 %3403
        %3405 = vrot.lane.b32.xlu0 %v3342, 112
        %v3406 = vpop.permute.xlu0 %3405
        %3407 = vrot.lane.b32.xlu0 %v3343, 112
        %v3408 = vpop.permute.xlu0 %3407
        %3409 = vrot.lane.b32.xlu0 %v3344, 112
        %v3410 = vpop.permute.xlu0 %3409
        %3411 = vrot.lane.b32.xlu0 %v3345, 112
        %v3412 = vpop.permute.xlu0 %3411
        %3413 = vrot.lane.b32.xlu0 %v3346, 112
        %v3414 = vpop.permute.xlu0 %3413
        %3415 = vrot.lane.b32.xlu0 %v3347, 112
        %v3416 = vpop.permute.xlu0 %3415
        %3417 = vrot.lane.b32.xlu0 %v3348, 112
        %v3418 = vpop.permute.xlu0 %3417
        %3419 = vrot.lane.b32.xlu0 %v3349, 112
        %v3420 = vpop.permute.xlu0 %3419
        %3421 = vrot.lane.b32.xlu0 %v3350, 112
        %v3422 = vpop.permute.xlu0 %3421
        %vm3423 = vcmask 916480
        %v3424 = vsel %vm3423, %v3376, %v3378
        %v3425 = vsel %vm3423, %v3378, %v3380
        %v3426 = vsel %vm3423, %v3382, %v3384
        %v3427 = vsel %vm3423, %v3384, %v3386
        %v3428 = vsel %vm3423, %v3388, %v3390
        %v3429 = vsel %vm3423, %v3390, %v3392
        %v3430 = vsel %vm3423, %v3394, %v3396
        %v3431 = vsel %vm3423, %v3396, %v3398
        %v3432 = vsel %vm3423, %v3400, %v3402
        %v3433 = vsel %vm3423, %v3402, %v3404
        %v3434 = vsel %vm3423, %v3406, %v3408
        %v3435 = vsel %vm3423, %v3408, %v3410
        %v3436 = vsel %vm3423, %v3412, %v3414
        %v3437 = vsel %vm3423, %v3414, %v3416
        %v3438 = vsel %vm3423, %v3418, %v3420
        %v3439 = vsel %vm3423, %v3420, %v3422
        %v3456 = vadd.f32 %v3279, %v3424
        %v3457 = vadd.f32 %v3280, %v3425
        %v3458 = vadd.f32 %v3281, %v3426
        %v3459 = vadd.f32 %v3282, %v3427
        %v3460 = vadd.f32 %v3283, %v3428
        %v3461 = vadd.f32 %v3284, %v3429
        %v3462 = vadd.f32 %v3285, %v3430
        %v3463 = vadd.f32 %v3286, %v3431
        %v3464 = vadd.f32 %v3287, %v3432
        %v3465 = vadd.f32 %v3288, %v3433
        %v3466 = vadd.f32 %v3289, %v3434
        %v3467 = vadd.f32 %v3290, %v3435
        %v3468 = vadd.f32 %v3291, %v3436
        %v3469 = vadd.f32 %v3292, %v3437
        %v3470 = vadd.f32 %v3293, %v3438
        %v3471 = vadd.f32 %v3294, %v3439
        %3472 = vset.pattern.permute.xlu0 17
        %3473 = vperm.xlu0 %3472, %v429
        %v3474 = vpop.permute.xlu0 %3473
        %3476 = vset.pattern.permute.xlu0 17
        %3477 = vperm.xlu0 %3476, %v430
        %v3478 = vpop.permute.xlu0 %3477
        %3480 = vset.pattern.permute.xlu0 17
        %3481 = vperm.xlu0 %3480, %v431
        %v3482 = vpop.permute.xlu0 %3481
        %3484 = vset.pattern.permute.xlu0 17
        %3485 = vperm.xlu0 %3484, %v432
        %v3486 = vpop.permute.xlu0 %3485
        %3488 = vset.pattern.permute.xlu0 17
        %3489 = vperm.xlu0 %3488, %v433
        %v3490 = vpop.permute.xlu0 %3489
        %3492 = vset.pattern.permute.xlu0 17
        %3493 = vperm.xlu0 %3492, %v434
        %v3494 = vpop.permute.xlu0 %3493
        %3496 = vset.pattern.permute.xlu0 17
        %3497 = vperm.xlu0 %3496, %v435
        %v3498 = vpop.permute.xlu0 %3497
        %3500 = vset.pattern.permute.xlu0 17
        %3501 = vperm.xlu0 %3500, %v436
        %v3502 = vpop.permute.xlu0 %3501
        %v3504 = vmul.f32 %v3474, %v624
        %v3505 = vmul.f32 %v3474, %v625
        %v3506 = vmul.f32 %v3474, %v626
        %v3507 = vmul.f32 %v3478, %v627
        %v3508 = vmul.f32 %v3478, %v628
        %v3509 = vmul.f32 %v3478, %v629
        %v3510 = vmul.f32 %v3482, %v630
        %v3511 = vmul.f32 %v3482, %v631
        %v3512 = vmul.f32 %v3482, %v632
        %v3513 = vmul.f32 %v3486, %v633
        %v3514 = vmul.f32 %v3486, %v634
        %v3515 = vmul.f32 %v3486, %v635
        %v3516 = vmul.f32 %v3490, %v636
        %v3517 = vmul.f32 %v3490, %v637
        %v3518 = vmul.f32 %v3490, %v638
        %v3519 = vmul.f32 %v3494, %v639
        %v3520 = vmul.f32 %v3494, %v640
        %v3521 = vmul.f32 %v3494, %v641
        %v3522 = vmul.f32 %v3498, %v642
        %v3523 = vmul.f32 %v3498, %v643
        %v3524 = vmul.f32 %v3498, %v644
        %v3525 = vmul.f32 %v3502, %v645
        %v3526 = vmul.f32 %v3502, %v646
        %v3527 = vmul.f32 %v3502, %v647
        %3552 = vrot.lane.b32.xlu0 %v3504, 111
        %v3553 = vpop.permute.xlu0 %3552
        %3554 = vrot.lane.b32.xlu0 %v3505, 111
        %v3555 = vpop.permute.xlu0 %3554
        %3556 = vrot.lane.b32.xlu0 %v3506, 111
        %v3557 = vpop.permute.xlu0 %3556
        %3558 = vrot.lane.b32.xlu0 %v3507, 111
        %v3559 = vpop.permute.xlu0 %3558
        %3560 = vrot.lane.b32.xlu0 %v3508, 111
        %v3561 = vpop.permute.xlu0 %3560
        %3562 = vrot.lane.b32.xlu0 %v3509, 111
        %v3563 = vpop.permute.xlu0 %3562
        %3564 = vrot.lane.b32.xlu0 %v3510, 111
        %v3565 = vpop.permute.xlu0 %3564
        %3566 = vrot.lane.b32.xlu0 %v3511, 111
        %v3567 = vpop.permute.xlu0 %3566
        %3568 = vrot.lane.b32.xlu0 %v3512, 111
        %v3569 = vpop.permute.xlu0 %3568
        %3570 = vrot.lane.b32.xlu0 %v3513, 111
        %v3571 = vpop.permute.xlu0 %3570
        %3572 = vrot.lane.b32.xlu0 %v3514, 111
        %v3573 = vpop.permute.xlu0 %3572
        %3574 = vrot.lane.b32.xlu0 %v3515, 111
        %v3575 = vpop.permute.xlu0 %3574
        %3576 = vrot.lane.b32.xlu0 %v3516, 111
        %v3577 = vpop.permute.xlu0 %3576
        %3578 = vrot.lane.b32.xlu0 %v3517, 111
        %v3579 = vpop.permute.xlu0 %3578
        %3580 = vrot.lane.b32.xlu0 %v3518, 111
        %v3581 = vpop.permute.xlu0 %3580
        %3582 = vrot.lane.b32.xlu0 %v3519, 111
        %v3583 = vpop.permute.xlu0 %3582
        %3584 = vrot.lane.b32.xlu0 %v3520, 111
        %v3585 = vpop.permute.xlu0 %3584
        %3586 = vrot.lane.b32.xlu0 %v3521, 111
        %v3587 = vpop.permute.xlu0 %3586
        %3588 = vrot.lane.b32.xlu0 %v3522, 111
        %v3589 = vpop.permute.xlu0 %3588
        %3590 = vrot.lane.b32.xlu0 %v3523, 111
        %v3591 = vpop.permute.xlu0 %3590
        %3592 = vrot.lane.b32.xlu0 %v3524, 111
        %v3593 = vpop.permute.xlu0 %3592
        %3594 = vrot.lane.b32.xlu0 %v3525, 111
        %v3595 = vpop.permute.xlu0 %3594
        %3596 = vrot.lane.b32.xlu0 %v3526, 111
        %v3597 = vpop.permute.xlu0 %3596
        %3598 = vrot.lane.b32.xlu0 %v3527, 111
        %v3599 = vpop.permute.xlu0 %3598
        %vm3600 = vcmask 908288
        %v3601 = vsel %vm3600, %v3553, %v3555
        %v3602 = vsel %vm3600, %v3555, %v3557
        %v3603 = vsel %vm3600, %v3559, %v3561
        %v3604 = vsel %vm3600, %v3561, %v3563
        %v3605 = vsel %vm3600, %v3565, %v3567
        %v3606 = vsel %vm3600, %v3567, %v3569
        %v3607 = vsel %vm3600, %v3571, %v3573
        %v3608 = vsel %vm3600, %v3573, %v3575
        %v3609 = vsel %vm3600, %v3577, %v3579
        %v3610 = vsel %vm3600, %v3579, %v3581
        %v3611 = vsel %vm3600, %v3583, %v3585
        %v3612 = vsel %vm3600, %v3585, %v3587
        %v3613 = vsel %vm3600, %v3589, %v3591
        %v3614 = vsel %vm3600, %v3591, %v3593
        %v3615 = vsel %vm3600, %v3595, %v3597
        %v3616 = vsel %vm3600, %v3597, %v3599
        %v3633 = vadd.f32 %v3456, %v3601
        %v3634 = vadd.f32 %v3457, %v3602
        %v3635 = vadd.f32 %v3458, %v3603
        %v3636 = vadd.f32 %v3459, %v3604
        %v3637 = vadd.f32 %v3460, %v3605
        %v3638 = vadd.f32 %v3461, %v3606
        %v3639 = vadd.f32 %v3462, %v3607
        %v3640 = vadd.f32 %v3463, %v3608
        %v3641 = vadd.f32 %v3464, %v3609
        %v3642 = vadd.f32 %v3465, %v3610
        %v3643 = vadd.f32 %v3466, %v3611
        %v3644 = vadd.f32 %v3467, %v3612
        %v3645 = vadd.f32 %v3468, %v3613
        %v3646 = vadd.f32 %v3469, %v3614
        %v3647 = vadd.f32 %v3470, %v3615
        %v3648 = vadd.f32 %v3471, %v3616
        %3649 = vset.pattern.permute.xlu0 18
        %3650 = vperm.xlu0 %3649, %v429
        %v3651 = vpop.permute.xlu0 %3650
        %3653 = vset.pattern.permute.xlu0 18
        %3654 = vperm.xlu0 %3653, %v430
        %v3655 = vpop.permute.xlu0 %3654
        %3657 = vset.pattern.permute.xlu0 18
        %3658 = vperm.xlu0 %3657, %v431
        %v3659 = vpop.permute.xlu0 %3658
        %3661 = vset.pattern.permute.xlu0 18
        %3662 = vperm.xlu0 %3661, %v432
        %v3663 = vpop.permute.xlu0 %3662
        %3665 = vset.pattern.permute.xlu0 18
        %3666 = vperm.xlu0 %3665, %v433
        %v3667 = vpop.permute.xlu0 %3666
        %3669 = vset.pattern.permute.xlu0 18
        %3670 = vperm.xlu0 %3669, %v434
        %v3671 = vpop.permute.xlu0 %3670
        %3673 = vset.pattern.permute.xlu0 18
        %3674 = vperm.xlu0 %3673, %v435
        %v3675 = vpop.permute.xlu0 %3674
        %3677 = vset.pattern.permute.xlu0 18
        %3678 = vperm.xlu0 %3677, %v436
        %v3679 = vpop.permute.xlu0 %3678
        %v3681 = vmul.f32 %v3651, %v624
        %v3682 = vmul.f32 %v3651, %v625
        %v3683 = vmul.f32 %v3651, %v626
        %v3684 = vmul.f32 %v3655, %v627
        %v3685 = vmul.f32 %v3655, %v628
        %v3686 = vmul.f32 %v3655, %v629
        %v3687 = vmul.f32 %v3659, %v630
        %v3688 = vmul.f32 %v3659, %v631
        %v3689 = vmul.f32 %v3659, %v632
        %v3690 = vmul.f32 %v3663, %v633
        %v3691 = vmul.f32 %v3663, %v634
        %v3692 = vmul.f32 %v3663, %v635
        %v3693 = vmul.f32 %v3667, %v636
        %v3694 = vmul.f32 %v3667, %v637
        %v3695 = vmul.f32 %v3667, %v638
        %v3696 = vmul.f32 %v3671, %v639
        %v3697 = vmul.f32 %v3671, %v640
        %v3698 = vmul.f32 %v3671, %v641
        %v3699 = vmul.f32 %v3675, %v642
        %v3700 = vmul.f32 %v3675, %v643
        %v3701 = vmul.f32 %v3675, %v644
        %v3702 = vmul.f32 %v3679, %v645
        %v3703 = vmul.f32 %v3679, %v646
        %v3704 = vmul.f32 %v3679, %v647
        %3729 = vrot.lane.b32.xlu0 %v3681, 110
        %v3730 = vpop.permute.xlu0 %3729
        %3731 = vrot.lane.b32.xlu0 %v3682, 110
        %v3732 = vpop.permute.xlu0 %3731
        %3733 = vrot.lane.b32.xlu0 %v3683, 110
        %v3734 = vpop.permute.xlu0 %3733
        %3735 = vrot.lane.b32.xlu0 %v3684, 110
        %v3736 = vpop.permute.xlu0 %3735
        %3737 = vrot.lane.b32.xlu0 %v3685, 110
        %v3738 = vpop.permute.xlu0 %3737
        %3739 = vrot.lane.b32.xlu0 %v3686, 110
        %v3740 = vpop.permute.xlu0 %3739
        %3741 = vrot.lane.b32.xlu0 %v3687, 110
        %v3742 = vpop.permute.xlu0 %3741
        %3743 = vrot.lane.b32.xlu0 %v3688, 110
        %v3744 = vpop.permute.xlu0 %3743
        %3745 = vrot.lane.b32.xlu0 %v3689, 110
        %v3746 = vpop.permute.xlu0 %3745
        %3747 = vrot.lane.b32.xlu0 %v3690, 110
        %v3748 = vpop.permute.xlu0 %3747
        %3749 = vrot.lane.b32.xlu0 %v3691, 110
        %v3750 = vpop.permute.xlu0 %3749
        %3751 = vrot.lane.b32.xlu0 %v3692, 110
        %v3752 = vpop.permute.xlu0 %3751
        %3753 = vrot.lane.b32.xlu0 %v3693, 110
        %v3754 = vpop.permute.xlu0 %3753
        %3755 = vrot.lane.b32.xlu0 %v3694, 110
        %v3756 = vpop.permute.xlu0 %3755
        %3757 = vrot.lane.b32.xlu0 %v3695, 110
        %v3758 = vpop.permute.xlu0 %3757
        %3759 = vrot.lane.b32.xlu0 %v3696, 110
        %v3760 = vpop.permute.xlu0 %3759
        %3761 = vrot.lane.b32.xlu0 %v3697, 110
        %v3762 = vpop.permute.xlu0 %3761
        %3763 = vrot.lane.b32.xlu0 %v3698, 110
        %v3764 = vpop.permute.xlu0 %3763
        %3765 = vrot.lane.b32.xlu0 %v3699, 110
        %v3766 = vpop.permute.xlu0 %3765
        %3767 = vrot.lane.b32.xlu0 %v3700, 110
        %v3768 = vpop.permute.xlu0 %3767
        %3769 = vrot.lane.b32.xlu0 %v3701, 110
        %v3770 = vpop.permute.xlu0 %3769
        %3771 = vrot.lane.b32.xlu0 %v3702, 110
        %v3772 = vpop.permute.xlu0 %3771
        %3773 = vrot.lane.b32.xlu0 %v3703, 110
        %v3774 = vpop.permute.xlu0 %3773
        %3775 = vrot.lane.b32.xlu0 %v3704, 110
        %v3776 = vpop.permute.xlu0 %3775
        %vm3777 = vcmask 900096
        %v3778 = vsel %vm3777, %v3730, %v3732
        %v3779 = vsel %vm3777, %v3732, %v3734
        %v3780 = vsel %vm3777, %v3736, %v3738
        %v3781 = vsel %vm3777, %v3738, %v3740
        %v3782 = vsel %vm3777, %v3742, %v3744
        %v3783 = vsel %vm3777, %v3744, %v3746
        %v3784 = vsel %vm3777, %v3748, %v3750
        %v3785 = vsel %vm3777, %v3750, %v3752
        %v3786 = vsel %vm3777, %v3754, %v3756
        %v3787 = vsel %vm3777, %v3756, %v3758
        %v3788 = vsel %vm3777, %v3760, %v3762
        %v3789 = vsel %vm3777, %v3762, %v3764
        %v3790 = vsel %vm3777, %v3766, %v3768
        %v3791 = vsel %vm3777, %v3768, %v3770
        %v3792 = vsel %vm3777, %v3772, %v3774
        %v3793 = vsel %vm3777, %v3774, %v3776
        %v3810 = vadd.f32 %v3633, %v3778
        %v3811 = vadd.f32 %v3634, %v3779
        %v3812 = vadd.f32 %v3635, %v3780
        %v3813 = vadd.f32 %v3636, %v3781
        %v3814 = vadd.f32 %v3637, %v3782
        %v3815 = vadd.f32 %v3638, %v3783
        %v3816 = vadd.f32 %v3639, %v3784
        %v3817 = vadd.f32 %v3640, %v3785
        %v3818 = vadd.f32 %v3641, %v3786
        %v3819 = vadd.f32 %v3642, %v3787
        %v3820 = vadd.f32 %v3643, %v3788
        %v3821 = vadd.f32 %v3644, %v3789
        %v3822 = vadd.f32 %v3645, %v3790
        %v3823 = vadd.f32 %v3646, %v3791
        %v3824 = vadd.f32 %v3647, %v3792
        %v3825 = vadd.f32 %v3648, %v3793
        %3826 = vset.pattern.permute.xlu0 19
        %3827 = vperm.xlu0 %3826, %v429
        %v3828 = vpop.permute.xlu0 %3827
        %3830 = vset.pattern.permute.xlu0 19
        %3831 = vperm.xlu0 %3830, %v430
        %v3832 = vpop.permute.xlu0 %3831
        %3834 = vset.pattern.permute.xlu0 19
        %3835 = vperm.xlu0 %3834, %v431
        %v3836 = vpop.permute.xlu0 %3835
        %3838 = vset.pattern.permute.xlu0 19
        %3839 = vperm.xlu0 %3838, %v432
        %v3840 = vpop.permute.xlu0 %3839
        %3842 = vset.pattern.permute.xlu0 19
        %3843 = vperm.xlu0 %3842, %v433
        %v3844 = vpop.permute.xlu0 %3843
        %3846 = vset.pattern.permute.xlu0 19
        %3847 = vperm.xlu0 %3846, %v434
        %v3848 = vpop.permute.xlu0 %3847
        %3850 = vset.pattern.permute.xlu0 19
        %3851 = vperm.xlu0 %3850, %v435
        %v3852 = vpop.permute.xlu0 %3851
        %3854 = vset.pattern.permute.xlu0 19
        %3855 = vperm.xlu0 %3854, %v436
        %v3856 = vpop.permute.xlu0 %3855
        %v3858 = vmul.f32 %v3828, %v624
        %v3859 = vmul.f32 %v3828, %v625
        %v3860 = vmul.f32 %v3828, %v626
        %v3861 = vmul.f32 %v3832, %v627
        %v3862 = vmul.f32 %v3832, %v628
        %v3863 = vmul.f32 %v3832, %v629
        %v3864 = vmul.f32 %v3836, %v630
        %v3865 = vmul.f32 %v3836, %v631
        %v3866 = vmul.f32 %v3836, %v632
        %v3867 = vmul.f32 %v3840, %v633
        %v3868 = vmul.f32 %v3840, %v634
        %v3869 = vmul.f32 %v3840, %v635
        %v3870 = vmul.f32 %v3844, %v636
        %v3871 = vmul.f32 %v3844, %v637
        %v3872 = vmul.f32 %v3844, %v638
        %v3873 = vmul.f32 %v3848, %v639
        %v3874 = vmul.f32 %v3848, %v640
        %v3875 = vmul.f32 %v3848, %v641
        %v3876 = vmul.f32 %v3852, %v642
        %v3877 = vmul.f32 %v3852, %v643
        %v3878 = vmul.f32 %v3852, %v644
        %v3879 = vmul.f32 %v3856, %v645
        %v3880 = vmul.f32 %v3856, %v646
        %v3881 = vmul.f32 %v3856, %v647
        %3906 = vrot.lane.b32.xlu0 %v3858, 109
        %v3907 = vpop.permute.xlu0 %3906
        %3908 = vrot.lane.b32.xlu0 %v3859, 109
        %v3909 = vpop.permute.xlu0 %3908
        %3910 = vrot.lane.b32.xlu0 %v3860, 109
        %v3911 = vpop.permute.xlu0 %3910
        %3912 = vrot.lane.b32.xlu0 %v3861, 109
        %v3913 = vpop.permute.xlu0 %3912
        %3914 = vrot.lane.b32.xlu0 %v3862, 109
        %v3915 = vpop.permute.xlu0 %3914
        %3916 = vrot.lane.b32.xlu0 %v3863, 109
        %v3917 = vpop.permute.xlu0 %3916
        %3918 = vrot.lane.b32.xlu0 %v3864, 109
        %v3919 = vpop.permute.xlu0 %3918
        %3920 = vrot.lane.b32.xlu0 %v3865, 109
        %v3921 = vpop.permute.xlu0 %3920
        %3922 = vrot.lane.b32.xlu0 %v3866, 109
        %v3923 = vpop.permute.xlu0 %3922
        %3924 = vrot.lane.b32.xlu0 %v3867, 109
        %v3925 = vpop.permute.xlu0 %3924
        %3926 = vrot.lane.b32.xlu0 %v3868, 109
        %v3927 = vpop.permute.xlu0 %3926
        %3928 = vrot.lane.b32.xlu0 %v3869, 109
        %v3929 = vpop.permute.xlu0 %3928
        %3930 = vrot.lane.b32.xlu0 %v3870, 109
        %v3931 = vpop.permute.xlu0 %3930
        %3932 = vrot.lane.b32.xlu0 %v3871, 109
        %v3933 = vpop.permute.xlu0 %3932
        %3934 = vrot.lane.b32.xlu0 %v3872, 109
        %v3935 = vpop.permute.xlu0 %3934
        %3936 = vrot.lane.b32.xlu0 %v3873, 109
        %v3937 = vpop.permute.xlu0 %3936
        %3938 = vrot.lane.b32.xlu0 %v3874, 109
        %v3939 = vpop.permute.xlu0 %3938
        %3940 = vrot.lane.b32.xlu0 %v3875, 109
        %v3941 = vpop.permute.xlu0 %3940
        %3942 = vrot.lane.b32.xlu0 %v3876, 109
        %v3943 = vpop.permute.xlu0 %3942
        %3944 = vrot.lane.b32.xlu0 %v3877, 109
        %v3945 = vpop.permute.xlu0 %3944
        %3946 = vrot.lane.b32.xlu0 %v3878, 109
        %v3947 = vpop.permute.xlu0 %3946
        %3948 = vrot.lane.b32.xlu0 %v3879, 109
        %v3949 = vpop.permute.xlu0 %3948
        %3950 = vrot.lane.b32.xlu0 %v3880, 109
        %v3951 = vpop.permute.xlu0 %3950
        %3952 = vrot.lane.b32.xlu0 %v3881, 109
        %v3953 = vpop.permute.xlu0 %3952
        %vm3954 = vcmask 891904
        %v3955 = vsel %vm3954, %v3907, %v3909
        %v3956 = vsel %vm3954, %v3909, %v3911
        %v3957 = vsel %vm3954, %v3913, %v3915
        %v3958 = vsel %vm3954, %v3915, %v3917
        %v3959 = vsel %vm3954, %v3919, %v3921
        %v3960 = vsel %vm3954, %v3921, %v3923
        %v3961 = vsel %vm3954, %v3925, %v3927
        %v3962 = vsel %vm3954, %v3927, %v3929
        %v3963 = vsel %vm3954, %v3931, %v3933
        %v3964 = vsel %vm3954, %v3933, %v3935
        %v3965 = vsel %vm3954, %v3937, %v3939
        %v3966 = vsel %vm3954, %v3939, %v3941
        %v3967 = vsel %vm3954, %v3943, %v3945
        %v3968 = vsel %vm3954, %v3945, %v3947
        %v3969 = vsel %vm3954, %v3949, %v3951
        %v3970 = vsel %vm3954, %v3951, %v3953
        %v3987 = vadd.f32 %v3810, %v3955
        %v3988 = vadd.f32 %v3811, %v3956
        %v3989 = vadd.f32 %v3812, %v3957
        %v3990 = vadd.f32 %v3813, %v3958
        %v3991 = vadd.f32 %v3814, %v3959
        %v3992 = vadd.f32 %v3815, %v3960
        %v3993 = vadd.f32 %v3816, %v3961
        %v3994 = vadd.f32 %v3817, %v3962
        %v3995 = vadd.f32 %v3818, %v3963
        %v3996 = vadd.f32 %v3819, %v3964
        %v3997 = vadd.f32 %v3820, %v3965
        %v3998 = vadd.f32 %v3821, %v3966
        %v3999 = vadd.f32 %v3822, %v3967
        %v4000 = vadd.f32 %v3823, %v3968
        %v4001 = vadd.f32 %v3824, %v3969
        %v4002 = vadd.f32 %v3825, %v3970
        %4003 = vset.pattern.permute.xlu0 20
        %4004 = vperm.xlu0 %4003, %v429
        %v4005 = vpop.permute.xlu0 %4004
        %4007 = vset.pattern.permute.xlu0 20
        %4008 = vperm.xlu0 %4007, %v430
        %v4009 = vpop.permute.xlu0 %4008
        %4011 = vset.pattern.permute.xlu0 20
        %4012 = vperm.xlu0 %4011, %v431
        %v4013 = vpop.permute.xlu0 %4012
        %4015 = vset.pattern.permute.xlu0 20
        %4016 = vperm.xlu0 %4015, %v432
        %v4017 = vpop.permute.xlu0 %4016
        %4019 = vset.pattern.permute.xlu0 20
        %4020 = vperm.xlu0 %4019, %v433
        %v4021 = vpop.permute.xlu0 %4020
        %4023 = vset.pattern.permute.xlu0 20
        %4024 = vperm.xlu0 %4023, %v434
        %v4025 = vpop.permute.xlu0 %4024
        %4027 = vset.pattern.permute.xlu0 20
        %4028 = vperm.xlu0 %4027, %v435
        %v4029 = vpop.permute.xlu0 %4028
        %4031 = vset.pattern.permute.xlu0 20
        %4032 = vperm.xlu0 %4031, %v436
        %v4033 = vpop.permute.xlu0 %4032
        %v4035 = vmul.f32 %v4005, %v624
        %v4036 = vmul.f32 %v4005, %v625
        %v4037 = vmul.f32 %v4005, %v626
        %v4038 = vmul.f32 %v4009, %v627
        %v4039 = vmul.f32 %v4009, %v628
        %v4040 = vmul.f32 %v4009, %v629
        %v4041 = vmul.f32 %v4013, %v630
        %v4042 = vmul.f32 %v4013, %v631
        %v4043 = vmul.f32 %v4013, %v632
        %v4044 = vmul.f32 %v4017, %v633
        %v4045 = vmul.f32 %v4017, %v634
        %v4046 = vmul.f32 %v4017, %v635
        %v4047 = vmul.f32 %v4021, %v636
        %v4048 = vmul.f32 %v4021, %v637
        %v4049 = vmul.f32 %v4021, %v638
        %v4050 = vmul.f32 %v4025, %v639
        %v4051 = vmul.f32 %v4025, %v640
        %v4052 = vmul.f32 %v4025, %v641
        %v4053 = vmul.f32 %v4029, %v642
        %v4054 = vmul.f32 %v4029, %v643
        %v4055 = vmul.f32 %v4029, %v644
        %v4056 = vmul.f32 %v4033, %v645
        %v4057 = vmul.f32 %v4033, %v646
        %v4058 = vmul.f32 %v4033, %v647
        %4083 = vrot.lane.b32.xlu0 %v4035, 108
        %v4084 = vpop.permute.xlu0 %4083
        %4085 = vrot.lane.b32.xlu0 %v4036, 108
        %v4086 = vpop.permute.xlu0 %4085
        %4087 = vrot.lane.b32.xlu0 %v4037, 108
        %v4088 = vpop.permute.xlu0 %4087
        %4089 = vrot.lane.b32.xlu0 %v4038, 108
        %v4090 = vpop.permute.xlu0 %4089
        %4091 = vrot.lane.b32.xlu0 %v4039, 108
        %v4092 = vpop.permute.xlu0 %4091
        %4093 = vrot.lane.b32.xlu0 %v4040, 108
        %v4094 = vpop.permute.xlu0 %4093
        %4095 = vrot.lane.b32.xlu0 %v4041, 108
        %v4096 = vpop.permute.xlu0 %4095
        %4097 = vrot.lane.b32.xlu0 %v4042, 108
        %v4098 = vpop.permute.xlu0 %4097
        %4099 = vrot.lane.b32.xlu0 %v4043, 108
        %v4100 = vpop.permute.xlu0 %4099
        %4101 = vrot.lane.b32.xlu0 %v4044, 108
        %v4102 = vpop.permute.xlu0 %4101
        %4103 = vrot.lane.b32.xlu0 %v4045, 108
        %v4104 = vpop.permute.xlu0 %4103
        %4105 = vrot.lane.b32.xlu0 %v4046, 108
        %v4106 = vpop.permute.xlu0 %4105
        %4107 = vrot.lane.b32.xlu0 %v4047, 108
        %v4108 = vpop.permute.xlu0 %4107
        %4109 = vrot.lane.b32.xlu0 %v4048, 108
        %v4110 = vpop.permute.xlu0 %4109
        %4111 = vrot.lane.b32.xlu0 %v4049, 108
        %v4112 = vpop.permute.xlu0 %4111
        %4113 = vrot.lane.b32.xlu0 %v4050, 108
        %v4114 = vpop.permute.xlu0 %4113
        %4115 = vrot.lane.b32.xlu0 %v4051, 108
        %v4116 = vpop.permute.xlu0 %4115
        %4117 = vrot.lane.b32.xlu0 %v4052, 108
        %v4118 = vpop.permute.xlu0 %4117
        %4119 = vrot.lane.b32.xlu0 %v4053, 108
        %v4120 = vpop.permute.xlu0 %4119
        %4121 = vrot.lane.b32.xlu0 %v4054, 108
        %v4122 = vpop.permute.xlu0 %4121
        %4123 = vrot.lane.b32.xlu0 %v4055, 108
        %v4124 = vpop.permute.xlu0 %4123
        %4125 = vrot.lane.b32.xlu0 %v4056, 108
        %v4126 = vpop.permute.xlu0 %4125
        %4127 = vrot.lane.b32.xlu0 %v4057, 108
        %v4128 = vpop.permute.xlu0 %4127
        %4129 = vrot.lane.b32.xlu0 %v4058, 108
        %v4130 = vpop.permute.xlu0 %4129
        %vm4131 = vcmask 883712
        %v4132 = vsel %vm4131, %v4084, %v4086
        %v4133 = vsel %vm4131, %v4086, %v4088
        %v4134 = vsel %vm4131, %v4090, %v4092
        %v4135 = vsel %vm4131, %v4092, %v4094
        %v4136 = vsel %vm4131, %v4096, %v4098
        %v4137 = vsel %vm4131, %v4098, %v4100
        %v4138 = vsel %vm4131, %v4102, %v4104
        %v4139 = vsel %vm4131, %v4104, %v4106
        %v4140 = vsel %vm4131, %v4108, %v4110
        %v4141 = vsel %vm4131, %v4110, %v4112
        %v4142 = vsel %vm4131, %v4114, %v4116
        %v4143 = vsel %vm4131, %v4116, %v4118
        %v4144 = vsel %vm4131, %v4120, %v4122
        %v4145 = vsel %vm4131, %v4122, %v4124
        %v4146 = vsel %vm4131, %v4126, %v4128
        %v4147 = vsel %vm4131, %v4128, %v4130
        %v4164 = vadd.f32 %v3987, %v4132
        %v4165 = vadd.f32 %v3988, %v4133
        %v4166 = vadd.f32 %v3989, %v4134
        %v4167 = vadd.f32 %v3990, %v4135
        %v4168 = vadd.f32 %v3991, %v4136
        %v4169 = vadd.f32 %v3992, %v4137
        %v4170 = vadd.f32 %v3993, %v4138
        %v4171 = vadd.f32 %v3994, %v4139
        %v4172 = vadd.f32 %v3995, %v4140
        %v4173 = vadd.f32 %v3996, %v4141
        %v4174 = vadd.f32 %v3997, %v4142
        %v4175 = vadd.f32 %v3998, %v4143
        %v4176 = vadd.f32 %v3999, %v4144
        %v4177 = vadd.f32 %v4000, %v4145
        %v4178 = vadd.f32 %v4001, %v4146
        %v4179 = vadd.f32 %v4002, %v4147
        %4180 = vst [vmem:[#allocation2] sm:$0xff] %v4164
        %4181 = vst [vmem:[#allocation2 + $0x8] sm:$0xff] %v4165
        %4182 = vst [vmem:[#allocation2 + $0x10] sm:$0xff] %v4166
        %4183 = vst [vmem:[#allocation2 + $0x18] sm:$0xff] %v4167
        %4184 = vst [vmem:[#allocation2 + $0x20] sm:$0xff] %v4168
        %4185 = vst [vmem:[#allocation2 + $0x28] sm:$0xff] %v4169
        %4186 = vst [vmem:[#allocation2 + $0x30] sm:$0xff] %v4170
        %4187 = vst [vmem:[#allocation2 + $0x38] sm:$0xff] %v4171
        %4188 = vst [vmem:[#allocation2 + $0x40] sm:$0xff] %v4172
        %4189 = vst [vmem:[#allocation2 + $0x48] sm:$0xff] %v4173
        %4190 = vst [vmem:[#allocation2 + $0x50] sm:$0xff] %v4174
        %4191 = vst [vmem:[#allocation2 + $0x58] sm:$0xff] %v4175
        %4192 = vst [vmem:[#allocation2 + $0x60] sm:$0xff] %v4176
        %4193 = vst [vmem:[#allocation2 + $0x68] sm:$0xff] %v4177
        %4194 = vst [vmem:[#allocation2 + $0x70] sm:$0xff] %v4178
        %4195 = vst [vmem:[#allocation2 + $0x78] sm:$0xff] %v4179
        %v4196 = vld [vmem:[#allocation2] sm:$0xff]
        %v4197 = vld [vmem:[#allocation2 + $0x8] sm:$0xff]
        %v4198 = vld [vmem:[#allocation2 + $0x10] sm:$0xff]
        %v4199 = vld [vmem:[#allocation2 + $0x18] sm:$0xff]
        %v4200 = vld [vmem:[#allocation2 + $0x20] sm:$0xff]
        %v4201 = vld [vmem:[#allocation2 + $0x28] sm:$0xff]
        %v4202 = vld [vmem:[#allocation2 + $0x30] sm:$0xff]
        %v4203 = vld [vmem:[#allocation2 + $0x38] sm:$0xff]
        %v4204 = vld [vmem:[#allocation2 + $0x40] sm:$0xff]
        %v4205 = vld [vmem:[#allocation2 + $0x48] sm:$0xff]
        %v4206 = vld [vmem:[#allocation2 + $0x50] sm:$0xff]
        %v4207 = vld [vmem:[#allocation2 + $0x58] sm:$0xff]
        %v4208 = vld [vmem:[#allocation2 + $0x60] sm:$0xff]
        %v4209 = vld [vmem:[#allocation2 + $0x68] sm:$0xff]
        %v4210 = vld [vmem:[#allocation2 + $0x70] sm:$0xff]
        %v4211 = vld [vmem:[#allocation2 + $0x78] sm:$0xff]
        %v4212 = vld [vmem:[%s5] sm:$0xff]
        %v4213 = vld [vmem:[%s5 + $0x8] sm:$0xff]
        %v4214 = vld [vmem:[%s5 + $0x10] sm:$0xff]
        %v4215 = vld [vmem:[%s5 + $0x18] sm:$0xff]
        %v4216 = vld [vmem:[%s6] sm:$0xff]
        %v4217 = vld [vmem:[%s6 + $0x8] sm:$0xff]
        %v4218 = vld [vmem:[%s6 + $0x10] sm:$0xff]
        %v4219 = vld [vmem:[%s6 + $0x18] sm:$0xff]
        %4221 = vset.pattern.permute.xlu0 0
        %4222 = vperm.xlu0 %4221, %v4216
        %v4223 = vpop.permute.xlu0 %4222
        %4226 = vset.pattern.permute.xlu0 0
        %4227 = vperm.xlu0 %4226, %v4217
        %v4228 = vpop.permute.xlu0 %4227
        %4231 = vset.pattern.permute.xlu0 0
        %4232 = vperm.xlu0 %4231, %v4218
        %v4233 = vpop.permute.xlu0 %4232
        %4236 = vset.pattern.permute.xlu0 0
        %4237 = vperm.xlu0 %4236, %v4219
        %v4238 = vpop.permute.xlu0 %4237
        %vm4240 = vcmask 64512
        %v4242 = vsel %vm4240, %v4212, 0
        %v4245 = vsel %vm4240, %v4213, 0
        %v4248 = vsel %vm4240, %v4214, 0
        %v4251 = vsel %vm4240, %v4215, 0
        %4253 = vmatpush.msra.mxu0 0.0
        %4254 = vmatpush.msra.mxu0 0.0
        %4255 = vmatpush.msra.mxu0 0.0
        %4256 = vmatpush.msra.mxu0 0.0
        %4257 = vmatpush.msra.mxu0 0.0
        %4258 = vmatpush.msra.mxu0 0.0
        %4259 = vmatpush.msra.mxu0 0.0
        %4260 = vmatpush.msra.mxu0 0.0
        %4261 = vmatpush.msra.mxu0 0.0
        %4262 = vmatpush.msra.mxu0 0.0
        %4263 = vmatpush.msra.mxu0 0.0
        %4264 = vmatpush.msra.mxu0 0.0
        %4265 = vmatpush.msra.mxu0 0.0
        %4266 = vmatpush.msra.mxu0 0.0
        %4267 = vmatpush.msra.mxu0 0.0
        %4268 = vmatpush.msra.mxu0 %v4196
        %4269 = vmatmul.f32.gmra.mxu0 %v4242
        %v4270 = vpop.f32.mrf.mxu0
        %v4271 = vadd.f32 %v4223, %v4270
        %4272 = vmatmul.f32.gmra.mxu0 %v4245
        %v4273 = vpop.f32.mrf.mxu0
        %v4274 = vadd.f32 %v4228, %v4273
        %4275 = vmatmul.f32.gmra.mxu0 %v4248
        %v4276 = vpop.f32.mrf.mxu0
        %v4277 = vadd.f32 %v4233, %v4276
        %4278 = vmatmul.f32.gmra.mxu0 %v4251
        %v4279 = vpop.f32.mrf.mxu0
        %v4280 = vadd.f32 %v4238, %v4279
        %4281 = vdwg.mxu0
        %4282 = vmatpush.msra.mxu0 0.0
        %4283 = vmatpush.msra.mxu0 0.0
        %4284 = vmatpush.msra.mxu0 0.0
        %4285 = vmatpush.msra.mxu0 0.0
        %4286 = vmatpush.msra.mxu0 0.0
        %4287 = vmatpush.msra.mxu0 0.0
        %4288 = vmatpush.msra.mxu0 0.0
        %4289 = vmatpush.msra.mxu0 0.0
        %4290 = vmatpush.msra.mxu0 0.0
        %4291 = vmatpush.msra.mxu0 0.0
        %4292 = vmatpush.msra.mxu0 0.0
        %4293 = vmatpush.msra.mxu0 0.0
        %4294 = vmatpush.msra.mxu0 0.0
        %4295 = vmatpush.msra.mxu0 0.0
        %4296 = vmatpush.msra.mxu0 0.0
        %4297 = vmatpush.msra.mxu0 %v4197
        %4298 = vmatmul.f32.gmra.mxu0 %v4242
        %v4299 = vpop.f32.mrf.mxu0
        %v4300 = vadd.f32 %v4223, %v4299
        %4301 = vmatmul.f32.gmra.mxu0 %v4245
        %v4302 = vpop.f32.mrf.mxu0
        %v4303 = vadd.f32 %v4228, %v4302
        %4304 = vmatmul.f32.gmra.mxu0 %v4248
        %v4305 = vpop.f32.mrf.mxu0
        %v4306 = vadd.f32 %v4233, %v4305
        %4307 = vmatmul.f32.gmra.mxu0 %v4251
        %v4308 = vpop.f32.mrf.mxu0
        %v4309 = vadd.f32 %v4238, %v4308
        %4310 = vdwg.mxu0
        %4311 = vmatpush.msra.mxu0 0.0
        %4312 = vmatpush.msra.mxu0 0.0
        %4313 = vmatpush.msra.mxu0 0.0
        %4314 = vmatpush.msra.mxu0 0.0
        %4315 = vmatpush.msra.mxu0 0.0
        %4316 = vmatpush.msra.mxu0 0.0
        %4317 = vmatpush.msra.mxu0 0.0
        %4318 = vmatpush.msra.mxu0 0.0
        %4319 = vmatpush.msra.mxu0 0.0
        %4320 = vmatpush.msra.mxu0 0.0
        %4321 = vmatpush.msra.mxu0 0.0
        %4322 = vmatpush.msra.mxu0 0.0
        %4323 = vmatpush.msra.mxu0 0.0
        %4324 = vmatpush.msra.mxu0 0.0
        %4325 = vmatpush.msra.mxu0 0.0
        %4326 = vmatpush.msra.mxu0 %v4198
        %4327 = vmatmul.f32.gmra.mxu0 %v4242
        %v4328 = vpop.f32.mrf.mxu0
        %v4329 = vadd.f32 %v4223, %v4328
        %4330 = vmatmul.f32.gmra.mxu0 %v4245
        %v4331 = vpop.f32.mrf.mxu0
        %v4332 = vadd.f32 %v4228, %v4331
        %4333 = vmatmul.f32.gmra.mxu0 %v4248
        %v4334 = vpop.f32.mrf.mxu0
        %v4335 = vadd.f32 %v4233, %v4334
        %4336 = vmatmul.f32.gmra.mxu0 %v4251
        %v4337 = vpop.f32.mrf.mxu0
        %v4338 = vadd.f32 %v4238, %v4337
        %4339 = vdwg.mxu0
        %4340 = vmatpush.msra.mxu0 0.0
        %4341 = vmatpush.msra.mxu0 0.0
        %4342 = vmatpush.msra.mxu0 0.0
        %4343 = vmatpush.msra.mxu0 0.0
        %4344 = vmatpush.msra.mxu0 0.0
        %4345 = vmatpush.msra.mxu0 0.0
        %4346 = vmatpush.msra.mxu0 0.0
        %4347 = vmatpush.msra.mxu0 0.0
        %4348 = vmatpush.msra.mxu0 0.0
        %4349 = vmatpush.msra.mxu0 0.0
        %4350 = vmatpush.msra.mxu0 0.0
        %4351 = vmatpush.msra.mxu0 0.0
        %4352 = vmatpush.msra.mxu0 0.0
        %4353 = vmatpush.msra.mxu0 0.0
        %4354 = vmatpush.msra.mxu0 0.0
        %4355 = vmatpush.msra.mxu0 %v4199
        %4356 = vmatmul.f32.gmra.mxu0 %v4242
        %v4357 = vpop.f32.mrf.mxu0
        %v4358 = vadd.f32 %v4223, %v4357
        %4359 = vmatmul.f32.gmra.mxu0 %v4245
        %v4360 = vpop.f32.mrf.mxu0
        %v4361 = vadd.f32 %v4228, %v4360
        %4362 = vmatmul.f32.gmra.mxu0 %v4248
        %v4363 = vpop.f32.mrf.mxu0
        %v4364 = vadd.f32 %v4233, %v4363
        %4365 = vmatmul.f32.gmra.mxu0 %v4251
        %v4366 = vpop.f32.mrf.mxu0
        %v4367 = vadd.f32 %v4238, %v4366
        %4368 = vdwg.mxu0
        %4369 = vmatpush.msra.mxu0 0.0
        %4370 = vmatpush.msra.mxu0 0.0
        %4371 = vmatpush.msra.mxu0 0.0
        %4372 = vmatpush.msra.mxu0 0.0
        %4373 = vmatpush.msra.mxu0 0.0
        %4374 = vmatpush.msra.mxu0 0.0
        %4375 = vmatpush.msra.mxu0 0.0
        %4376 = vmatpush.msra.mxu0 0.0
        %4377 = vmatpush.msra.mxu0 0.0
        %4378 = vmatpush.msra.mxu0 0.0
        %4379 = vmatpush.msra.mxu0 0.0
        %4380 = vmatpush.msra.mxu0 0.0
        %4381 = vmatpush.msra.mxu0 0.0
        %4382 = vmatpush.msra.mxu0 0.0
        %4383 = vmatpush.msra.mxu0 0.0
        %4384 = vmatpush.msra.mxu0 %v4200
        %4385 = vmatmul.f32.gmra.mxu0 %v4242
        %v4386 = vpop.f32.mrf.mxu0
        %v4387 = vadd.f32 %v4223, %v4386
        %4388 = vmatmul.f32.gmra.mxu0 %v4245
        %v4389 = vpop.f32.mrf.mxu0
        %v4390 = vadd.f32 %v4228, %v4389
        %4391 = vmatmul.f32.gmra.mxu0 %v4248
        %v4392 = vpop.f32.mrf.mxu0
        %v4393 = vadd.f32 %v4233, %v4392
        %4394 = vmatmul.f32.gmra.mxu0 %v4251
        %v4395 = vpop.f32.mrf.mxu0
        %v4396 = vadd.f32 %v4238, %v4395
        %4397 = vdwg.mxu0
        %4398 = vmatpush.msra.mxu0 0.0
        %4399 = vmatpush.msra.mxu0 0.0
        %4400 = vmatpush.msra.mxu0 0.0
        %4401 = vmatpush.msra.mxu0 0.0
        %4402 = vmatpush.msra.mxu0 0.0
        %4403 = vmatpush.msra.mxu0 0.0
        %4404 = vmatpush.msra.mxu0 0.0
        %4405 = vmatpush.msra.mxu0 0.0
        %4406 = vmatpush.msra.mxu0 0.0
        %4407 = vmatpush.msra.mxu0 0.0
        %4408 = vmatpush.msra.mxu0 0.0
        %4409 = vmatpush.msra.mxu0 0.0
        %4410 = vmatpush.msra.mxu0 0.0
        %4411 = vmatpush.msra.mxu0 0.0
        %4412 = vmatpush.msra.mxu0 0.0
        %4413 = vmatpush.msra.mxu0 %v4201
        %4414 = vmatmul.f32.gmra.mxu0 %v4242
        %v4415 = vpop.f32.mrf.mxu0
        %v4416 = vadd.f32 %v4223, %v4415
        %4417 = vmatmul.f32.gmra.mxu0 %v4245
        %v4418 = vpop.f32.mrf.mxu0
        %v4419 = vadd.f32 %v4228, %v4418
        %4420 = vmatmul.f32.gmra.mxu0 %v4248
        %v4421 = vpop.f32.mrf.mxu0
        %v4422 = vadd.f32 %v4233, %v4421
        %4423 = vmatmul.f32.gmra.mxu0 %v4251
        %v4424 = vpop.f32.mrf.mxu0
        %v4425 = vadd.f32 %v4238, %v4424
        %4426 = vdwg.mxu0
        %4427 = vmatpush.msra.mxu0 0.0
        %4428 = vmatpush.msra.mxu0 0.0
        %4429 = vmatpush.msra.mxu0 0.0
        %4430 = vmatpush.msra.mxu0 0.0
        %4431 = vmatpush.msra.mxu0 0.0
        %4432 = vmatpush.msra.mxu0 0.0
        %4433 = vmatpush.msra.mxu0 0.0
        %4434 = vmatpush.msra.mxu0 0.0
        %4435 = vmatpush.msra.mxu0 0.0
        %4436 = vmatpush.msra.mxu0 0.0
        %4437 = vmatpush.msra.mxu0 0.0
        %4438 = vmatpush.msra.mxu0 0.0
        %4439 = vmatpush.msra.mxu0 0.0
        %4440 = vmatpush.msra.mxu0 0.0
        %4441 = vmatpush.msra.mxu0 0.0
        %4442 = vmatpush.msra.mxu0 %v4202
        %4443 = vmatmul.f32.gmra.mxu0 %v4242
        %v4444 = vpop.f32.mrf.mxu0
        %v4445 = vadd.f32 %v4223, %v4444
        %4446 = vmatmul.f32.gmra.mxu0 %v4245
        %v4447 = vpop.f32.mrf.mxu0
        %v4448 = vadd.f32 %v4228, %v4447
        %4449 = vmatmul.f32.gmra.mxu0 %v4248
        %v4450 = vpop.f32.mrf.mxu0
        %v4451 = vadd.f32 %v4233, %v4450
        %4452 = vmatmul.f32.gmra.mxu0 %v4251
        %v4453 = vpop.f32.mrf.mxu0
        %v4454 = vadd.f32 %v4238, %v4453
        %4455 = vdwg.mxu0
        %4456 = vmatpush.msra.mxu0 0.0
        %4457 = vmatpush.msra.mxu0 0.0
        %4458 = vmatpush.msra.mxu0 0.0
        %4459 = vmatpush.msra.mxu0 0.0
        %4460 = vmatpush.msra.mxu0 0.0
        %4461 = vmatpush.msra.mxu0 0.0
        %4462 = vmatpush.msra.mxu0 0.0
        %4463 = vmatpush.msra.mxu0 0.0
        %4464 = vmatpush.msra.mxu0 0.0
        %4465 = vmatpush.msra.mxu0 0.0
        %4466 = vmatpush.msra.mxu0 0.0
        %4467 = vmatpush.msra.mxu0 0.0
        %4468 = vmatpush.msra.mxu0 0.0
        %4469 = vmatpush.msra.mxu0 0.0
        %4470 = vmatpush.msra.mxu0 0.0
        %4471 = vmatpush.msra.mxu0 %v4203
        %4472 = vmatmul.f32.gmra.mxu0 %v4242
        %v4473 = vpop.f32.mrf.mxu0
        %v4474 = vadd.f32 %v4223, %v4473
        %4475 = vmatmul.f32.gmra.mxu0 %v4245
        %v4476 = vpop.f32.mrf.mxu0
        %v4477 = vadd.f32 %v4228, %v4476
        %4478 = vmatmul.f32.gmra.mxu0 %v4248
        %v4479 = vpop.f32.mrf.mxu0
        %v4480 = vadd.f32 %v4233, %v4479
        %4481 = vmatmul.f32.gmra.mxu0 %v4251
        %v4482 = vpop.f32.mrf.mxu0
        %v4483 = vadd.f32 %v4238, %v4482
        %4484 = vdwg.mxu0
        %4485 = vmatpush.msra.mxu0 0.0
        %4486 = vmatpush.msra.mxu0 0.0
        %4487 = vmatpush.msra.mxu0 0.0
        %4488 = vmatpush.msra.mxu0 0.0
        %4489 = vmatpush.msra.mxu0 0.0
        %4490 = vmatpush.msra.mxu0 0.0
        %4491 = vmatpush.msra.mxu0 0.0
        %4492 = vmatpush.msra.mxu0 0.0
        %4493 = vmatpush.msra.mxu0 0.0
        %4494 = vmatpush.msra.mxu0 0.0
        %4495 = vmatpush.msra.mxu0 0.0
        %4496 = vmatpush.msra.mxu0 0.0
        %4497 = vmatpush.msra.mxu0 0.0
        %4498 = vmatpush.msra.mxu0 0.0
        %4499 = vmatpush.msra.mxu0 0.0
        %4500 = vmatpush.msra.mxu0 %v4204
        %4501 = vmatmul.f32.gmra.mxu0 %v4242
        %v4502 = vpop.f32.mrf.mxu0
        %v4503 = vadd.f32 %v4223, %v4502
        %4504 = vmatmul.f32.gmra.mxu0 %v4245
        %v4505 = vpop.f32.mrf.mxu0
        %v4506 = vadd.f32 %v4228, %v4505
        %4507 = vmatmul.f32.gmra.mxu0 %v4248
        %v4508 = vpop.f32.mrf.mxu0
        %v4509 = vadd.f32 %v4233, %v4508
        %4510 = vmatmul.f32.gmra.mxu0 %v4251
        %v4511 = vpop.f32.mrf.mxu0
        %v4512 = vadd.f32 %v4238, %v4511
        %4513 = vdwg.mxu0
        %4514 = vmatpush.msra.mxu0 0.0
        %4515 = vmatpush.msra.mxu0 0.0
        %4516 = vmatpush.msra.mxu0 0.0
        %4517 = vmatpush.msra.mxu0 0.0
        %4518 = vmatpush.msra.mxu0 0.0
        %4519 = vmatpush.msra.mxu0 0.0
        %4520 = vmatpush.msra.mxu0 0.0
        %4521 = vmatpush.msra.mxu0 0.0
        %4522 = vmatpush.msra.mxu0 0.0
        %4523 = vmatpush.msra.mxu0 0.0
        %4524 = vmatpush.msra.mxu0 0.0
        %4525 = vmatpush.msra.mxu0 0.0
        %4526 = vmatpush.msra.mxu0 0.0
        %4527 = vmatpush.msra.mxu0 0.0
        %4528 = vmatpush.msra.mxu0 0.0
        %4529 = vmatpush.msra.mxu0 %v4205
        %4530 = vmatmul.f32.gmra.mxu0 %v4242
        %v4531 = vpop.f32.mrf.mxu0
        %v4532 = vadd.f32 %v4223, %v4531
        %4533 = vmatmul.f32.gmra.mxu0 %v4245
        %v4534 = vpop.f32.mrf.mxu0
        %v4535 = vadd.f32 %v4228, %v4534
        %4536 = vmatmul.f32.gmra.mxu0 %v4248
        %v4537 = vpop.f32.mrf.mxu0
        %v4538 = vadd.f32 %v4233, %v4537
        %4539 = vmatmul.f32.gmra.mxu0 %v4251
        %v4540 = vpop.f32.mrf.mxu0
        %v4541 = vadd.f32 %v4238, %v4540
        %4542 = vdwg.mxu0
        %4543 = vmatpush.msra.mxu0 0.0
        %4544 = vmatpush.msra.mxu0 0.0
        %4545 = vmatpush.msra.mxu0 0.0
        %4546 = vmatpush.msra.mxu0 0.0
        %4547 = vmatpush.msra.mxu0 0.0
        %4548 = vmatpush.msra.mxu0 0.0
        %4549 = vmatpush.msra.mxu0 0.0
        %4550 = vmatpush.msra.mxu0 0.0
        %4551 = vmatpush.msra.mxu0 0.0
        %4552 = vmatpush.msra.mxu0 0.0
        %4553 = vmatpush.msra.mxu0 0.0
        %4554 = vmatpush.msra.mxu0 0.0
        %4555 = vmatpush.msra.mxu0 0.0
        %4556 = vmatpush.msra.mxu0 0.0
        %4557 = vmatpush.msra.mxu0 0.0
        %4558 = vmatpush.msra.mxu0 %v4206
        %4559 = vmatmul.f32.gmra.mxu0 %v4242
        %v4560 = vpop.f32.mrf.mxu0
        %v4561 = vadd.f32 %v4223, %v4560
        %4562 = vmatmul.f32.gmra.mxu0 %v4245
        %v4563 = vpop.f32.mrf.mxu0
        %v4564 = vadd.f32 %v4228, %v4563
        %4565 = vmatmul.f32.gmra.mxu0 %v4248
        %v4566 = vpop.f32.mrf.mxu0
        %v4567 = vadd.f32 %v4233, %v4566
        %4568 = vmatmul.f32.gmra.mxu0 %v4251
        %v4569 = vpop.f32.mrf.mxu0
        %v4570 = vadd.f32 %v4238, %v4569
        %4571 = vdwg.mxu0
        %4572 = vmatpush.msra.mxu0 0.0
        %4573 = vmatpush.msra.mxu0 0.0
        %4574 = vmatpush.msra.mxu0 0.0
        %4575 = vmatpush.msra.mxu0 0.0
        %4576 = vmatpush.msra.mxu0 0.0
        %4577 = vmatpush.msra.mxu0 0.0
        %4578 = vmatpush.msra.mxu0 0.0
        %4579 = vmatpush.msra.mxu0 0.0
        %4580 = vmatpush.msra.mxu0 0.0
        %4581 = vmatpush.msra.mxu0 0.0
        %4582 = vmatpush.msra.mxu0 0.0
        %4583 = vmatpush.msra.mxu0 0.0
        %4584 = vmatpush.msra.mxu0 0.0
        %4585 = vmatpush.msra.mxu0 0.0
        %4586 = vmatpush.msra.mxu0 0.0
        %4587 = vmatpush.msra.mxu0 %v4207
        %4588 = vmatmul.f32.gmra.mxu0 %v4242
        %v4589 = vpop.f32.mrf.mxu0
        %v4590 = vadd.f32 %v4223, %v4589
        %4591 = vmatmul.f32.gmra.mxu0 %v4245
        %v4592 = vpop.f32.mrf.mxu0
        %v4593 = vadd.f32 %v4228, %v4592
        %4594 = vmatmul.f32.gmra.mxu0 %v4248
        %v4595 = vpop.f32.mrf.mxu0
        %v4596 = vadd.f32 %v4233, %v4595
        %4597 = vmatmul.f32.gmra.mxu0 %v4251
        %v4598 = vpop.f32.mrf.mxu0
        %v4599 = vadd.f32 %v4238, %v4598
        %4600 = vdwg.mxu0
        %4601 = vmatpush.msra.mxu0 0.0
        %4602 = vmatpush.msra.mxu0 0.0
        %4603 = vmatpush.msra.mxu0 0.0
        %4604 = vmatpush.msra.mxu0 0.0
        %4605 = vmatpush.msra.mxu0 0.0
        %4606 = vmatpush.msra.mxu0 0.0
        %4607 = vmatpush.msra.mxu0 0.0
        %4608 = vmatpush.msra.mxu0 0.0
        %4609 = vmatpush.msra.mxu0 0.0
        %4610 = vmatpush.msra.mxu0 0.0
        %4611 = vmatpush.msra.mxu0 0.0
        %4612 = vmatpush.msra.mxu0 0.0
        %4613 = vmatpush.msra.mxu0 0.0
        %4614 = vmatpush.msra.mxu0 0.0
        %4615 = vmatpush.msra.mxu0 0.0
        %4616 = vmatpush.msra.mxu0 %v4208
        %4617 = vmatmul.f32.gmra.mxu0 %v4242
        %v4618 = vpop.f32.mrf.mxu0
        %v4619 = vadd.f32 %v4223, %v4618
        %4620 = vmatmul.f32.gmra.mxu0 %v4245
        %v4621 = vpop.f32.mrf.mxu0
        %v4622 = vadd.f32 %v4228, %v4621
        %4623 = vmatmul.f32.gmra.mxu0 %v4248
        %v4624 = vpop.f32.mrf.mxu0
        %v4625 = vadd.f32 %v4233, %v4624
        %4626 = vmatmul.f32.gmra.mxu0 %v4251
        %v4627 = vpop.f32.mrf.mxu0
        %v4628 = vadd.f32 %v4238, %v4627
        %4629 = vdwg.mxu0
        %4630 = vmatpush.msra.mxu0 0.0
        %4631 = vmatpush.msra.mxu0 0.0
        %4632 = vmatpush.msra.mxu0 0.0
        %4633 = vmatpush.msra.mxu0 0.0
        %4634 = vmatpush.msra.mxu0 0.0
        %4635 = vmatpush.msra.mxu0 0.0
        %4636 = vmatpush.msra.mxu0 0.0
        %4637 = vmatpush.msra.mxu0 0.0
        %4638 = vmatpush.msra.mxu0 0.0
        %4639 = vmatpush.msra.mxu0 0.0
        %4640 = vmatpush.msra.mxu0 0.0
        %4641 = vmatpush.msra.mxu0 0.0
        %4642 = vmatpush.msra.mxu0 0.0
        %4643 = vmatpush.msra.mxu0 0.0
        %4644 = vmatpush.msra.mxu0 0.0
        %4645 = vmatpush.msra.mxu0 %v4209
        %4646 = vmatmul.f32.gmra.mxu0 %v4242
        %v4647 = vpop.f32.mrf.mxu0
        %v4648 = vadd.f32 %v4223, %v4647
        %4649 = vmatmul.f32.gmra.mxu0 %v4245
        %v4650 = vpop.f32.mrf.mxu0
        %v4651 = vadd.f32 %v4228, %v4650
        %4652 = vmatmul.f32.gmra.mxu0 %v4248
        %v4653 = vpop.f32.mrf.mxu0
        %v4654 = vadd.f32 %v4233, %v4653
        %4655 = vmatmul.f32.gmra.mxu0 %v4251
        %v4656 = vpop.f32.mrf.mxu0
        %v4657 = vadd.f32 %v4238, %v4656
        %4658 = vdwg.mxu0
        %4659 = vmatpush.msra.mxu0 0.0
        %4660 = vmatpush.msra.mxu0 0.0
        %4661 = vmatpush.msra.mxu0 0.0
        %4662 = vmatpush.msra.mxu0 0.0
        %4663 = vmatpush.msra.mxu0 0.0
        %4664 = vmatpush.msra.mxu0 0.0
        %4665 = vmatpush.msra.mxu0 0.0
        %4666 = vmatpush.msra.mxu0 0.0
        %4667 = vmatpush.msra.mxu0 0.0
        %4668 = vmatpush.msra.mxu0 0.0
        %4669 = vmatpush.msra.mxu0 0.0
        %4670 = vmatpush.msra.mxu0 0.0
        %4671 = vmatpush.msra.mxu0 0.0
        %4672 = vmatpush.msra.mxu0 0.0
        %4673 = vmatpush.msra.mxu0 0.0
        %4674 = vmatpush.msra.mxu0 %v4210
        %4675 = vmatmul.f32.gmra.mxu0 %v4242
        %v4676 = vpop.f32.mrf.mxu0
        %v4677 = vadd.f32 %v4223, %v4676
        %4678 = vmatmul.f32.gmra.mxu0 %v4245
        %v4679 = vpop.f32.mrf.mxu0
        %v4680 = vadd.f32 %v4228, %v4679
        %4681 = vmatmul.f32.gmra.mxu0 %v4248
        %v4682 = vpop.f32.mrf.mxu0
        %v4683 = vadd.f32 %v4233, %v4682
        %4684 = vmatmul.f32.gmra.mxu0 %v4251
        %v4685 = vpop.f32.mrf.mxu0
        %v4686 = vadd.f32 %v4238, %v4685
        %4687 = vdwg.mxu0
        %4688 = vmatpush.msra.mxu0 0.0
        %4689 = vmatpush.msra.mxu0 0.0
        %4690 = vmatpush.msra.mxu0 0.0
        %4691 = vmatpush.msra.mxu0 0.0
        %4692 = vmatpush.msra.mxu0 0.0
        %4693 = vmatpush.msra.mxu0 0.0
        %4694 = vmatpush.msra.mxu0 0.0
        %4695 = vmatpush.msra.mxu0 0.0
        %4696 = vmatpush.msra.mxu0 0.0
        %4697 = vmatpush.msra.mxu0 0.0
        %4698 = vmatpush.msra.mxu0 0.0
        %4699 = vmatpush.msra.mxu0 0.0
        %4700 = vmatpush.msra.mxu0 0.0
        %4701 = vmatpush.msra.mxu0 0.0
        %4702 = vmatpush.msra.mxu0 0.0
        %4703 = vmatpush.msra.mxu0 %v4211
        %4704 = vmatmul.f32.gmra.mxu0 %v4242
        %v4705 = vpop.f32.mrf.mxu0
        %v4706 = vadd.f32 %v4223, %v4705
        %4707 = vmatmul.f32.gmra.mxu0 %v4245
        %v4708 = vpop.f32.mrf.mxu0
        %v4709 = vadd.f32 %v4228, %v4708
        %4710 = vmatmul.f32.gmra.mxu0 %v4248
        %v4711 = vpop.f32.mrf.mxu0
        %v4712 = vadd.f32 %v4233, %v4711
        %4713 = vmatmul.f32.gmra.mxu0 %v4251
        %v4714 = vpop.f32.mrf.mxu0
        %v4715 = vadd.f32 %v4238, %v4714
        %4716 = vdwg.mxu0
        %v4717 = vtanh.pop %v4271
        %v4718 = vtanh.pop %v4300
        %v4719 = vtanh.pop %v4329
        %v4720 = vtanh.pop %v4358
        %v4721 = vtanh.pop %v4387
        %v4722 = vtanh.pop %v4416
        %v4723 = vtanh.pop %v4445
        %v4724 = vtanh.pop %v4474
        %v4725 = vtanh.pop %v4503
        %v4726 = vtanh.pop %v4532
        %v4727 = vtanh.pop %v4561
        %v4728 = vtanh.pop %v4590
        %v4729 = vtanh.pop %v4619
        %v4730 = vtanh.pop %v4648
        %v4731 = vtanh.pop %v4677
        %v4732 = vtanh.pop %v4706
        %v4733 = vtanh.pop %v4274
        %v4734 = vtanh.pop %v4303
        %v4735 = vtanh.pop %v4332
        %v4736 = vtanh.pop %v4361
        %v4737 = vtanh.pop %v4390
        %v4738 = vtanh.pop %v4419
        %v4739 = vtanh.pop %v4448
        %v4740 = vtanh.pop %v4477
        %v4741 = vtanh.pop %v4506
        %v4742 = vtanh.pop %v4535
        %v4743 = vtanh.pop %v4564
        %v4744 = vtanh.pop %v4593
        %v4745 = vtanh.pop %v4622
        %v4746 = vtanh.pop %v4651
        %v4747 = vtanh.pop %v4680
        %v4748 = vtanh.pop %v4709
        %v4749 = vtanh.pop %v4277
        %v4750 = vtanh.pop %v4306
        %v4751 = vtanh.pop %v4335
        %v4752 = vtanh.pop %v4364
        %v4753 = vtanh.pop %v4393
        %v4754 = vtanh.pop %v4422
        %v4755 = vtanh.pop %v4451
        %v4756 = vtanh.pop %v4480
        %v4757 = vtanh.pop %v4509
        %v4758 = vtanh.pop %v4538
        %v4759 = vtanh.pop %v4567
        %v4760 = vtanh.pop %v4596
        %v4761 = vtanh.pop %v4625
        %v4762 = vtanh.pop %v4654
        %v4763 = vtanh.pop %v4683
        %v4764 = vtanh.pop %v4712
        %v4765 = vtanh.pop %v4280
        %v4766 = vtanh.pop %v4309
        %v4767 = vtanh.pop %v4338
        %v4768 = vtanh.pop %v4367
        %v4769 = vtanh.pop %v4396
        %v4770 = vtanh.pop %v4425
        %v4771 = vtanh.pop %v4454
        %v4772 = vtanh.pop %v4483
        %v4773 = vtanh.pop %v4512
        %v4774 = vtanh.pop %v4541
        %v4775 = vtanh.pop %v4570
        %v4776 = vtanh.pop %v4599
        %v4777 = vtanh.pop %v4628
        %v4778 = vtanh.pop %v4657
        %v4779 = vtanh.pop %v4686
        %v4780 = vtanh.pop %v4715
        %v4781 = vld [vmem:[%s7] sm:$0x1]
        %vm4782 = vcmask 261120
        %v4784 = vsel %vm4782, %v4781, 0
        %4786 = vmatpush.msra.mxu0 0.0
        %4787 = vmatpush.msra.mxu0 0.0
        %4788 = vmatpush.msra.mxu0 0.0
        %4789 = vmatpush.msra.mxu0 0.0
        %4790 = vmatpush.msra.mxu0 0.0
        %4791 = vmatpush.msra.mxu0 0.0
        %4792 = vmatpush.msra.mxu0 0.0
        %4793 = vmatpush.msra.mxu0 0.0
        %4794 = vmatpush.msra.mxu0 0.0
        %4795 = vmatpush.msra.mxu0 0.0
        %4796 = vmatpush.msra.mxu0 0.0
        %4797 = vmatpush.msra.mxu0 0.0
        %4798 = vmatpush.msra.mxu0 %v4765
        %4799 = vmatpush.msra.mxu0 %v4749
        %4800 = vmatpush.msra.mxu0 %v4733
        %4801 = vmatpush.msra.mxu0 %v4717
        %4802 = vmatmul.f32.gmra.mxu0 %v4784
        %v4803 = vpop.f32.mrf.mxu0
        %v4804 = vadd.f32 0.0, %v4803
        %4805 = vdwg.mxu0
        %4806 = vmatpush.msra.mxu0 0.0
        %4807 = vmatpush.msra.mxu0 0.0
        %4808 = vmatpush.msra.mxu0 0.0
        %4809 = vmatpush.msra.mxu0 0.0
        %4810 = vmatpush.msra.mxu0 0.0
        %4811 = vmatpush.msra.mxu0 0.0
        %4812 = vmatpush.msra.mxu0 0.0
        %4813 = vmatpush.msra.mxu0 0.0
        %4814 = vmatpush.msra.mxu0 0.0
        %4815 = vmatpush.msra.mxu0 0.0
        %4816 = vmatpush.msra.mxu0 0.0
        %4817 = vmatpush.msra.mxu0 0.0
        %4818 = vmatpush.msra.mxu0 %v4766
        %4819 = vmatpush.msra.mxu0 %v4750
        %4820 = vmatpush.msra.mxu0 %v4734
        %4821 = vmatpush.msra.mxu0 %v4718
        %4822 = vmatmul.f32.gmra.mxu0 %v4784
        %v4823 = vpop.f32.mrf.mxu0
        %v4824 = vadd.f32 0.0, %v4823
        %4825 = vdwg.mxu0
        %4826 = vmatpush.msra.mxu0 0.0
        %4827 = vmatpush.msra.mxu0 0.0
        %4828 = vmatpush.msra.mxu0 0.0
        %4829 = vmatpush.msra.mxu0 0.0
        %4830 = vmatpush.msra.mxu0 0.0
        %4831 = vmatpush.msra.mxu0 0.0
        %4832 = vmatpush.msra.mxu0 0.0
        %4833 = vmatpush.msra.mxu0 0.0
        %4834 = vmatpush.msra.mxu0 0.0
        %4835 = vmatpush.msra.mxu0 0.0
        %4836 = vmatpush.msra.mxu0 0.0
        %4837 = vmatpush.msra.mxu0 0.0
        %4838 = vmatpush.msra.mxu0 %v4767
        %4839 = vmatpush.msra.mxu0 %v4751
        %4840 = vmatpush.msra.mxu0 %v4735
        %4841 = vmatpush.msra.mxu0 %v4719
        %4842 = vmatmul.f32.gmra.mxu0 %v4784
        %v4843 = vpop.f32.mrf.mxu0
        %v4844 = vadd.f32 0.0, %v4843
        %4845 = vdwg.mxu0
        %4846 = vmatpush.msra.mxu0 0.0
        %4847 = vmatpush.msra.mxu0 0.0
        %4848 = vmatpush.msra.mxu0 0.0
        %4849 = vmatpush.msra.mxu0 0.0
        %4850 = vmatpush.msra.mxu0 0.0
        %4851 = vmatpush.msra.mxu0 0.0
        %4852 = vmatpush.msra.mxu0 0.0
        %4853 = vmatpush.msra.mxu0 0.0
        %4854 = vmatpush.msra.mxu0 0.0
        %4855 = vmatpush.msra.mxu0 0.0
        %4856 = vmatpush.msra.mxu0 0.0
        %4857 = vmatpush.msra.mxu0 0.0
        %4858 = vmatpush.msra.mxu0 %v4768
        %4859 = vmatpush.msra.mxu0 %v4752
        %4860 = vmatpush.msra.mxu0 %v4736
        %4861 = vmatpush.msra.mxu0 %v4720
        %4862 = vmatmul.f32.gmra.mxu0 %v4784
        %v4863 = vpop.f32.mrf.mxu0
        %v4864 = vadd.f32 0.0, %v4863
        %4865 = vdwg.mxu0
        %4866 = vmatpush.msra.mxu0 0.0
        %4867 = vmatpush.msra.mxu0 0.0
        %4868 = vmatpush.msra.mxu0 0.0
        %4869 = vmatpush.msra.mxu0 0.0
        %4870 = vmatpush.msra.mxu0 0.0
        %4871 = vmatpush.msra.mxu0 0.0
        %4872 = vmatpush.msra.mxu0 0.0
        %4873 = vmatpush.msra.mxu0 0.0
        %4874 = vmatpush.msra.mxu0 0.0
        %4875 = vmatpush.msra.mxu0 0.0
        %4876 = vmatpush.msra.mxu0 0.0
        %4877 = vmatpush.msra.mxu0 0.0
        %4878 = vmatpush.msra.mxu0 %v4769
        %4879 = vmatpush.msra.mxu0 %v4753
        %4880 = vmatpush.msra.mxu0 %v4737
        %4881 = vmatpush.msra.mxu0 %v4721
        %4882 = vmatmul.f32.gmra.mxu0 %v4784
        %v4883 = vpop.f32.mrf.mxu0
        %v4884 = vadd.f32 0.0, %v4883
        %4885 = vdwg.mxu0
        %4886 = vmatpush.msra.mxu0 0.0
        %4887 = vmatpush.msra.mxu0 0.0
        %4888 = vmatpush.msra.mxu0 0.0
        %4889 = vmatpush.msra.mxu0 0.0
        %4890 = vmatpush.msra.mxu0 0.0
        %4891 = vmatpush.msra.mxu0 0.0
        %4892 = vmatpush.msra.mxu0 0.0
        %4893 = vmatpush.msra.mxu0 0.0
        %4894 = vmatpush.msra.mxu0 0.0
        %4895 = vmatpush.msra.mxu0 0.0
        %4896 = vmatpush.msra.mxu0 0.0
        %4897 = vmatpush.msra.mxu0 0.0
        %4898 = vmatpush.msra.mxu0 %v4770
        %4899 = vmatpush.msra.mxu0 %v4754
        %4900 = vmatpush.msra.mxu0 %v4738
        %4901 = vmatpush.msra.mxu0 %v4722
        %4902 = vmatmul.f32.gmra.mxu0 %v4784
        %v4903 = vpop.f32.mrf.mxu0
        %v4904 = vadd.f32 0.0, %v4903
        %4905 = vdwg.mxu0
        %4906 = vmatpush.msra.mxu0 0.0
        %4907 = vmatpush.msra.mxu0 0.0
        %4908 = vmatpush.msra.mxu0 0.0
        %4909 = vmatpush.msra.mxu0 0.0
        %4910 = vmatpush.msra.mxu0 0.0
        %4911 = vmatpush.msra.mxu0 0.0
        %4912 = vmatpush.msra.mxu0 0.0
        %4913 = vmatpush.msra.mxu0 0.0
        %4914 = vmatpush.msra.mxu0 0.0
        %4915 = vmatpush.msra.mxu0 0.0
        %4916 = vmatpush.msra.mxu0 0.0
        %4917 = vmatpush.msra.mxu0 0.0
        %4918 = vmatpush.msra.mxu0 %v4771
        %4919 = vmatpush.msra.mxu0 %v4755
        %4920 = vmatpush.msra.mxu0 %v4739
        %4921 = vmatpush.msra.mxu0 %v4723
        %4922 = vmatmul.f32.gmra.mxu0 %v4784
        %v4923 = vpop.f32.mrf.mxu0
        %v4924 = vadd.f32 0.0, %v4923
        %4925 = vdwg.mxu0
        %4926 = vmatpush.msra.mxu0 0.0
        %4927 = vmatpush.msra.mxu0 0.0
        %4928 = vmatpush.msra.mxu0 0.0
        %4929 = vmatpush.msra.mxu0 0.0
        %4930 = vmatpush.msra.mxu0 0.0
        %4931 = vmatpush.msra.mxu0 0.0
        %4932 = vmatpush.msra.mxu0 0.0
        %4933 = vmatpush.msra.mxu0 0.0
        %4934 = vmatpush.msra.mxu0 0.0
        %4935 = vmatpush.msra.mxu0 0.0
        %4936 = vmatpush.msra.mxu0 0.0
        %4937 = vmatpush.msra.mxu0 0.0
        %4938 = vmatpush.msra.mxu0 %v4772
        %4939 = vmatpush.msra.mxu0 %v4756
        %4940 = vmatpush.msra.mxu0 %v4740
        %4941 = vmatpush.msra.mxu0 %v4724
        %4942 = vmatmul.f32.gmra.mxu0 %v4784
        %v4943 = vpop.f32.mrf.mxu0
        %v4944 = vadd.f32 0.0, %v4943
        %4945 = vdwg.mxu0
        %4946 = vmatpush.msra.mxu0 0.0
        %4947 = vmatpush.msra.mxu0 0.0
        %4948 = vmatpush.msra.mxu0 0.0
        %4949 = vmatpush.msra.mxu0 0.0
        %4950 = vmatpush.msra.mxu0 0.0
        %4951 = vmatpush.msra.mxu0 0.0
        %4952 = vmatpush.msra.mxu0 0.0
        %4953 = vmatpush.msra.mxu0 0.0
        %4954 = vmatpush.msra.mxu0 0.0
        %4955 = vmatpush.msra.mxu0 0.0
        %4956 = vmatpush.msra.mxu0 0.0
        %4957 = vmatpush.msra.mxu0 0.0
        %4958 = vmatpush.msra.mxu0 %v4773
        %4959 = vmatpush.msra.mxu0 %v4757
        %4960 = vmatpush.msra.mxu0 %v4741
        %4961 = vmatpush.msra.mxu0 %v4725
        %4962 = vmatmul.f32.gmra.mxu0 %v4784
        %v4963 = vpop.f32.mrf.mxu0
        %v4964 = vadd.f32 0.0, %v4963
        %4965 = vdwg.mxu0
        %4966 = vmatpush.msra.mxu0 0.0
        %4967 = vmatpush.msra.mxu0 0.0
        %4968 = vmatpush.msra.mxu0 0.0
        %4969 = vmatpush.msra.mxu0 0.0
        %4970 = vmatpush.msra.mxu0 0.0
        %4971 = vmatpush.msra.mxu0 0.0
        %4972 = vmatpush.msra.mxu0 0.0
        %4973 = vmatpush.msra.mxu0 0.0
        %4974 = vmatpush.msra.mxu0 0.0
        %4975 = vmatpush.msra.mxu0 0.0
        %4976 = vmatpush.msra.mxu0 0.0
        %4977 = vmatpush.msra.mxu0 0.0
        %4978 = vmatpush.msra.mxu0 %v4774
        %4979 = vmatpush.msra.mxu0 %v4758
        %4980 = vmatpush.msra.mxu0 %v4742
        %4981 = vmatpush.msra.mxu0 %v4726
        %4982 = vmatmul.f32.gmra.mxu0 %v4784
        %v4983 = vpop.f32.mrf.mxu0
        %v4984 = vadd.f32 0.0, %v4983
        %4985 = vdwg.mxu0
        %4986 = vmatpush.msra.mxu0 0.0
        %4987 = vmatpush.msra.mxu0 0.0
        %4988 = vmatpush.msra.mxu0 0.0
        %4989 = vmatpush.msra.mxu0 0.0
        %4990 = vmatpush.msra.mxu0 0.0
        %4991 = vmatpush.msra.mxu0 0.0
        %4992 = vmatpush.msra.mxu0 0.0
        %4993 = vmatpush.msra.mxu0 0.0
        %4994 = vmatpush.msra.mxu0 0.0
        %4995 = vmatpush.msra.mxu0 0.0
        %4996 = vmatpush.msra.mxu0 0.0
        %4997 = vmatpush.msra.mxu0 0.0
        %4998 = vmatpush.msra.mxu0 %v4775
        %4999 = vmatpush.msra.mxu0 %v4759
        %5000 = vmatpush.msra.mxu0 %v4743
        %5001 = vmatpush.msra.mxu0 %v4727
        %5002 = vmatmul.f32.gmra.mxu0 %v4784
        %v5003 = vpop.f32.mrf.mxu0
        %v5004 = vadd.f32 0.0, %v5003
        %5005 = vdwg.mxu0
        %5006 = vmatpush.msra.mxu0 0.0
        %5007 = vmatpush.msra.mxu0 0.0
        %5008 = vmatpush.msra.mxu0 0.0
        %5009 = vmatpush.msra.mxu0 0.0
        %5010 = vmatpush.msra.mxu0 0.0
        %5011 = vmatpush.msra.mxu0 0.0
        %5012 = vmatpush.msra.mxu0 0.0
        %5013 = vmatpush.msra.mxu0 0.0
        %5014 = vmatpush.msra.mxu0 0.0
        %5015 = vmatpush.msra.mxu0 0.0
        %5016 = vmatpush.msra.mxu0 0.0
        %5017 = vmatpush.msra.mxu0 0.0
        %5018 = vmatpush.msra.mxu0 %v4776
        %5019 = vmatpush.msra.mxu0 %v4760
        %5020 = vmatpush.msra.mxu0 %v4744
        %5021 = vmatpush.msra.mxu0 %v4728
        %5022 = vmatmul.f32.gmra.mxu0 %v4784
        %v5023 = vpop.f32.mrf.mxu0
        %v5024 = vadd.f32 0.0, %v5023
        %5025 = vdwg.mxu0
        %5026 = vmatpush.msra.mxu0 0.0
        %5027 = vmatpush.msra.mxu0 0.0
        %5028 = vmatpush.msra.mxu0 0.0
        %5029 = vmatpush.msra.mxu0 0.0
        %5030 = vmatpush.msra.mxu0 0.0
        %5031 = vmatpush.msra.mxu0 0.0
        %5032 = vmatpush.msra.mxu0 0.0
        %5033 = vmatpush.msra.mxu0 0.0
        %5034 = vmatpush.msra.mxu0 0.0
        %5035 = vmatpush.msra.mxu0 0.0
        %5036 = vmatpush.msra.mxu0 0.0
        %5037 = vmatpush.msra.mxu0 0.0
        %5038 = vmatpush.msra.mxu0 %v4777
        %5039 = vmatpush.msra.mxu0 %v4761
        %5040 = vmatpush.msra.mxu0 %v4745
        %5041 = vmatpush.msra.mxu0 %v4729
        %5042 = vmatmul.f32.gmra.mxu0 %v4784
        %v5043 = vpop.f32.mrf.mxu0
        %v5044 = vadd.f32 0.0, %v5043
        %5045 = vdwg.mxu0
        %5046 = vmatpush.msra.mxu0 0.0
        %5047 = vmatpush.msra.mxu0 0.0
        %5048 = vmatpush.msra.mxu0 0.0
        %5049 = vmatpush.msra.mxu0 0.0
        %5050 = vmatpush.msra.mxu0 0.0
        %5051 = vmatpush.msra.mxu0 0.0
        %5052 = vmatpush.msra.mxu0 0.0
        %5053 = vmatpush.msra.mxu0 0.0
        %5054 = vmatpush.msra.mxu0 0.0
        %5055 = vmatpush.msra.mxu0 0.0
        %5056 = vmatpush.msra.mxu0 0.0
        %5057 = vmatpush.msra.mxu0 0.0
        %5058 = vmatpush.msra.mxu0 %v4778
        %5059 = vmatpush.msra.mxu0 %v4762
        %5060 = vmatpush.msra.mxu0 %v4746
        %5061 = vmatpush.msra.mxu0 %v4730
        %5062 = vmatmul.f32.gmra.mxu0 %v4784
        %v5063 = vpop.f32.mrf.mxu0
        %v5064 = vadd.f32 0.0, %v5063
        %5065 = vdwg.mxu0
        %5066 = vmatpush.msra.mxu0 0.0
        %5067 = vmatpush.msra.mxu0 0.0
        %5068 = vmatpush.msra.mxu0 0.0
        %5069 = vmatpush.msra.mxu0 0.0
        %5070 = vmatpush.msra.mxu0 0.0
        %5071 = vmatpush.msra.mxu0 0.0
        %5072 = vmatpush.msra.mxu0 0.0
        %5073 = vmatpush.msra.mxu0 0.0
        %5074 = vmatpush.msra.mxu0 0.0
        %5075 = vmatpush.msra.mxu0 0.0
        %5076 = vmatpush.msra.mxu0 0.0
        %5077 = vmatpush.msra.mxu0 0.0
        %5078 = vmatpush.msra.mxu0 %v4779
        %5079 = vmatpush.msra.mxu0 %v4763
        %5080 = vmatpush.msra.mxu0 %v4747
        %5081 = vmatpush.msra.mxu0 %v4731
        %5082 = vmatmul.f32.gmra.mxu0 %v4784
        %v5083 = vpop.f32.mrf.mxu0
        %v5084 = vadd.f32 0.0, %v5083
        %5085 = vdwg.mxu0
        %5086 = vmatpush.msra.mxu0 0.0
        %5087 = vmatpush.msra.mxu0 0.0
        %5088 = vmatpush.msra.mxu0 0.0
        %5089 = vmatpush.msra.mxu0 0.0
        %5090 = vmatpush.msra.mxu0 0.0
        %5091 = vmatpush.msra.mxu0 0.0
        %5092 = vmatpush.msra.mxu0 0.0
        %5093 = vmatpush.msra.mxu0 0.0
        %5094 = vmatpush.msra.mxu0 0.0
        %5095 = vmatpush.msra.mxu0 0.0
        %5096 = vmatpush.msra.mxu0 0.0
        %5097 = vmatpush.msra.mxu0 0.0
        %5098 = vmatpush.msra.mxu0 %v4780
        %5099 = vmatpush.msra.mxu0 %v4764
        %5100 = vmatpush.msra.mxu0 %v4748
        %5101 = vmatpush.msra.mxu0 %v4732
        %5102 = vmatmul.f32.gmra.mxu0 %v4784
        %v5103 = vpop.f32.mrf.mxu0
        %v5104 = vadd.f32 0.0, %v5103
        %5105 = vdwg.mxu0
        %v5108 = vrot.slane %v4824, 7
        %v5109 = vsel %vm442, %v4804, %v5108
        %v5111 = vlaneseq
        %vm5112 = vcmp.ge.s32.totalorder %v5111, 0
        %vm5113 = vcmp.lt.s32.totalorder %v5111, 256
        %vm5114 = vmand %vm5112, %vm5113
        %5115 = vst.msk [vmem:[#allocation3] ss:$8 sm:$0x3] %vm5114, %v5109
        %5116 = vst.msk [vmem:[#allocation3] ss:$8 sm:$0x0] %vm5114, %v5109
        %v5119 = vrot.slane %v4864, 7
        %v5120 = vsel %vm442, %v4844, %v5119
        %s5122 = scalar_lea.vmem [#allocation3], 1
        %5123 = vst.msk [vmem:[%s5122] ss:$8 sm:$0x3] %vm5114, %v5120
        %5124 = vst.msk [vmem:[%s5122] ss:$8 sm:$0x0] %vm5114, %v5120
        %v5127 = vrot.slane %v4904, 7
        %v5128 = vsel %vm442, %v4884, %v5127
        %s5130 = scalar_lea.vmem [#allocation3], 2
        %5131 = vst.msk [vmem:[%s5130] ss:$8 sm:$0x3] %vm5114, %v5128
        %5132 = vst.msk [vmem:[%s5130] ss:$8 sm:$0x0] %vm5114, %v5128
        %v5135 = vrot.slane %v4944, 7
        %v5136 = vsel %vm442, %v4924, %v5135
        %s5138 = scalar_lea.vmem [#allocation3], 3
        %5139 = vst.msk [vmem:[%s5138] ss:$8 sm:$0x3] %vm5114, %v5136
        %5140 = vst.msk [vmem:[%s5138] ss:$8 sm:$0x0] %vm5114, %v5136
        %v5143 = vrot.slane %v4984, 7
        %v5144 = vsel %vm442, %v4964, %v5143
        %s5146 = scalar_lea.vmem [#allocation3], 4
        %5147 = vst.msk [vmem:[%s5146] ss:$8 sm:$0x3] %vm5114, %v5144
        %5148 = vst.msk [vmem:[%s5146] ss:$8 sm:$0x0] %vm5114, %v5144
        %v5151 = vrot.slane %v5024, 7
        %v5152 = vsel %vm442, %v5004, %v5151
        %s5154 = scalar_lea.vmem [#allocation3], 5
        %5155 = vst.msk [vmem:[%s5154] ss:$8 sm:$0x3] %vm5114, %v5152
        %5156 = vst.msk [vmem:[%s5154] ss:$8 sm:$0x0] %vm5114, %v5152
        %v5159 = vrot.slane %v5064, 7
        %v5160 = vsel %vm442, %v5044, %v5159
        %s5162 = scalar_lea.vmem [#allocation3], 6
        %5163 = vst.msk [vmem:[%s5162] ss:$8 sm:$0x3] %vm5114, %v5160
        %5164 = vst.msk [vmem:[%s5162] ss:$8 sm:$0x0] %vm5114, %v5160
        %v5167 = vrot.slane %v5104, 7
        %v5168 = vsel %vm442, %v5084, %v5167
        %s5170 = scalar_lea.vmem [#allocation3], 7
        %5171 = vst.msk [vmem:[%s5170] ss:$8 sm:$0x3] %vm5114, %v5168
        %5172 = vst.msk [vmem:[%s5170] ss:$8 sm:$0x0] %vm5114, %v5168
        %v5173 = vld [vmem:[#allocation3] sm:$0xff]
        %v5174 = vld [vmem:[#allocation3 + $0x8] sm:$0xff]
        %v5175 = vld [vmem:[%s416] sm:$0xff]
        %v5176 = vld [vmem:[%s416 + $0x8] sm:$0xff]
        %v5177 = vadd.f32 %v5173, %v5175
        %v5178 = vadd.f32 %v5174, %v5176
        %v5179 = vmax.f32 %v5177, %v5178
        %5180 = vmax.xlane.f32.xlu0 %v5179
        %v5181 = vpop.xlane.xlu0 %5180
        %v5182 = vsub.f32 %v5177, %v5181
        %v5183 = vsub.f32 %v5178, %v5181
        %v5184 = vmul.f32 %v5182, 1.442695
        %v5185 = vpow.pop %v5184
        %v5186 = vmul.f32 %v5183, 1.442695
        %v5187 = vpow.pop %v5186
        %v5188 = vadd.f32 %v5185, %v5187
        %5189 = vadd.xlane.f32.xlu0 %v5188
        %v5190 = vpop.xlane.xlu0 %5189
        %v5191 = vrcp.pop %v5190
        %v5192 = vmul.f32 %v5190, %v5191
        %v5193 = vsub.f32 1.0, %v5192
        %v5194 = vmul.f32 %v5191, %v5193
        %v5195 = vadd.f32 %v5191, %v5194
        %vm5196 = vweird.f32 %v5190
        %vm5197 = vweird.f32 %v5191
        %vm5198 = vmor %vm5196, %vm5197
        %v5199 = vsel %vm5198, %v5191, %v5195
        %v5200 = vand.u32 2147483647, %v5190
        %vm5201 = vcmp.eq.f32.partialorder %v5200, 8.507059e+37
        %v5202 = vand.u32 %v5190, 2147483648
        %v5203 = vor.u32 1.1754944e-38, %v5202
        %v5204 = vsel %vm5201, %v5203, %v5199
        %v5205 = vmul.f32 %v5185, %v5204
        %v5206 = vmul.f32 %v5187, %v5204
        %v5207 = vld [vmem:[%s421] sm:$0xff]
        %v5208 = vld [vmem:[%s421 + $0x8] sm:$0xff]
        %vm5209 = vcmp.ne.s32.totalorder %v5207, 0
        %vm5210 = vcmp.ne.s32.totalorder %v5208, 0
        %v5211 = vsel %vm5209, %v5205, 1e-08
        %v5212 = vsel %vm5210, %v5206, 1e-08
        %5213 = vst [vmem:[%s400] sm:$0xff] %v5211
        %5214 = vst [vmem:[%s400 + $0x8] sm:$0xff] %v5212
        %v5217 = vrot.slane %v5212, 7
        %v5218 = vsel %vm442, %v5211, %v5217
        %v5219 = vsel %vm444, %v5211, %v5217
        %v5220 = vrot.slane %v5219, 1
        %v5221 = vsel %vm447, %v5211, %v5217
        %v5222 = vrot.slane %v5221, 2
        %v5223 = vsel %vm450, %v5211, %v5217
        %v5224 = vrot.slane %v5223, 3
        %v5225 = vsel %vm453, %v5211, %v5217
        %v5226 = vrot.slane %v5225, 4
        %v5227 = vsel %vm456, %v5211, %v5217
        %v5228 = vrot.slane %v5227, 5
        %v5229 = vsel %vm459, %v5211, %v5217
        %v5230 = vrot.slane %v5229, 6
        %v5231 = vsel %vm462, %v5217, %v5211
        %v5232 = vrot.slane %v5231, 7
        %v5233 = vperm.slane %v5218, 0
        %v5234 = vperm.slane %v5218, 1
        %v5235 = vperm.slane %v5220, 0
        %v5236 = vperm.slane %v5220, 1
        %v5237 = vperm.slane %v5222, 0
        %v5238 = vperm.slane %v5222, 1
        %v5239 = vperm.slane %v5224, 0
        %v5240 = vperm.slane %v5224, 1
        %v5241 = vperm.slane %v5226, 0
        %v5242 = vperm.slane %v5226, 1
        %v5243 = vperm.slane %v5228, 0
        %v5244 = vperm.slane %v5228, 1
        %v5245 = vperm.slane %v5230, 0
        %v5246 = vperm.slane %v5230, 1
        %v5247 = vperm.slane %v5232, 0
        %v5248 = vperm.slane %v5232, 1
        %v5265 = vpack.c.bf16 %v5234, %v5233
        %v5266 = vpack.c.bf16 %v5236, %v5235
        %v5267 = vpack.c.bf16 %v5238, %v5237
        %v5268 = vpack.c.bf16 %v5240, %v5239
        %v5269 = vpack.c.bf16 %v5242, %v5241
        %v5270 = vpack.c.bf16 %v5244, %v5243
        %v5271 = vpack.c.bf16 %v5246, %v5245
        %v5272 = vpack.c.bf16 %v5248, %v5247
        %v5273 = vld [vmem:[%s427] sm:$0xf]
        %v5274 = vld [vmem:[%s427 + $0x4] sm:$0xf]
        %v5275 = vld [vmem:[%s427 + $0x8] sm:$0xf]
        %v5276 = vld [vmem:[%s427 + $0xc] sm:$0xf]
        %v5277 = vld [vmem:[%s427 + $0x10] sm:$0xf]
        %v5278 = vld [vmem:[%s427 + $0x14] sm:$0xf]
        %v5279 = vld [vmem:[%s427 + $0x18] sm:$0xf]
        %v5280 = vld [vmem:[%s427 + $0x1c] sm:$0xf]
        %v5281 = vld [vmem:[%s427 + $0x20] sm:$0xf]
        %v5282 = vld [vmem:[%s427 + $0x24] sm:$0xf]
        %v5283 = vld [vmem:[%s427 + $0x28] sm:$0xf]
        %v5284 = vld [vmem:[%s427 + $0x2c] sm:$0xf]
        %v5285 = vld [vmem:[%s427 + $0x30] sm:$0xf]
        %v5286 = vld [vmem:[%s427 + $0x34] sm:$0xf]
        %v5287 = vld [vmem:[%s427 + $0x38] sm:$0xf]
        %v5288 = vld [vmem:[%s427 + $0x3c] sm:$0xf]
        %v5289 = vld [vmem:[%s427 + $0x40] sm:$0xf]
        %v5290 = vld [vmem:[%s427 + $0x44] sm:$0xf]
        %v5291 = vld [vmem:[%s427 + $0x48] sm:$0xf]
        %v5292 = vld [vmem:[%s427 + $0x4c] sm:$0xf]
        %v5293 = vld [vmem:[%s427 + $0x50] sm:$0xf]
        %v5294 = vld [vmem:[%s427 + $0x54] sm:$0xf]
        %v5295 = vld [vmem:[%s427 + $0x58] sm:$0xf]
        %v5296 = vld [vmem:[%s427 + $0x5c] sm:$0xf]
        %v5297 = vld [vmem:[%s427 + $0x60] sm:$0xf]
        %v5298 = vld [vmem:[%s427 + $0x64] sm:$0xf]
        %v5299 = vld [vmem:[%s427 + $0x68] sm:$0xf]
        %v5300 = vld [vmem:[%s427 + $0x6c] sm:$0xf]
        %v5301 = vld [vmem:[%s427 + $0x70] sm:$0xf]
        %v5302 = vld [vmem:[%s427 + $0x74] sm:$0xf]
        %v5303 = vld [vmem:[%s427 + $0x78] sm:$0xf]
        %v5304 = vld [vmem:[%s427 + $0x7c] sm:$0xf]
        %v5305 = vld [vmem:[%s427 + $0x80] sm:$0xf]
        %v5306 = vld [vmem:[%s427 + $0x84] sm:$0xf]
        %v5307 = vld [vmem:[%s427 + $0x88] sm:$0xf]
        %v5308 = vld [vmem:[%s427 + $0x8c] sm:$0xf]
        %v5309 = vld [vmem:[%s427 + $0x90] sm:$0xf]
        %v5310 = vld [vmem:[%s427 + $0x94] sm:$0xf]
        %v5311 = vld [vmem:[%s427 + $0x98] sm:$0xf]
        %v5312 = vld [vmem:[%s427 + $0x9c] sm:$0xf]
        %v5313 = vld [vmem:[%s427 + $0xa0] sm:$0xf]
        %v5314 = vld [vmem:[%s427 + $0xa4] sm:$0xf]
        %v5315 = vld [vmem:[%s427 + $0xa8] sm:$0xf]
        %v5316 = vld [vmem:[%s427 + $0xac] sm:$0xf]
        %v5317 = vld [vmem:[%s427 + $0xb0] sm:$0xf]
        %v5318 = vld [vmem:[%s427 + $0xb4] sm:$0xf]
        %v5319 = vld [vmem:[%s427 + $0xb8] sm:$0xf]
        %v5320 = vld [vmem:[%s427 + $0xbc] sm:$0xf]
        %v5321 = vld [vmem:[%s427 + $0xc0] sm:$0xf]
        %v5322 = vld [vmem:[%s427 + $0xc4] sm:$0xf]
        %v5323 = vld [vmem:[%s427 + $0xc8] sm:$0xf]
        %v5324 = vld [vmem:[%s427 + $0xcc] sm:$0xf]
        %v5325 = vld [vmem:[%s427 + $0xd0] sm:$0xf]
        %v5326 = vld [vmem:[%s427 + $0xd4] sm:$0xf]
        %v5327 = vld [vmem:[%s427 + $0xd8] sm:$0xf]
        %v5328 = vld [vmem:[%s427 + $0xdc] sm:$0xf]
        %v5329 = vld [vmem:[%s427 + $0xe0] sm:$0xf]
        %v5330 = vld [vmem:[%s427 + $0xe4] sm:$0xf]
        %v5331 = vld [vmem:[%s427 + $0xe8] sm:$0xf]
        %v5332 = vld [vmem:[%s427 + $0xec] sm:$0xf]
        %v5333 = vld [vmem:[%s427 + $0xf0] sm:$0xf]
        %v5334 = vld [vmem:[%s427 + $0xf4] sm:$0xf]
        %v5335 = vld [vmem:[%s427 + $0xf8] sm:$0xf]
        %v5336 = vld [vmem:[%s427 + $0xfc] sm:$0xf]
        %v5337 = vld [vmem:[%s427 + $0x100] sm:$0xf]
        %v5338 = vld [vmem:[%s427 + $0x104] sm:$0xf]
        %v5339 = vld [vmem:[%s427 + $0x108] sm:$0xf]
        %v5340 = vld [vmem:[%s427 + $0x10c] sm:$0xf]
        %v5341 = vld [vmem:[%s427 + $0x110] sm:$0xf]
        %v5342 = vld [vmem:[%s427 + $0x114] sm:$0xf]
        %v5343 = vld [vmem:[%s427 + $0x118] sm:$0xf]
        %v5344 = vld [vmem:[%s427 + $0x11c] sm:$0xf]
        %v5345 = vld [vmem:[%s427 + $0x120] sm:$0xf]
        %v5346 = vld [vmem:[%s427 + $0x124] sm:$0xf]
        %v5347 = vld [vmem:[%s427 + $0x128] sm:$0xf]
        %v5348 = vld [vmem:[%s427 + $0x12c] sm:$0xf]
        %v5349 = vld [vmem:[%s427 + $0x130] sm:$0xf]
        %v5350 = vld [vmem:[%s427 + $0x134] sm:$0xf]
        %v5351 = vld [vmem:[%s427 + $0x138] sm:$0xf]
        %v5352 = vld [vmem:[%s427 + $0x13c] sm:$0xf]
        %v5353 = vld [vmem:[%s427 + $0x140] sm:$0xf]
        %v5354 = vld [vmem:[%s427 + $0x144] sm:$0xf]
        %v5355 = vld [vmem:[%s427 + $0x148] sm:$0xf]
        %v5356 = vld [vmem:[%s427 + $0x14c] sm:$0xf]
        %v5357 = vld [vmem:[%s427 + $0x150] sm:$0xf]
        %v5358 = vld [vmem:[%s427 + $0x154] sm:$0xf]
        %v5359 = vld [vmem:[%s427 + $0x158] sm:$0xf]
        %v5360 = vld [vmem:[%s427 + $0x15c] sm:$0xf]
        %v5361 = vld [vmem:[%s427 + $0x160] sm:$0xf]
        %v5362 = vld [vmem:[%s427 + $0x164] sm:$0xf]
        %v5363 = vld [vmem:[%s427 + $0x168] sm:$0xf]
        %v5364 = vld [vmem:[%s427 + $0x16c] sm:$0xf]
        %v5365 = vld [vmem:[%s427 + $0x170] sm:$0xf]
        %v5366 = vld [vmem:[%s427 + $0x174] sm:$0xf]
        %v5367 = vld [vmem:[%s427 + $0x178] sm:$0xf]
        %v5368 = vld [vmem:[%s427 + $0x17c] sm:$0xf]
        %v5369 = vld [vmem:[%s427 + $0x180] sm:$0xf]
        %v5370 = vld [vmem:[%s427 + $0x184] sm:$0xf]
        %v5371 = vld [vmem:[%s427 + $0x188] sm:$0xf]
        %v5372 = vld [vmem:[%s427 + $0x18c] sm:$0xf]
        %v5373 = vld [vmem:[%s427 + $0x190] sm:$0xf]
        %v5374 = vld [vmem:[%s427 + $0x194] sm:$0xf]
        %v5375 = vld [vmem:[%s427 + $0x198] sm:$0xf]
        %v5376 = vld [vmem:[%s427 + $0x19c] sm:$0xf]
        %v5377 = vld [vmem:[%s427 + $0x1a0] sm:$0xf]
        %v5378 = vld [vmem:[%s427 + $0x1a4] sm:$0xf]
        %v5379 = vld [vmem:[%s427 + $0x1a8] sm:$0xf]
        %v5380 = vld [vmem:[%s427 + $0x1ac] sm:$0xf]
        %v5381 = vld [vmem:[%s427 + $0x1b0] sm:$0xf]
        %v5382 = vld [vmem:[%s427 + $0x1b4] sm:$0xf]
        %v5383 = vld [vmem:[%s427 + $0x1b8] sm:$0xf]
        %v5384 = vld [vmem:[%s427 + $0x1bc] sm:$0xf]
        %v5385 = vld [vmem:[%s427 + $0x1c0] sm:$0xf]
        %v5386 = vld [vmem:[%s427 + $0x1c4] sm:$0xf]
        %v5387 = vld [vmem:[%s427 + $0x1c8] sm:$0xf]
        %v5388 = vld [vmem:[%s427 + $0x1cc] sm:$0xf]
        %v5389 = vld [vmem:[%s427 + $0x1d0] sm:$0xf]
        %v5390 = vld [vmem:[%s427 + $0x1d4] sm:$0xf]
        %v5391 = vld [vmem:[%s427 + $0x1d8] sm:$0xf]
        %v5392 = vld [vmem:[%s427 + $0x1dc] sm:$0xf]
        %v5393 = vld [vmem:[%s427 + $0x1e0] sm:$0xf]
        %v5394 = vld [vmem:[%s427 + $0x1e4] sm:$0xf]
        %v5395 = vld [vmem:[%s427 + $0x1e8] sm:$0xf]
        %v5396 = vld [vmem:[%s427 + $0x1ec] sm:$0xf]
        %v5397 = vld [vmem:[%s427 + $0x1f0] sm:$0xf]
        %v5398 = vld [vmem:[%s427 + $0x1f4] sm:$0xf]
        %v5399 = vld [vmem:[%s427 + $0x1f8] sm:$0xf]
        %v5400 = vld [vmem:[%s427 + $0x1fc] sm:$0xf]
        %v5401 = vld [vmem:[%s427 + $0x200] sm:$0xf]
        %v5402 = vld [vmem:[%s427 + $0x204] sm:$0xf]
        %v5403 = vld [vmem:[%s427 + $0x208] sm:$0xf]
        %v5404 = vld [vmem:[%s427 + $0x20c] sm:$0xf]
        %v5405 = vld [vmem:[%s427 + $0x210] sm:$0xf]
        %v5406 = vld [vmem:[%s427 + $0x214] sm:$0xf]
        %v5407 = vld [vmem:[%s427 + $0x218] sm:$0xf]
        %v5408 = vld [vmem:[%s427 + $0x21c] sm:$0xf]
        %v5409 = vld [vmem:[%s427 + $0x220] sm:$0xf]
        %v5410 = vld [vmem:[%s427 + $0x224] sm:$0xf]
        %v5411 = vld [vmem:[%s427 + $0x228] sm:$0xf]
        %v5412 = vld [vmem:[%s427 + $0x22c] sm:$0xf]
        %v5413 = vld [vmem:[%s427 + $0x230] sm:$0xf]
        %v5414 = vld [vmem:[%s427 + $0x234] sm:$0xf]
        %v5415 = vld [vmem:[%s427 + $0x238] sm:$0xf]
        %v5416 = vld [vmem:[%s427 + $0x23c] sm:$0xf]
        %v5417 = vld [vmem:[%s427 + $0x240] sm:$0xf]
        %v5418 = vld [vmem:[%s427 + $0x244] sm:$0xf]
        %v5419 = vld [vmem:[%s427 + $0x248] sm:$0xf]
        %v5420 = vld [vmem:[%s427 + $0x24c] sm:$0xf]
        %v5421 = vld [vmem:[%s427 + $0x250] sm:$0xf]
        %v5422 = vld [vmem:[%s427 + $0x254] sm:$0xf]
        %v5423 = vld [vmem:[%s427 + $0x258] sm:$0xf]
        %v5424 = vld [vmem:[%s427 + $0x25c] sm:$0xf]
        %v5425 = vld [vmem:[%s427 + $0x260] sm:$0xf]
        %v5426 = vld [vmem:[%s427 + $0x264] sm:$0xf]
        %v5427 = vld [vmem:[%s427 + $0x268] sm:$0xf]
        %v5428 = vld [vmem:[%s427 + $0x26c] sm:$0xf]
        %v5429 = vld [vmem:[%s427 + $0x270] sm:$0xf]
        %v5430 = vld [vmem:[%s427 + $0x274] sm:$0xf]
        %v5431 = vld [vmem:[%s427 + $0x278] sm:$0xf]
        %v5432 = vld [vmem:[%s427 + $0x27c] sm:$0xf]
        %v5433 = vld [vmem:[%s427 + $0x280] sm:$0xf]
        %v5434 = vld [vmem:[%s427 + $0x284] sm:$0xf]
        %v5435 = vld [vmem:[%s427 + $0x288] sm:$0xf]
        %v5436 = vld [vmem:[%s427 + $0x28c] sm:$0xf]
        %v5437 = vld [vmem:[%s427 + $0x290] sm:$0xf]
        %v5438 = vld [vmem:[%s427 + $0x294] sm:$0xf]
        %v5439 = vld [vmem:[%s427 + $0x298] sm:$0xf]
        %v5440 = vld [vmem:[%s427 + $0x29c] sm:$0xf]
        %v5441 = vld [vmem:[%s427 + $0x2a0] sm:$0xf]
        %v5442 = vld [vmem:[%s427 + $0x2a4] sm:$0xf]
        %v5443 = vld [vmem:[%s427 + $0x2a8] sm:$0xf]
        %v5444 = vld [vmem:[%s427 + $0x2ac] sm:$0xf]
        %v5445 = vld [vmem:[%s427 + $0x2b0] sm:$0xf]
        %v5446 = vld [vmem:[%s427 + $0x2b4] sm:$0xf]
        %v5447 = vld [vmem:[%s427 + $0x2b8] sm:$0xf]
        %v5448 = vld [vmem:[%s427 + $0x2bc] sm:$0xf]
        %v5449 = vld [vmem:[%s427 + $0x2c0] sm:$0xf]
        %v5450 = vld [vmem:[%s427 + $0x2c4] sm:$0xf]
        %v5451 = vld [vmem:[%s427 + $0x2c8] sm:$0xf]
        %v5452 = vld [vmem:[%s427 + $0x2cc] sm:$0xf]
        %v5453 = vld [vmem:[%s427 + $0x2d0] sm:$0xf]
        %v5454 = vld [vmem:[%s427 + $0x2d4] sm:$0xf]
        %v5455 = vld [vmem:[%s427 + $0x2d8] sm:$0xf]
        %v5456 = vld [vmem:[%s427 + $0x2dc] sm:$0xf]
        %v5457 = vld [vmem:[%s427 + $0x2e0] sm:$0xf]
        %v5458 = vld [vmem:[%s427 + $0x2e4] sm:$0xf]
        %v5459 = vld [vmem:[%s427 + $0x2e8] sm:$0xf]
        %v5460 = vld [vmem:[%s427 + $0x2ec] sm:$0xf]
        %v5461 = vld [vmem:[%s427 + $0x2f0] sm:$0xf]
        %v5462 = vld [vmem:[%s427 + $0x2f4] sm:$0xf]
        %v5463 = vld [vmem:[%s427 + $0x2f8] sm:$0xf]
        %v5464 = vld [vmem:[%s427 + $0x2fc] sm:$0xf]
        %v5465 = vld [vmem:[%s427 + $0x300] sm:$0xf]
        %v5466 = vld [vmem:[%s427 + $0x304] sm:$0xf]
        %v5467 = vld [vmem:[%s427 + $0x308] sm:$0xf]
        %v5468 = vld [vmem:[%s427 + $0x30c] sm:$0xf]
        %v5469 = vld [vmem:[%s427 + $0x310] sm:$0xf]
        %v5470 = vld [vmem:[%s427 + $0x314] sm:$0xf]
        %v5471 = vld [vmem:[%s427 + $0x318] sm:$0xf]
        %v5472 = vld [vmem:[%s427 + $0x31c] sm:$0xf]
        %v5473 = vld [vmem:[%s427 + $0x320] sm:$0xf]
        %v5474 = vld [vmem:[%s427 + $0x324] sm:$0xf]
        %v5475 = vld [vmem:[%s427 + $0x328] sm:$0xf]
        %v5476 = vld [vmem:[%s427 + $0x32c] sm:$0xf]
        %v5477 = vld [vmem:[%s427 + $0x330] sm:$0xf]
        %v5478 = vld [vmem:[%s427 + $0x334] sm:$0xf]
        %v5479 = vld [vmem:[%s427 + $0x338] sm:$0xf]
        %v5480 = vld [vmem:[%s427 + $0x33c] sm:$0xf]
        %v5481 = vld [vmem:[%s427 + $0x340] sm:$0xf]
        %v5482 = vld [vmem:[%s427 + $0x344] sm:$0xf]
        %v5483 = vld [vmem:[%s427 + $0x348] sm:$0xf]
        %v5484 = vld [vmem:[%s427 + $0x34c] sm:$0xf]
        %v5485 = vld [vmem:[%s427 + $0x350] sm:$0xf]
        %v5486 = vld [vmem:[%s427 + $0x354] sm:$0xf]
        %v5487 = vld [vmem:[%s427 + $0x358] sm:$0xf]
        %v5488 = vld [vmem:[%s427 + $0x35c] sm:$0xf]
        %v5489 = vld [vmem:[%s427 + $0x360] sm:$0xf]
        %v5490 = vld [vmem:[%s427 + $0x364] sm:$0xf]
        %v5491 = vld [vmem:[%s427 + $0x368] sm:$0xf]
        %v5492 = vld [vmem:[%s427 + $0x36c] sm:$0xf]
        %v5493 = vld [vmem:[%s427 + $0x370] sm:$0xf]
        %v5494 = vld [vmem:[%s427 + $0x374] sm:$0xf]
        %v5495 = vld [vmem:[%s427 + $0x378] sm:$0xf]
        %v5496 = vld [vmem:[%s427 + $0x37c] sm:$0xf]
        %v5497 = vld [vmem:[%s427 + $0x380] sm:$0xf]
        %v5498 = vld [vmem:[%s427 + $0x384] sm:$0xf]
        %v5499 = vld [vmem:[%s427 + $0x388] sm:$0xf]
        %v5500 = vld [vmem:[%s427 + $0x38c] sm:$0xf]
        %v5501 = vld [vmem:[%s427 + $0x390] sm:$0xf]
        %v5502 = vld [vmem:[%s427 + $0x394] sm:$0xf]
        %v5503 = vld [vmem:[%s427 + $0x398] sm:$0xf]
        %v5504 = vld [vmem:[%s427 + $0x39c] sm:$0xf]
        %v5505 = vld [vmem:[%s427 + $0x3a0] sm:$0xf]
        %v5506 = vld [vmem:[%s427 + $0x3a4] sm:$0xf]
        %v5507 = vld [vmem:[%s427 + $0x3a8] sm:$0xf]
        %v5508 = vld [vmem:[%s427 + $0x3ac] sm:$0xf]
        %v5509 = vld [vmem:[%s427 + $0x3b0] sm:$0xf]
        %v5510 = vld [vmem:[%s427 + $0x3b4] sm:$0xf]
        %v5511 = vld [vmem:[%s427 + $0x3b8] sm:$0xf]
        %v5512 = vld [vmem:[%s427 + $0x3bc] sm:$0xf]
        %v5513 = vld [vmem:[%s427 + $0x3c0] sm:$0xf]
        %v5514 = vld [vmem:[%s427 + $0x3c4] sm:$0xf]
        %v5515 = vld [vmem:[%s427 + $0x3c8] sm:$0xf]
        %v5516 = vld [vmem:[%s427 + $0x3cc] sm:$0xf]
        %v5517 = vld [vmem:[%s427 + $0x3d0] sm:$0xf]
        %v5518 = vld [vmem:[%s427 + $0x3d4] sm:$0xf]
        %v5519 = vld [vmem:[%s427 + $0x3d8] sm:$0xf]
        %v5520 = vld [vmem:[%s427 + $0x3dc] sm:$0xf]
        %v5521 = vld [vmem:[%s427 + $0x3e0] sm:$0xf]
        %v5522 = vld [vmem:[%s427 + $0x3e4] sm:$0xf]
        %v5523 = vld [vmem:[%s427 + $0x3e8] sm:$0xf]
        %v5524 = vld [vmem:[%s427 + $0x3ec] sm:$0xf]
        %v5525 = vld [vmem:[%s427 + $0x3f0] sm:$0xf]
        %v5526 = vld [vmem:[%s427 + $0x3f4] sm:$0xf]
        %v5527 = vld [vmem:[%s427 + $0x3f8] sm:$0xf]
        %v5528 = vld [vmem:[%s427 + $0x3fc] sm:$0xf]
        %v5530 = vunpack.c.l.b16 %v5265
        %v5531 = vunpack.c.h.b16 %v5265
        %v5532 = vpack.c.b16 %v5530, %v5530
        %v5533 = vpack.c.b16 %v5531, %v5531
        %v5568 = vunpack.c.l.b16 %v5273
        %v5569 = vunpack.c.l.b16 %v5274
        %v5570 = vunpack.c.l.b16 %v5275
        %v5571 = vunpack.c.l.b16 %v5276
        %v5572 = vunpack.c.l.b16 %v5277
        %v5573 = vunpack.c.l.b16 %v5278
        %v5574 = vunpack.c.l.b16 %v5279
        %v5575 = vunpack.c.l.b16 %v5280
        %v5576 = vunpack.c.l.b16 %v5281
        %v5577 = vunpack.c.l.b16 %v5282
        %v5578 = vunpack.c.l.b16 %v5283
        %v5579 = vunpack.c.l.b16 %v5284
        %v5580 = vunpack.c.l.b16 %v5285
        %v5581 = vunpack.c.l.b16 %v5286
        %v5582 = vunpack.c.l.b16 %v5287
        %v5583 = vunpack.c.l.b16 %v5288
        %v5584 = vunpack.c.l.b16 %v5289
        %v5585 = vunpack.c.l.b16 %v5290
        %v5586 = vunpack.c.l.b16 %v5291
        %v5587 = vunpack.c.l.b16 %v5292
        %v5588 = vunpack.c.l.b16 %v5293
        %v5589 = vunpack.c.l.b16 %v5294
        %v5590 = vunpack.c.l.b16 %v5295
        %v5591 = vunpack.c.l.b16 %v5296
        %v5592 = vunpack.c.l.b16 %v5297
        %v5593 = vunpack.c.l.b16 %v5298
        %v5594 = vunpack.c.l.b16 %v5299
        %v5595 = vunpack.c.l.b16 %v5300
        %v5596 = vunpack.c.l.b16 %v5301
        %v5597 = vunpack.c.l.b16 %v5302
        %v5598 = vunpack.c.l.b16 %v5303
        %v5599 = vunpack.c.l.b16 %v5304
        %v5600 = vpack.c.b16 %v5569, %v5568
        %v5601 = vpack.c.b16 %v5571, %v5570
        %v5602 = vpack.c.b16 %v5573, %v5572
        %v5603 = vpack.c.b16 %v5575, %v5574
        %v5604 = vpack.c.b16 %v5577, %v5576
        %v5605 = vpack.c.b16 %v5579, %v5578
        %v5606 = vpack.c.b16 %v5581, %v5580
        %v5607 = vpack.c.b16 %v5583, %v5582
        %v5608 = vpack.c.b16 %v5585, %v5584
        %v5609 = vpack.c.b16 %v5587, %v5586
        %v5610 = vpack.c.b16 %v5589, %v5588
        %v5611 = vpack.c.b16 %v5591, %v5590
        %v5612 = vpack.c.b16 %v5593, %v5592
        %v5613 = vpack.c.b16 %v5595, %v5594
        %v5614 = vpack.c.b16 %v5597, %v5596
        %v5615 = vpack.c.b16 %v5599, %v5598
        %5632 = vmatpush.bf16.msra.mxu0 %v5607
        %5633 = vmatpush.bf16.msra.mxu0 %v5606
        %5634 = vmatpush.bf16.msra.mxu0 %v5605
        %5635 = vmatpush.bf16.msra.mxu0 %v5604
        %5636 = vmatpush.bf16.msra.mxu0 %v5603
        %5637 = vmatpush.bf16.msra.mxu0 %v5602
        %5638 = vmatpush.bf16.msra.mxu0 %v5601
        %5639 = vmatpush.bf16.msra.mxu0 %v5600
        %5640 = vmatmul.bf16.gmra.mxu0 %v5532
        %v5641 = vpop.f32.mrf.mxu0
        %v5642 = vadd.f32 0.0, %v5641
        %v5643 = vpop.f32.mrf.mxu0
        %5644 = vdwg.mxu0
        %5645 = vmatpush.bf16.msra.mxu0 %v5615
        %5646 = vmatpush.bf16.msra.mxu0 %v5614
        %5647 = vmatpush.bf16.msra.mxu0 %v5613
        %5648 = vmatpush.bf16.msra.mxu0 %v5612
        %5649 = vmatpush.bf16.msra.mxu0 %v5611
        %5650 = vmatpush.bf16.msra.mxu0 %v5610
        %5651 = vmatpush.bf16.msra.mxu0 %v5609
        %5652 = vmatpush.bf16.msra.mxu0 %v5608
        %5653 = vmatmul.bf16.gmra.mxu0 %v5533
        %v5654 = vpop.f32.mrf.mxu0
        %v5655 = vadd.f32 %v5642, %v5654
        %v5656 = vpop.f32.mrf.mxu0
        %5657 = vdwg.mxu0
        %v5659 = vunpack.c.l.b16 %v5266
        %v5660 = vunpack.c.h.b16 %v5266
        %v5661 = vpack.c.b16 %v5659, %v5659
        %v5662 = vpack.c.b16 %v5660, %v5660
        %v5697 = vunpack.c.l.b16 %v5305
        %v5698 = vunpack.c.l.b16 %v5306
        %v5699 = vunpack.c.l.b16 %v5307
        %v5700 = vunpack.c.l.b16 %v5308
        %v5701 = vunpack.c.l.b16 %v5309
        %v5702 = vunpack.c.l.b16 %v5310
        %v5703 = vunpack.c.l.b16 %v5311
        %v5704 = vunpack.c.l.b16 %v5312
        %v5705 = vunpack.c.l.b16 %v5313
        %v5706 = vunpack.c.l.b16 %v5314
        %v5707 = vunpack.c.l.b16 %v5315
        %v5708 = vunpack.c.l.b16 %v5316
        %v5709 = vunpack.c.l.b16 %v5317
        %v5710 = vunpack.c.l.b16 %v5318
        %v5711 = vunpack.c.l.b16 %v5319
        %v5712 = vunpack.c.l.b16 %v5320
        %v5713 = vunpack.c.l.b16 %v5321
        %v5714 = vunpack.c.l.b16 %v5322
        %v5715 = vunpack.c.l.b16 %v5323
        %v5716 = vunpack.c.l.b16 %v5324
        %v5717 = vunpack.c.l.b16 %v5325
        %v5718 = vunpack.c.l.b16 %v5326
        %v5719 = vunpack.c.l.b16 %v5327
        %v5720 = vunpack.c.l.b16 %v5328
        %v5721 = vunpack.c.l.b16 %v5329
        %v5722 = vunpack.c.l.b16 %v5330
        %v5723 = vunpack.c.l.b16 %v5331
        %v5724 = vunpack.c.l.b16 %v5332
        %v5725 = vunpack.c.l.b16 %v5333
        %v5726 = vunpack.c.l.b16 %v5334
        %v5727 = vunpack.c.l.b16 %v5335
        %v5728 = vunpack.c.l.b16 %v5336
        %v5729 = vpack.c.b16 %v5698, %v5697
        %v5730 = vpack.c.b16 %v5700, %v5699
        %v5731 = vpack.c.b16 %v5702, %v5701
        %v5732 = vpack.c.b16 %v5704, %v5703
        %v5733 = vpack.c.b16 %v5706, %v5705
        %v5734 = vpack.c.b16 %v5708, %v5707
        %v5735 = vpack.c.b16 %v5710, %v5709
        %v5736 = vpack.c.b16 %v5712, %v5711
        %v5737 = vpack.c.b16 %v5714, %v5713
        %v5738 = vpack.c.b16 %v5716, %v5715
        %v5739 = vpack.c.b16 %v5718, %v5717
        %v5740 = vpack.c.b16 %v5720, %v5719
        %v5741 = vpack.c.b16 %v5722, %v5721
        %v5742 = vpack.c.b16 %v5724, %v5723
        %v5743 = vpack.c.b16 %v5726, %v5725
        %v5744 = vpack.c.b16 %v5728, %v5727
        %5761 = vmatpush.bf16.msra.mxu0 %v5736
        %5762 = vmatpush.bf16.msra.mxu0 %v5735
        %5763 = vmatpush.bf16.msra.mxu0 %v5734
        %5764 = vmatpush.bf16.msra.mxu0 %v5733
        %5765 = vmatpush.bf16.msra.mxu0 %v5732
        %5766 = vmatpush.bf16.msra.mxu0 %v5731
        %5767 = vmatpush.bf16.msra.mxu0 %v5730
        %5768 = vmatpush.bf16.msra.mxu0 %v5729
        %5769 = vmatmul.bf16.gmra.mxu0 %v5661
        %v5770 = vpop.f32.mrf.mxu0
        %v5771 = vadd.f32 0.0, %v5770
        %v5772 = vpop.f32.mrf.mxu0
        %5773 = vdwg.mxu0
        %5774 = vmatpush.bf16.msra.mxu0 %v5744
        %5775 = vmatpush.bf16.msra.mxu0 %v5743
        %5776 = vmatpush.bf16.msra.mxu0 %v5742
        %5777 = vmatpush.bf16.msra.mxu0 %v5741
        %5778 = vmatpush.bf16.msra.mxu0 %v5740
        %5779 = vmatpush.bf16.msra.mxu0 %v5739
        %5780 = vmatpush.bf16.msra.mxu0 %v5738
        %5781 = vmatpush.bf16.msra.mxu0 %v5737
        %5782 = vmatmul.bf16.gmra.mxu0 %v5662
        %v5783 = vpop.f32.mrf.mxu0
        %v5784 = vadd.f32 %v5771, %v5783
        %v5785 = vpop.f32.mrf.mxu0
        %5786 = vdwg.mxu0
        %v5788 = vunpack.c.l.b16 %v5267
        %v5789 = vunpack.c.h.b16 %v5267
        %v5790 = vpack.c.b16 %v5788, %v5788
        %v5791 = vpack.c.b16 %v5789, %v5789
        %v5826 = vunpack.c.l.b16 %v5337
        %v5827 = vunpack.c.l.b16 %v5338
        %v5828 = vunpack.c.l.b16 %v5339
        %v5829 = vunpack.c.l.b16 %v5340
        %v5830 = vunpack.c.l.b16 %v5341
        %v5831 = vunpack.c.l.b16 %v5342
        %v5832 = vunpack.c.l.b16 %v5343
        %v5833 = vunpack.c.l.b16 %v5344
        %v5834 = vunpack.c.l.b16 %v5345
        %v5835 = vunpack.c.l.b16 %v5346
        %v5836 = vunpack.c.l.b16 %v5347
        %v5837 = vunpack.c.l.b16 %v5348
        %v5838 = vunpack.c.l.b16 %v5349
        %v5839 = vunpack.c.l.b16 %v5350
        %v5840 = vunpack.c.l.b16 %v5351
        %v5841 = vunpack.c.l.b16 %v5352
        %v5842 = vunpack.c.l.b16 %v5353
        %v5843 = vunpack.c.l.b16 %v5354
        %v5844 = vunpack.c.l.b16 %v5355
        %v5845 = vunpack.c.l.b16 %v5356
        %v5846 = vunpack.c.l.b16 %v5357
        %v5847 = vunpack.c.l.b16 %v5358
        %v5848 = vunpack.c.l.b16 %v5359
        %v5849 = vunpack.c.l.b16 %v5360
        %v5850 = vunpack.c.l.b16 %v5361
        %v5851 = vunpack.c.l.b16 %v5362
        %v5852 = vunpack.c.l.b16 %v5363
        %v5853 = vunpack.c.l.b16 %v5364
        %v5854 = vunpack.c.l.b16 %v5365
        %v5855 = vunpack.c.l.b16 %v5366
        %v5856 = vunpack.c.l.b16 %v5367
        %v5857 = vunpack.c.l.b16 %v5368
        %v5858 = vpack.c.b16 %v5827, %v5826
        %v5859 = vpack.c.b16 %v5829, %v5828
        %v5860 = vpack.c.b16 %v5831, %v5830
        %v5861 = vpack.c.b16 %v5833, %v5832
        %v5862 = vpack.c.b16 %v5835, %v5834
        %v5863 = vpack.c.b16 %v5837, %v5836
        %v5864 = vpack.c.b16 %v5839, %v5838
        %v5865 = vpack.c.b16 %v5841, %v5840
        %v5866 = vpack.c.b16 %v5843, %v5842
        %v5867 = vpack.c.b16 %v5845, %v5844
        %v5868 = vpack.c.b16 %v5847, %v5846
        %v5869 = vpack.c.b16 %v5849, %v5848
        %v5870 = vpack.c.b16 %v5851, %v5850
        %v5871 = vpack.c.b16 %v5853, %v5852
        %v5872 = vpack.c.b16 %v5855, %v5854
        %v5873 = vpack.c.b16 %v5857, %v5856
        %5890 = vmatpush.bf16.msra.mxu0 %v5865
        %5891 = vmatpush.bf16.msra.mxu0 %v5864
        %5892 = vmatpush.bf16.msra.mxu0 %v5863
        %5893 = vmatpush.bf16.msra.mxu0 %v5862
        %5894 = vmatpush.bf16.msra.mxu0 %v5861
        %5895 = vmatpush.bf16.msra.mxu0 %v5860
        %5896 = vmatpush.bf16.msra.mxu0 %v5859
        %5897 = vmatpush.bf16.msra.mxu0 %v5858
        %5898 = vmatmul.bf16.gmra.mxu0 %v5790
        %v5899 = vpop.f32.mrf.mxu0
        %v5900 = vadd.f32 0.0, %v5899
        %v5901 = vpop.f32.mrf.mxu0
        %5902 = vdwg.mxu0
        %5903 = vmatpush.bf16.msra.mxu0 %v5873
        %5904 = vmatpush.bf16.msra.mxu0 %v5872
        %5905 = vmatpush.bf16.msra.mxu0 %v5871
        %5906 = vmatpush.bf16.msra.mxu0 %v5870
        %5907 = vmatpush.bf16.msra.mxu0 %v5869
        %5908 = vmatpush.bf16.msra.mxu0 %v5868
        %5909 = vmatpush.bf16.msra.mxu0 %v5867
        %5910 = vmatpush.bf16.msra.mxu0 %v5866
        %5911 = vmatmul.bf16.gmra.mxu0 %v5791
        %v5912 = vpop.f32.mrf.mxu0
        %v5913 = vadd.f32 %v5900, %v5912
        %v5914 = vpop.f32.mrf.mxu0
        %5915 = vdwg.mxu0
        %v5917 = vunpack.c.l.b16 %v5268
        %v5918 = vunpack.c.h.b16 %v5268
        %v5919 = vpack.c.b16 %v5917, %v5917
        %v5920 = vpack.c.b16 %v5918, %v5918
        %v5955 = vunpack.c.l.b16 %v5369
        %v5956 = vunpack.c.l.b16 %v5370
        %v5957 = vunpack.c.l.b16 %v5371
        %v5958 = vunpack.c.l.b16 %v5372
        %v5959 = vunpack.c.l.b16 %v5373
        %v5960 = vunpack.c.l.b16 %v5374
        %v5961 = vunpack.c.l.b16 %v5375
        %v5962 = vunpack.c.l.b16 %v5376
        %v5963 = vunpack.c.l.b16 %v5377
        %v5964 = vunpack.c.l.b16 %v5378
        %v5965 = vunpack.c.l.b16 %v5379
        %v5966 = vunpack.c.l.b16 %v5380
        %v5967 = vunpack.c.l.b16 %v5381
        %v5968 = vunpack.c.l.b16 %v5382
        %v5969 = vunpack.c.l.b16 %v5383
        %v5970 = vunpack.c.l.b16 %v5384
        %v5971 = vunpack.c.l.b16 %v5385
        %v5972 = vunpack.c.l.b16 %v5386
        %v5973 = vunpack.c.l.b16 %v5387
        %v5974 = vunpack.c.l.b16 %v5388
        %v5975 = vunpack.c.l.b16 %v5389
        %v5976 = vunpack.c.l.b16 %v5390
        %v5977 = vunpack.c.l.b16 %v5391
        %v5978 = vunpack.c.l.b16 %v5392
        %v5979 = vunpack.c.l.b16 %v5393
        %v5980 = vunpack.c.l.b16 %v5394
        %v5981 = vunpack.c.l.b16 %v5395
        %v5982 = vunpack.c.l.b16 %v5396
        %v5983 = vunpack.c.l.b16 %v5397
        %v5984 = vunpack.c.l.b16 %v5398
        %v5985 = vunpack.c.l.b16 %v5399
        %v5986 = vunpack.c.l.b16 %v5400
        %v5987 = vpack.c.b16 %v5956, %v5955
        %v5988 = vpack.c.b16 %v5958, %v5957
        %v5989 = vpack.c.b16 %v5960, %v5959
        %v5990 = vpack.c.b16 %v5962, %v5961
        %v5991 = vpack.c.b16 %v5964, %v5963
        %v5992 = vpack.c.b16 %v5966, %v5965
        %v5993 = vpack.c.b16 %v5968, %v5967
        %v5994 = vpack.c.b16 %v5970, %v5969
        %v5995 = vpack.c.b16 %v5972, %v5971
        %v5996 = vpack.c.b16 %v5974, %v5973
        %v5997 = vpack.c.b16 %v5976, %v5975
        %v5998 = vpack.c.b16 %v5978, %v5977
        %v5999 = vpack.c.b16 %v5980, %v5979
        %v6000 = vpack.c.b16 %v5982, %v5981
        %v6001 = vpack.c.b16 %v5984, %v5983
        %v6002 = vpack.c.b16 %v5986, %v5985
        %6019 = vmatpush.bf16.msra.mxu0 %v5994
        %6020 = vmatpush.bf16.msra.mxu0 %v5993
        %6021 = vmatpush.bf16.msra.mxu0 %v5992
        %6022 = vmatpush.bf16.msra.mxu0 %v5991
        %6023 = vmatpush.bf16.msra.mxu0 %v5990
        %6024 = vmatpush.bf16.msra.mxu0 %v5989
        %6025 = vmatpush.bf16.msra.mxu0 %v5988
        %6026 = vmatpush.bf16.msra.mxu0 %v5987
        %6027 = vmatmul.bf16.gmra.mxu0 %v5919
        %v6028 = vpop.f32.mrf.mxu0
        %v6029 = vadd.f32 0.0, %v6028
        %v6030 = vpop.f32.mrf.mxu0
        %6031 = vdwg.mxu0
        %6032 = vmatpush.bf16.msra.mxu0 %v6002
        %6033 = vmatpush.bf16.msra.mxu0 %v6001
        %6034 = vmatpush.bf16.msra.mxu0 %v6000
        %6035 = vmatpush.bf16.msra.mxu0 %v5999
        %6036 = vmatpush.bf16.msra.mxu0 %v5998
        %6037 = vmatpush.bf16.msra.mxu0 %v5997
        %6038 = vmatpush.bf16.msra.mxu0 %v5996
        %6039 = vmatpush.bf16.msra.mxu0 %v5995
        %6040 = vmatmul.bf16.gmra.mxu0 %v5920
        %v6041 = vpop.f32.mrf.mxu0
        %v6042 = vadd.f32 %v6029, %v6041
        %v6043 = vpop.f32.mrf.mxu0
        %6044 = vdwg.mxu0
        %v6046 = vunpack.c.l.b16 %v5269
        %v6047 = vunpack.c.h.b16 %v5269
        %v6048 = vpack.c.b16 %v6046, %v6046
        %v6049 = vpack.c.b16 %v6047, %v6047
        %v6084 = vunpack.c.l.b16 %v5401
        %v6085 = vunpack.c.l.b16 %v5402
        %v6086 = vunpack.c.l.b16 %v5403
        %v6087 = vunpack.c.l.b16 %v5404
        %v6088 = vunpack.c.l.b16 %v5405
        %v6089 = vunpack.c.l.b16 %v5406
        %v6090 = vunpack.c.l.b16 %v5407
        %v6091 = vunpack.c.l.b16 %v5408
        %v6092 = vunpack.c.l.b16 %v5409
        %v6093 = vunpack.c.l.b16 %v5410
        %v6094 = vunpack.c.l.b16 %v5411
        %v6095 = vunpack.c.l.b16 %v5412
        %v6096 = vunpack.c.l.b16 %v5413
        %v6097 = vunpack.c.l.b16 %v5414
        %v6098 = vunpack.c.l.b16 %v5415
        %v6099 = vunpack.c.l.b16 %v5416
        %v6100 = vunpack.c.l.b16 %v5417
        %v6101 = vunpack.c.l.b16 %v5418
        %v6102 = vunpack.c.l.b16 %v5419
        %v6103 = vunpack.c.l.b16 %v5420
        %v6104 = vunpack.c.l.b16 %v5421
        %v6105 = vunpack.c.l.b16 %v5422
        %v6106 = vunpack.c.l.b16 %v5423
        %v6107 = vunpack.c.l.b16 %v5424
        %v6108 = vunpack.c.l.b16 %v5425
        %v6109 = vunpack.c.l.b16 %v5426
        %v6110 = vunpack.c.l.b16 %v5427
        %v6111 = vunpack.c.l.b16 %v5428
        %v6112 = vunpack.c.l.b16 %v5429
        %v6113 = vunpack.c.l.b16 %v5430
        %v6114 = vunpack.c.l.b16 %v5431
        %v6115 = vunpack.c.l.b16 %v5432
        %v6116 = vpack.c.b16 %v6085, %v6084
        %v6117 = vpack.c.b16 %v6087, %v6086
        %v6118 = vpack.c.b16 %v6089, %v6088
        %v6119 = vpack.c.b16 %v6091, %v6090
        %v6120 = vpack.c.b16 %v6093, %v6092
        %v6121 = vpack.c.b16 %v6095, %v6094
        %v6122 = vpack.c.b16 %v6097, %v6096
        %v6123 = vpack.c.b16 %v6099, %v6098
        %v6124 = vpack.c.b16 %v6101, %v6100
        %v6125 = vpack.c.b16 %v6103, %v6102
        %v6126 = vpack.c.b16 %v6105, %v6104
        %v6127 = vpack.c.b16 %v6107, %v6106
        %v6128 = vpack.c.b16 %v6109, %v6108
        %v6129 = vpack.c.b16 %v6111, %v6110
        %v6130 = vpack.c.b16 %v6113, %v6112
        %v6131 = vpack.c.b16 %v6115, %v6114
        %6148 = vmatpush.bf16.msra.mxu0 %v6123
        %6149 = vmatpush.bf16.msra.mxu0 %v6122
        %6150 = vmatpush.bf16.msra.mxu0 %v6121
        %6151 = vmatpush.bf16.msra.mxu0 %v6120
        %6152 = vmatpush.bf16.msra.mxu0 %v6119
        %6153 = vmatpush.bf16.msra.mxu0 %v6118
        %6154 = vmatpush.bf16.msra.mxu0 %v6117
        %6155 = vmatpush.bf16.msra.mxu0 %v6116
        %6156 = vmatmul.bf16.gmra.mxu0 %v6048
        %v6157 = vpop.f32.mrf.mxu0
        %v6158 = vadd.f32 0.0, %v6157
        %v6159 = vpop.f32.mrf.mxu0
        %6160 = vdwg.mxu0
        %6161 = vmatpush.bf16.msra.mxu0 %v6131
        %6162 = vmatpush.bf16.msra.mxu0 %v6130
        %6163 = vmatpush.bf16.msra.mxu0 %v6129
        %6164 = vmatpush.bf16.msra.mxu0 %v6128
        %6165 = vmatpush.bf16.msra.mxu0 %v6127
        %6166 = vmatpush.bf16.msra.mxu0 %v6126
        %6167 = vmatpush.bf16.msra.mxu0 %v6125
        %6168 = vmatpush.bf16.msra.mxu0 %v6124
        %6169 = vmatmul.bf16.gmra.mxu0 %v6049
        %v6170 = vpop.f32.mrf.mxu0
        %v6171 = vadd.f32 %v6158, %v6170
        %v6172 = vpop.f32.mrf.mxu0
        %6173 = vdwg.mxu0
        %v6175 = vunpack.c.l.b16 %v5270
        %v6176 = vunpack.c.h.b16 %v5270
        %v6177 = vpack.c.b16 %v6175, %v6175
        %v6178 = vpack.c.b16 %v6176, %v6176
        %v6213 = vunpack.c.l.b16 %v5433
        %v6214 = vunpack.c.l.b16 %v5434
        %v6215 = vunpack.c.l.b16 %v5435
        %v6216 = vunpack.c.l.b16 %v5436
        %v6217 = vunpack.c.l.b16 %v5437
        %v6218 = vunpack.c.l.b16 %v5438
        %v6219 = vunpack.c.l.b16 %v5439
        %v6220 = vunpack.c.l.b16 %v5440
        %v6221 = vunpack.c.l.b16 %v5441
        %v6222 = vunpack.c.l.b16 %v5442
        %v6223 = vunpack.c.l.b16 %v5443
        %v6224 = vunpack.c.l.b16 %v5444
        %v6225 = vunpack.c.l.b16 %v5445
        %v6226 = vunpack.c.l.b16 %v5446
        %v6227 = vunpack.c.l.b16 %v5447
        %v6228 = vunpack.c.l.b16 %v5448
        %v6229 = vunpack.c.l.b16 %v5449
        %v6230 = vunpack.c.l.b16 %v5450
        %v6231 = vunpack.c.l.b16 %v5451
        %v6232 = vunpack.c.l.b16 %v5452
        %v6233 = vunpack.c.l.b16 %v5453
        %v6234 = vunpack.c.l.b16 %v5454
        %v6235 = vunpack.c.l.b16 %v5455
        %v6236 = vunpack.c.l.b16 %v5456
        %v6237 = vunpack.c.l.b16 %v5457
        %v6238 = vunpack.c.l.b16 %v5458
        %v6239 = vunpack.c.l.b16 %v5459
        %v6240 = vunpack.c.l.b16 %v5460
        %v6241 = vunpack.c.l.b16 %v5461
        %v6242 = vunpack.c.l.b16 %v5462
        %v6243 = vunpack.c.l.b16 %v5463
        %v6244 = vunpack.c.l.b16 %v5464
        %v6245 = vpack.c.b16 %v6214, %v6213
        %v6246 = vpack.c.b16 %v6216, %v6215
        %v6247 = vpack.c.b16 %v6218, %v6217
        %v6248 = vpack.c.b16 %v6220, %v6219
        %v6249 = vpack.c.b16 %v6222, %v6221
        %v6250 = vpack.c.b16 %v6224, %v6223
        %v6251 = vpack.c.b16 %v6226, %v6225
        %v6252 = vpack.c.b16 %v6228, %v6227
        %v6253 = vpack.c.b16 %v6230, %v6229
        %v6254 = vpack.c.b16 %v6232, %v6231
        %v6255 = vpack.c.b16 %v6234, %v6233
        %v6256 = vpack.c.b16 %v6236, %v6235
        %v6257 = vpack.c.b16 %v6238, %v6237
        %v6258 = vpack.c.b16 %v6240, %v6239
        %v6259 = vpack.c.b16 %v6242, %v6241
        %v6260 = vpack.c.b16 %v6244, %v6243
        %6277 = vmatpush.bf16.msra.mxu0 %v6252
        %6278 = vmatpush.bf16.msra.mxu0 %v6251
        %6279 = vmatpush.bf16.msra.mxu0 %v6250
        %6280 = vmatpush.bf16.msra.mxu0 %v6249
        %6281 = vmatpush.bf16.msra.mxu0 %v6248
        %6282 = vmatpush.bf16.msra.mxu0 %v6247
        %6283 = vmatpush.bf16.msra.mxu0 %v6246
        %6284 = vmatpush.bf16.msra.mxu0 %v6245
        %6285 = vmatmul.bf16.gmra.mxu0 %v6177
        %v6286 = vpop.f32.mrf.mxu0
        %v6287 = vadd.f32 0.0, %v6286
        %v6288 = vpop.f32.mrf.mxu0
        %6289 = vdwg.mxu0
        %6290 = vmatpush.bf16.msra.mxu0 %v6260
        %6291 = vmatpush.bf16.msra.mxu0 %v6259
        %6292 = vmatpush.bf16.msra.mxu0 %v6258
        %6293 = vmatpush.bf16.msra.mxu0 %v6257
        %6294 = vmatpush.bf16.msra.mxu0 %v6256
        %6295 = vmatpush.bf16.msra.mxu0 %v6255
        %6296 = vmatpush.bf16.msra.mxu0 %v6254
        %6297 = vmatpush.bf16.msra.mxu0 %v6253
        %6298 = vmatmul.bf16.gmra.mxu0 %v6178
        %v6299 = vpop.f32.mrf.mxu0
        %v6300 = vadd.f32 %v6287, %v6299
        %v6301 = vpop.f32.mrf.mxu0
        %6302 = vdwg.mxu0
        %v6304 = vunpack.c.l.b16 %v5271
        %v6305 = vunpack.c.h.b16 %v5271
        %v6306 = vpack.c.b16 %v6304, %v6304
        %v6307 = vpack.c.b16 %v6305, %v6305
        %v6342 = vunpack.c.l.b16 %v5465
        %v6343 = vunpack.c.l.b16 %v5466
        %v6344 = vunpack.c.l.b16 %v5467
        %v6345 = vunpack.c.l.b16 %v5468
        %v6346 = vunpack.c.l.b16 %v5469
        %v6347 = vunpack.c.l.b16 %v5470
        %v6348 = vunpack.c.l.b16 %v5471
        %v6349 = vunpack.c.l.b16 %v5472
        %v6350 = vunpack.c.l.b16 %v5473
        %v6351 = vunpack.c.l.b16 %v5474
        %v6352 = vunpack.c.l.b16 %v5475
        %v6353 = vunpack.c.l.b16 %v5476
        %v6354 = vunpack.c.l.b16 %v5477
        %v6355 = vunpack.c.l.b16 %v5478
        %v6356 = vunpack.c.l.b16 %v5479
        %v6357 = vunpack.c.l.b16 %v5480
        %v6358 = vunpack.c.l.b16 %v5481
        %v6359 = vunpack.c.l.b16 %v5482
        %v6360 = vunpack.c.l.b16 %v5483
        %v6361 = vunpack.c.l.b16 %v5484
        %v6362 = vunpack.c.l.b16 %v5485
        %v6363 = vunpack.c.l.b16 %v5486
        %v6364 = vunpack.c.l.b16 %v5487
        %v6365 = vunpack.c.l.b16 %v5488
        %v6366 = vunpack.c.l.b16 %v5489
        %v6367 = vunpack.c.l.b16 %v5490
        %v6368 = vunpack.c.l.b16 %v5491
        %v6369 = vunpack.c.l.b16 %v5492
        %v6370 = vunpack.c.l.b16 %v5493
        %v6371 = vunpack.c.l.b16 %v5494
        %v6372 = vunpack.c.l.b16 %v5495
        %v6373 = vunpack.c.l.b16 %v5496
        %v6374 = vpack.c.b16 %v6343, %v6342
        %v6375 = vpack.c.b16 %v6345, %v6344
        %v6376 = vpack.c.b16 %v6347, %v6346
        %v6377 = vpack.c.b16 %v6349, %v6348
        %v6378 = vpack.c.b16 %v6351, %v6350
        %v6379 = vpack.c.b16 %v6353, %v6352
        %v6380 = vpack.c.b16 %v6355, %v6354
        %v6381 = vpack.c.b16 %v6357, %v6356
        %v6382 = vpack.c.b16 %v6359, %v6358
        %v6383 = vpack.c.b16 %v6361, %v6360
        %v6384 = vpack.c.b16 %v6363, %v6362
        %v6385 = vpack.c.b16 %v6365, %v6364
        %v6386 = vpack.c.b16 %v6367, %v6366
        %v6387 = vpack.c.b16 %v6369, %v6368
        %v6388 = vpack.c.b16 %v6371, %v6370
        %v6389 = vpack.c.b16 %v6373, %v6372
        %6406 = vmatpush.bf16.msra.mxu0 %v6381
        %6407 = vmatpush.bf16.msra.mxu0 %v6380
        %6408 = vmatpush.bf16.msra.mxu0 %v6379
        %6409 = vmatpush.bf16.msra.mxu0 %v6378
        %6410 = vmatpush.bf16.msra.mxu0 %v6377
        %6411 = vmatpush.bf16.msra.mxu0 %v6376
        %6412 = vmatpush.bf16.msra.mxu0 %v6375
        %6413 = vmatpush.bf16.msra.mxu0 %v6374
        %6414 = vmatmul.bf16.gmra.mxu0 %v6306
        %v6415 = vpop.f32.mrf.mxu0
        %v6416 = vadd.f32 0.0, %v6415
        %v6417 = vpop.f32.mrf.mxu0
        %6418 = vdwg.mxu0
        %6419 = vmatpush.bf16.msra.mxu0 %v6389
        %6420 = vmatpush.bf16.msra.mxu0 %v6388
        %6421 = vmatpush.bf16.msra.mxu0 %v6387
        %6422 = vmatpush.bf16.msra.mxu0 %v6386
        %6423 = vmatpush.bf16.msra.mxu0 %v6385
        %6424 = vmatpush.bf16.msra.mxu0 %v6384
        %6425 = vmatpush.bf16.msra.mxu0 %v6383
        %6426 = vmatpush.bf16.msra.mxu0 %v6382
        %6427 = vmatmul.bf16.gmra.mxu0 %v6307
        %v6428 = vpop.f32.mrf.mxu0
        %v6429 = vadd.f32 %v6416, %v6428
        %v6430 = vpop.f32.mrf.mxu0
        %6431 = vdwg.mxu0
        %v6433 = vunpack.c.l.b16 %v5272
        %v6434 = vunpack.c.h.b16 %v5272
        %v6435 = vpack.c.b16 %v6433, %v6433
        %v6436 = vpack.c.b16 %v6434, %v6434
        %v6471 = vunpack.c.l.b16 %v5497
        %v6472 = vunpack.c.l.b16 %v5498
        %v6473 = vunpack.c.l.b16 %v5499
        %v6474 = vunpack.c.l.b16 %v5500
        %v6475 = vunpack.c.l.b16 %v5501
        %v6476 = vunpack.c.l.b16 %v5502
        %v6477 = vunpack.c.l.b16 %v5503
        %v6478 = vunpack.c.l.b16 %v5504
        %v6479 = vunpack.c.l.b16 %v5505
        %v6480 = vunpack.c.l.b16 %v5506
        %v6481 = vunpack.c.l.b16 %v5507
        %v6482 = vunpack.c.l.b16 %v5508
        %v6483 = vunpack.c.l.b16 %v5509
        %v6484 = vunpack.c.l.b16 %v5510
        %v6485 = vunpack.c.l.b16 %v5511
        %v6486 = vunpack.c.l.b16 %v5512
        %v6487 = vunpack.c.l.b16 %v5513
        %v6488 = vunpack.c.l.b16 %v5514
        %v6489 = vunpack.c.l.b16 %v5515
        %v6490 = vunpack.c.l.b16 %v5516
        %v6491 = vunpack.c.l.b16 %v5517
        %v6492 = vunpack.c.l.b16 %v5518
        %v6493 = vunpack.c.l.b16 %v5519
        %v6494 = vunpack.c.l.b16 %v5520
        %v6495 = vunpack.c.l.b16 %v5521
        %v6496 = vunpack.c.l.b16 %v5522
        %v6497 = vunpack.c.l.b16 %v5523
        %v6498 = vunpack.c.l.b16 %v5524
        %v6499 = vunpack.c.l.b16 %v5525
        %v6500 = vunpack.c.l.b16 %v5526
        %v6501 = vunpack.c.l.b16 %v5527
        %v6502 = vunpack.c.l.b16 %v5528
        %v6503 = vpack.c.b16 %v6472, %v6471
        %v6504 = vpack.c.b16 %v6474, %v6473
        %v6505 = vpack.c.b16 %v6476, %v6475
        %v6506 = vpack.c.b16 %v6478, %v6477
        %v6507 = vpack.c.b16 %v6480, %v6479
        %v6508 = vpack.c.b16 %v6482, %v6481
        %v6509 = vpack.c.b16 %v6484, %v6483
        %v6510 = vpack.c.b16 %v6486, %v6485
        %v6511 = vpack.c.b16 %v6488, %v6487
        %v6512 = vpack.c.b16 %v6490, %v6489
        %v6513 = vpack.c.b16 %v6492, %v6491
        %v6514 = vpack.c.b16 %v6494, %v6493
        %v6515 = vpack.c.b16 %v6496, %v6495
        %v6516 = vpack.c.b16 %v6498, %v6497
        %v6517 = vpack.c.b16 %v6500, %v6499
        %v6518 = vpack.c.b16 %v6502, %v6501
        %6535 = vmatpush.bf16.msra.mxu0 %v6510
        %6536 = vmatpush.bf16.msra.mxu0 %v6509
        %6537 = vmatpush.bf16.msra.mxu0 %v6508
        %6538 = vmatpush.bf16.msra.mxu0 %v6507
        %6539 = vmatpush.bf16.msra.mxu0 %v6506
        %6540 = vmatpush.bf16.msra.mxu0 %v6505
        %6541 = vmatpush.bf16.msra.mxu0 %v6504
        %6542 = vmatpush.bf16.msra.mxu0 %v6503
        %6543 = vmatmul.bf16.gmra.mxu0 %v6435
        %v6544 = vpop.f32.mrf.mxu0
        %v6545 = vadd.f32 0.0, %v6544
        %v6546 = vpop.f32.mrf.mxu0
        %6547 = vdwg.mxu0
        %6548 = vmatpush.bf16.msra.mxu0 %v6518
        %6549 = vmatpush.bf16.msra.mxu0 %v6517
        %6550 = vmatpush.bf16.msra.mxu0 %v6516
        %6551 = vmatpush.bf16.msra.mxu0 %v6515
        %6552 = vmatpush.bf16.msra.mxu0 %v6514
        %6553 = vmatpush.bf16.msra.mxu0 %v6513
        %6554 = vmatpush.bf16.msra.mxu0 %v6512
        %6555 = vmatpush.bf16.msra.mxu0 %v6511
        %6556 = vmatmul.bf16.gmra.mxu0 %v6436
        %v6557 = vpop.f32.mrf.mxu0
        %v6558 = vadd.f32 %v6545, %v6557
        %v6559 = vpop.f32.mrf.mxu0
        %6560 = vdwg.mxu0
        %v6569 = vrot.slane %v5784, 7
        %v6570 = vsel %vm444, %v6569, %v5655
        %v6571 = vrot.slane %v5913, 6
        %v6572 = vsel %vm447, %v6571, %v6570
        %v6573 = vrot.slane %v6042, 5
        %v6574 = vsel %vm450, %v6573, %v6572
        %v6575 = vrot.slane %v6171, 4
        %v6576 = vsel %vm453, %v6575, %v6574
        %v6577 = vrot.slane %v6300, 3
        %v6578 = vsel %vm456, %v6577, %v6576
        %v6579 = vrot.slane %v6429, 2
        %v6580 = vsel %vm459, %v6579, %v6578
        %v6581 = vrot.slane %v6558, 1
        %vm6582 = vcmask 1047559
        %v6583 = vsel %vm6582, %v6581, %v6580
        %vm6585 = vcmask 523264
        %6586 = vst.msk [vmem:[%s393] sm:$0xff] %vm6585, %v6583
        %s6587 = sand.u32 %s228, 1
        %s6588 = scalar_lea.sflag [#allocation5], %s6587
        %s6589 = sand.u32 %s228, 1
        %s6590 = smul.addr %s6589, 8
        %s6591 = scalar_lea.vmem [#allocation4], %s6590
        %s6592 = sand.u32 %s254, 1
        %s6593 = scalar_lea.sflag [#allocation7], %s6592
        %s6594 = sand.u32 %s254, 1
        %s6595 = smul.addr %s6594, 16
        %s6596 = scalar_lea.vmem [#allocation6], %s6595
        // Predicated region
        $region53: #{tpu_custom_call.1} parent=51 // pred_check
          %p6597 = pneg %p238
        $region54: #{tpu_custom_call.1} parent=51 // pred_check_branch
          %6599 = sbr.rel (%p6597) target = $region56
        $region55: #{tpu_custom_call.1} parent=51 // pred_region
          %6601 = vsyncadd %s6588, 0
          %s6602 = smul.addr %s27, 8
          %s6603 = scalar_lea.hbm %s8, %s6602
          %s6605 = sshll.u32 %s6591, 4
          %s6606 = int_to_ptr.vmem [resolvable:$true] %s6605
          %s6607 = sshll.u32 %s6603, 4
          %s6608 = int_to_ptr.hbm [resolvable:$true] %s6607
          %6610 = dma.vmem_to_hbm [thread:$0]  %s6606, 128, %s6608, %s6588
        $region56: #{tpu_custom_call.1} parent=51 // pred_fallthru
          _
        // Predicated region
        $region57: #{tpu_custom_call.1} parent=51 // pred_check
          %p6611 = pneg %p264
        $region58: #{tpu_custom_call.1} parent=51 // pred_check_branch
          %6613 = sbr.rel (%p6611) target = $region60
        $region59: #{tpu_custom_call.1} parent=51 // pred_region
          %6615 = vsyncadd %s6593, 0
          %s6616 = smul.addr %s27, 2
          %s6617 = smul.addr %s6616, 8
          %s6618 = scalar_lea.hbm %s9, %s6617
          %s6620 = sshll.u32 %s6596, 4
          %s6621 = int_to_ptr.vmem [resolvable:$true] %s6620
          %s6622 = sshll.u32 %s6618, 4
          %s6623 = int_to_ptr.hbm [resolvable:$true] %s6622
          %6625 = dma.vmem_to_hbm [thread:$0]  %s6621, 256, %s6623, %s6593
        $region60: #{tpu_custom_call.1} parent=51 // pred_fallthru
          _
      $region52: #{tpu_custom_call.1} parent=5 // pred_fallthru
        _
      %p6626 = scmp.le.s32.totalorder 2, %s22
      // Predicated region
      $region61: #{tpu_custom_call.1} parent=5 // pred_check
        %p6627 = pneg %p6626
      $region62: #{tpu_custom_call.1} parent=5 // pred_check_branch
        %6629 = sbr.rel (%p6627) target = $region64
      $region63: #{tpu_custom_call.1} parent=5 // pred_region
        %s6630 = ssub.s32 %s22, 2
        // Predicated region
        $region65: #{tpu_custom_call.1} parent=63 // pred_check
          %p6631 = pneg %p244
        $region66: #{tpu_custom_call.1} parent=63 // pred_check_branch
          %6633 = sbr.rel (%p6631) target = $region68
        $region67: #{tpu_custom_call.1} parent=63 // pred_region
          %s6634 = sand.u32 %s229, 1
          %s6635 = scalar_lea.sflag [#allocation5], %s6634
          %s6636 = sand.u32 %s229, 1
          %s6637 = smul.addr %s6636, 8
          %s6638 = scalar_lea.vmem [#allocation4], %s6637
          %6640 = dma.done %s6635, 128
        $region68: #{tpu_custom_call.1} parent=63 // pred_fallthru
          _
        // Predicated region
        $region69: #{tpu_custom_call.1} parent=63 // pred_check
          %p6641 = pneg %p270
        $region70: #{tpu_custom_call.1} parent=63 // pred_check_branch
          %6643 = sbr.rel (%p6641) target = $region72
        $region71: #{tpu_custom_call.1} parent=63 // pred_region
          %s6644 = sand.u32 %s255, 1
          %s6645 = scalar_lea.sflag [#allocation7], %s6644
          %s6646 = sand.u32 %s255, 1
          %s6647 = smul.addr %s6646, 16
          %s6648 = scalar_lea.vmem [#allocation6], %s6647
          %6650 = dma.done %s6645, 256
        $region72: #{tpu_custom_call.1} parent=63 // pred_fallthru
          _
      $region64: #{tpu_custom_call.1} parent=5 // pred_fallthru
        _
    $region6: #{tpu_custom_call.1} parent=1 // loop_footer
      %s26 = sadd.s32 1, %s22
    $region7: #{tpu_custom_call.1} parent=1 // loop_footer_branch
      %21 = sbr.rel target = $region3
    $region8: #{tpu_custom_call.1} parent=1 // loop_exit
      _
    %6651 = vsyncpa [#allocation5], 1
    %s6652 = scalar_lea.sflag [#allocation5], 1
    %6653 = vsyncpa %s6652, 1
    %6654 = vsyncpa [#allocation7], 1
    %s6655 = scalar_lea.sflag [#allocation7], 1
    %6656 = vsyncpa %s6655, 1

</llo_original>
